<compile_context>
chip_gen: v7x
topology: tpu7x:2x2x1
jax: 0.10.0
libtpu: 0.0.40
codegen_flags: <defaults>
</compile_context>

<pallas_src>
import functools

import jax
import jax.numpy as jnp
from jax.experimental import pallas as pl
from jax.experimental.pallas import tpu as pltpu

_LANE = 128
_ROW_PAD = 512                      # node-dim padding granularity (big tiles, even TC split)
_RESIDENT_XW_BYTES = 8 << 20        # keep the xw slab VMEM-resident below this size
_STEP1_VMEM_BUDGET = 24 << 20       # per-step VMEM budget for the x@W pass


def _round_up(x, m):
    return ((x + m - 1) // m) * m


def _pad2d(a, rows, cols):
    return jnp.pad(a, ((0, rows - a.shape[0]), (0, cols - a.shape[1])))


def _pick_tiles(n_pad):
    """Row tile (tm) and reduction tile (tk) for the aggregation pass."""
    # Keep >= 2 row tiles so the "parallel" axis can shard across v7x's two TensorCores.
    tm = 512 if n_pad >= 1024 else 256
    tk = max(t for t in (2048, 1024, 512) if n_pad % t == 0)
    return tm, tk


def _step1_row_tile(tm, f_in_pad, f_out_pad):
    """Shrink the x@W row tile if the un-tiled feature dims would blow the VMEM budget."""
    tm1 = tm
    while tm1 > 128:
        need = (2 * tm1 * f_in_pad * 4          # x tile (f32), double-buffered
                + 2 * f_in_pad * f_out_pad * 2  # weights (bf16), fetched once (2x to be safe)
                + 2 * tm1 * f_out_pad * 2)      # xw tile (bf16), double-buffered
        if need <= _STEP1_VMEM_BUDGET:
            break
        tm1 //= 2
    return tm1


# --------------------------------------------------------------------------------------
# Kernels
# --------------------------------------------------------------------------------------

def _xw_kernel(x_ref, w_ref, o_ref):
    """o = x @ W for one row tile.  bf16 MXU inputs, f32 accumulation, bf16 output."""
    x = x_ref[...].astype(jnp.bfloat16)
    o_ref[...] = jnp.dot(
        x, w_ref[...], preferred_element_type=jnp.float32).astype(o_ref.dtype)


def _aggregate_kernel(a_ref, xw_ref, b_ref, o_ref, *, apply_relu, tk, resident_xw):
    """o[i] = relu?( bias + sum_k A[i, k] @ xw[k] ), accumulated directly in o_ref."""
    k = pl.program_id(1)

    @pl.when(k == 0)
    def _():
        # Fold the bias into the init of the resident output block.  Padded rows also end
        # up with bias / relu(bias); that is harmless because A's padded columns are zero
        # (so they never contaminate valid rows) and the caller crops rows >= n.
        o_ref[...] = jnp.broadcast_to(b_ref[...], o_ref.shape)

    if resident_xw:
        start = pl.multiple_of(k * tk, tk)
        xw_blk = xw_ref[pl.ds(start, tk), :]
    else:
        xw_blk = xw_ref[...]

    o_ref[...] += jnp.dot(a_ref[...], xw_blk, preferred_element_type=jnp.float32)

    if apply_relu:
        @pl.when(k == pl.num_programs(1) - 1)
        def _():
            o_ref[...] = jnp.maximum(o_ref[...], 0.0)


# --------------------------------------------------------------------------------------
# Layer / model wrappers
# --------------------------------------------------------------------------------------

def _gcn_layer(a_pad, h_pad, w, b, *, apply_relu, tm, tk):
    """One GCNConv layer on padded inputs. Returns padded [n_pad, f_out_pad] f32 output."""
    n_pad = a_pad.shape[0]
    f_in = h_pad.shape[1]                       # already lane-padded
    f_out_pad = _round_up(w.shape[1], _LANE)

    w_pad = _pad2d(w.astype(jnp.float32), f_in, f_out_pad).astype(jnp.bfloat16)
    b_pad = _pad2d(b.astype(jnp.float32).reshape(1, -1), 1, f_out_pad)

    # ---- step 1: xw = h @ W (row-tiled, lane-dense bf16 output) ----
    tm1 = _step1_row_tile(tm, f_in, f_out_pad)
    xw = pl.pallas_call(
        _xw_kernel,
        out_shape=jax.ShapeDtypeStruct((n_pad, f_out_pad), jnp.bfloat16),
        grid=(n_pad // tm1,),
        in_specs=[
            pl.BlockSpec((tm1, f_in), lambda i: (i, 0)),
            pl.BlockSpec((f_in, f_out_pad), lambda i: (0, 0)),    # fetched once
        ],
        out_specs=pl.BlockSpec((tm1, f_out_pad), lambda i: (i, 0)),
        compiler_params=pltpu.CompilerParams(dimension_semantics=("parallel",)),
        cost_estimate=pl.CostEstimate(
            flops=2 * n_pad * f_in * f_out_pad,
            transcendentals=0,
            bytes_accessed=(4 * n_pad * f_in + 2 * f_in * f_out_pad
                            + 2 * n_pad * f_out_pad)),
    )(h_pad, w_pad)

    # ---- step 2: out = relu?(A @ xw + b) on a (rows, reduction) grid ----
    xw_bytes = n_pad * f_out_pad * 2
    resident_xw = xw_bytes <= _RESIDENT_XW_BYTES

    if resident_xw:
        xw_spec = pl.BlockSpec((n_pad, f_out_pad), lambda i, k: (0, 0))   # DMA'd once
        xw_read_bytes = xw_bytes
    else:
        xw_spec = pl.BlockSpec((tk, f_out_pad), lambda i, k: (k, 0))      # streamed per k
        xw_read_bytes = (n_pad // tm) * xw_bytes

    vmem_need = (2 * tm * tk * 2                                           # A tiles (bf16)
                 + (2 * xw_bytes if resident_xw else 2 * tk * f_out_pad * 2)
                 + 2 * tm * f_out_pad * 4                                  # output block (f32)
                 + f_out_pad * 4                                           # bias
                 + (2 << 20))                                              # headroom
    vmem_limit = int(min(max(vmem_need, 32 << 20), 56 << 20))

    kernel = functools.partial(_aggregate_kernel, apply_relu=apply_relu, tk=tk,
                               resident_xw=resident_xw)
    out = pl.pallas_call(
        kernel,
        out_shape=jax.ShapeDtypeStruct((n_pad, f_out_pad), jnp.float32),
        grid=(n_pad // tm, n_pad // tk),
        in_specs=[
            pl.BlockSpec((tm, tk), lambda i, k: (i, k)),        # A tile (bf16)
            xw_spec,                                            # xw (resident or streamed)
            pl.BlockSpec((1, f_out_pad), lambda i, k: (0, 0)),  # bias (fetched once)
        ],
        out_specs=pl.BlockSpec((tm, f_out_pad), lambda i, k: (i, 0)),
        compiler_params=pltpu.CompilerParams(
            dimension_semantics=("parallel", "arbitrary"),
            vmem_limit_bytes=vmem_limit),
        cost_estimate=pl.CostEstimate(
            flops=2 * n_pad * n_pad * f_out_pad,
            transcendentals=0,
            bytes_accessed=(2 * n_pad * n_pad + xw_read_bytes
                            + 4 * n_pad * f_out_pad + 4 * f_out_pad)),
    )(a_pad, xw, b_pad)
    return out


def gcn_encoder_forward(a_norm, x, params):
    """Run the 3-layer GCN encoder with tiled Pallas kernels.

    a_norm : [N, N] float32 dense normalized adjacency
    x      : [N, F_in] float32 node features
    params : dict with w1/b1/w2/b2/w3/b3 (weights stored as [in, out])
    """
    n = x.shape[0]
    out_dim = params["w3"].shape[1]

    n_pad = _round_up(n, _ROW_PAD)
    f_in_pad = _round_up(x.shape[1], _LANE)
    tm, tk = _pick_tiles(n_pad)

    # A is the dominant HBM stream -> bf16 at the kernel boundary (f32 MXU accumulation).
    a_pad = _pad2d(a_norm.astype(jnp.float32), n_pad, n_pad).astype(jnp.bfloat16)
    h = _pad2d(x.astype(jnp.float32), n_pad, f_in_pad)

    h = _gcn_layer(a_pad, h, params["w1"], params["b1"], apply_relu=True, tm=tm, tk=tk)
    h = _gcn_layer(a_pad, h, params["w2"], params["b2"], apply_relu=True, tm=tm, tk=tk)
    h = _gcn_layer(a_pad, h, params["w3"], params["b3"], apply_relu=False, tm=tm, tk=tk)

    return h[:n, :out_dim]


# --------------------------------------------------------------------------------------
# Glue (plain JAX): normalized adjacency, params, reference
# --------------------------------------------------------------------------------------

def build_normalized_adjacency(edge_index, num_nodes):
    """Dense GCN normalization: A_hat = A + remaining self-loops, D^-1/2 A_hat D^-1/2."""
    src, dst = edge_index[0], edge_index[1]
    a = jnp.zeros((num_nodes, num_nodes), dtype=jnp.float32)
    # scatter-ADD so duplicate edges sum (matches torch_geometric's scatter semantics)
    a = a.at[dst, src].add(1.0)
    # add_remaining_self_loops: only add weight-1 loops where none exist
    diag = jnp.diagonal(a)
    a = a + jnp.diag(jnp.where(diag == 0, 1.0, 0.0))
    deg = jnp.sum(a, axis=1)
    d_inv_sqrt = jnp.where(deg > 0, 1.0 / jnp.sqrt(deg), 0.0)
    return d_inv_sqrt[:, None] * a * d_inv_sqrt[None, :]


def init_params(key, input_dim, hidden_dim, hidden_dim2, out_dim):
    """Deterministic glorot-style init. Weights stored as [in, out] (W^T of torch's [out, in])."""
    def glorot(k, fan_in, fan_out):
        limit = jnp.sqrt(6.0 / (fan_in + fan_out))
        return jax.random.uniform(k, (fan_in, fan_out), jnp.float32, -limit, limit)

    k1, k2, k3 = jax.random.split(key, 3)
    return {
        "w1": glorot(k1, input_dim, hidden_dim),
        "b1": jnp.zeros((1, hidden_dim), jnp.float32),
        "w2": glorot(k2, hidden_dim, hidden_dim2),
        "b2": jnp.zeros((1, hidden_dim2), jnp.float32),
        "w3": glorot(k3, hidden_dim2, out_dim),
        "b3": jnp.zeros((1, out_dim), jnp.float32),
    }


def reference_forward(a_norm, x, params):
    """Pure-JAX f32 reference of the same semantics (for correctness check)."""
    h = jnp.maximum(a_norm @ (x @ params["w1"]) + params["b1"], 0.0)
    h = jnp.maximum(a_norm @ (h @ params["w2"]) + params["b2"], 0.0)
    return a_norm @ (h @ params["w3"]) + params["b3"]


if __name__ == "__main__":
    # Small shapes: 8 nodes on a ring graph, input_dim=16, hidden=32, hidden2=16, out=8.
    N = 8
    input_dim, hidden_dim, hidden_dim2, out_dim = 16, 32, 16, 8

    key = jax.random.PRNGKey(0)
    kx, kp = jax.random.split(key)

    x = jax.random.normal(kx, (N, input_dim), dtype=jnp.float32)

    # Undirected ring: edges (i, i+1) and (i+1, i)
    src = jnp.concatenate([jnp.arange(N), (jnp.arange(N) + 1) % N])
    dst = jnp.concatenate([(jnp.arange(N) + 1) % N, jnp.arange(N)])
    edge_index = jnp.stack([src, dst], axis=0)  # [2, E]

    a_norm = build_normalized_adjacency(edge_index, N)
    params = init_params(kp, input_dim, hidden_dim, hidden_dim2, out_dim)

    out = jax.jit(gcn_encoder_forward)(a_norm, x, params)
    jax.block_until_ready(out)

    ref = reference_forward(a_norm, x, params)
    assert out.shape == (N, out_dim)
    # bf16 MXU inputs (f32 accumulation) -> compare against the f32 reference with a
    # correspondingly looser tolerance.
    assert jnp.allclose(out, ref, atol=5e-2, rtol=5e-2), "mismatch vs pure-JAX reference"

    print("KERNEL_OK")
</pallas_src>

<mosaic_0001>
module attributes {stable_mosaic.version = 11 : i64} {
  func.func @_xw_kernel(%arg0: i32, %arg1: memref<256x128xf32, #tpu.memory_space<vmem>>, %arg2: memref<128x128xbf16, #tpu.memory_space<vmem>>, %arg3: memref<256x128xbf16, #tpu.memory_space<vmem>>) attributes {dimension_semantics = [#tpu.dimension_semantics<parallel>], iteration_bounds = array<i64: 2>, scalar_prefetch = 0 : i64, scratch_operands = 0 : i64, tpu.core_type = #tpu.core_type<tc>, window_params = [{transform_indices = @transform_0, window_bounds = array<i64: 256, 128>}, {pipeline_mode = #tpu.pipeline_mode<synchronous>, transform_indices = @transform_1, window_bounds = array<i64: 128, 128>}, {transform_indices = @transform_2, window_bounds = array<i64: 256, 128>}]} {
    %c0 = arith.constant 0 : index
    %c0_0 = arith.constant 0 : index
    %0 = vector.load %arg1[%c0, %c0_0] : memref<256x128xf32, #tpu.memory_space<vmem>>, vector<256x128xf32>
    %1 = arith.truncf %0 : vector<256x128xf32> to vector<256x128xbf16>
    %c0_1 = arith.constant 0 : index
    %c0_2 = arith.constant 0 : index
    %2 = vector.load %arg2[%c0_1, %c0_2] : memref<128x128xbf16, #tpu.memory_space<vmem>>, vector<128x128xbf16>
    %cst = arith.constant dense<0.000000e+00> : vector<256x128xf32>
    %3 = tpu.matmul %1, %2, %cst {dimension_numbers = #tpu.dot_dimension_numbers<[1], [0], [0], [1], [0, 0, 1, 1], [], []>} : vector<256x128xbf16>, vector<128x128xbf16>, vector<256x128xf32> -> vector<256x128xf32>
    %4 = arith.truncf %3 : vector<256x128xf32> to vector<256x128xbf16>
    %c0_3 = arith.constant 0 : index
    %c0_4 = arith.constant 0 : index
    %5 = vector.load %arg3[%c0_3, %c0_4] : memref<256x128xbf16, #tpu.memory_space<vmem>>, vector<256x128xbf16>
    tpu.vector_store %arg3[%c0_3, %c0_4], %4 {strides = array<i32>} : memref<256x128xbf16, #tpu.memory_space<vmem>>, vector<256x128xbf16>,
    return
  }
  func.func @transform_0(%arg0: i32) -> (i32, i32) {
    %c0_i32 = arith.constant 0 : i32
    %c0_i32_0 = arith.constant 0 : i32
    return %arg0, %c0_i32 : i32, i32
  }
  func.func @transform_1(%arg0: i32) -> (i32, i32) {
    %c0_i32 = arith.constant 0 : i32
    %c0_i32_0 = arith.constant 0 : i32
    %c0_i32_1 = arith.constant 0 : i32
    return %c0_i32, %c0_i32_0 : i32, i32
  }
  func.func @transform_2(%arg0: i32) -> (i32, i32) {
    %c0_i32 = arith.constant 0 : i32
    %c0_i32_0 = arith.constant 0 : i32
    return %arg0, %c0_i32 : i32, i32
  }
}

module attributes {stable_mosaic.version = 11 : i64} {
  func.func @_aggregate_kernel(%arg0: i32, %arg1: i32, %arg2: memref<256x512xbf16, #tpu.memory_space<vmem>>, %arg3: memref<512x128xbf16, #tpu.memory_space<vmem>>, %arg4: memref<1x128xf32, #tpu.memory_space<vmem>>, %arg5: memref<256x128xf32, #tpu.memory_space<vmem>>) attributes {dimension_semantics = [#tpu.dimension_semantics<parallel>, #tpu.dimension_semantics<arbitrary>], iteration_bounds = array<i64: 2, 1>, scalar_prefetch = 0 : i64, scratch_operands = 0 : i64, tpu.core_type = #tpu.core_type<tc>, window_params = [{transform_indices = @transform_0, window_bounds = array<i64: 256, 512>}, {pipeline_mode = #tpu.pipeline_mode<synchronous>, transform_indices = @transform_1, window_bounds = array<i64: 512, 128>}, {pipeline_mode = #tpu.pipeline_mode<synchronous>, transform_indices = @transform_2, window_bounds = array<i64: 1, 128>}, {transform_indices = @transform_3, window_bounds = array<i64: 256, 128>}]} {
    %c0_i32 = arith.constant 0 : i32
    %0 = arith.cmpi eq, %arg1, %c0_i32 : i32
    %1 = arith.extui %0 : i1 to i32
    %c0_i32_0 = arith.constant 0 : i32
    %2 = arith.cmpi ne, %1, %c0_i32_0 : i32
    scf.if %2 {
      %c0_9 = arith.constant 0 : index
      %c0_10 = arith.constant 0 : index
      %15 = vector.load %arg4[%c0_9, %c0_10] : memref<1x128xf32, #tpu.memory_space<vmem>>, vector<1x128xf32>
      %16 = vector.shape_cast %15 : vector<1x128xf32> to vector<1x128xf32>
      %17 = vector.broadcast %16 : vector<1x128xf32> to vector<256x128xf32>
      %c0_11 = arith.constant 0 : index
      %c0_12 = arith.constant 0 : index
      %18 = vector.load %arg5[%c0_11, %c0_12] : memref<256x128xf32, #tpu.memory_space<vmem>>, vector<256x128xf32>
      tpu.vector_store %arg5[%c0_11, %c0_12], %17 {strides = array<i32>} : memref<256x128xf32, #tpu.memory_space<vmem>>, vector<256x128xf32>,
    } else {
    }
    %c512_i32 = arith.constant 512 : i32
    %3 = arith.muli %arg1, %c512_i32 : i32
    %4 = tpu.assume_multiple %3, 512 : i32
    %5 = arith.index_cast %4 : i32 to index
    %c0 = arith.constant 0 : index
    %6 = vector.load %arg3[%5, %c0] : memref<512x128xbf16, #tpu.memory_space<vmem>>, vector<512x128xbf16>
    %c0_1 = arith.constant 0 : index
    %c0_2 = arith.constant 0 : index
    %7 = vector.load %arg5[%c0_1, %c0_2] : memref<256x128xf32, #tpu.memory_space<vmem>>, vector<256x128xf32>
    %c0_3 = arith.constant 0 : index
    %c0_4 = arith.constant 0 : index
    %8 = vector.load %arg2[%c0_3, %c0_4] : memref<256x512xbf16, #tpu.memory_space<vmem>>, vector<256x512xbf16>
    %cst = arith.constant dense<0.000000e+00> : vector<256x128xf32>
    %9 = tpu.matmul %8, %6, %cst {dimension_numbers = #tpu.dot_dimension_numbers<[1], [0], [0], [1], [0, 0, 1, 1], [], []>} : vector<256x512xbf16>, vector<512x128xbf16>, vector<256x128xf32> -> vector<256x128xf32>
    %10 = arith.addf %7, %9 : vector<256x128xf32>
    %c0_5 = arith.constant 0 : index
    %c0_6 = arith.constant 0 : index
    %11 = vector.load %arg5[%c0_5, %c0_6] : memref<256x128xf32, #tpu.memory_space<vmem>>, vector<256x128xf32>
    tpu.vector_store %arg5[%c0_5, %c0_6], %10 {strides = array<i32>} : memref<256x128xf32, #tpu.memory_space<vmem>>, vector<256x128xf32>,
    %c0_i32_7 = arith.constant 0 : i32
    %12 = arith.cmpi eq, %arg1, %c0_i32_7 : i32
    %13 = arith.extui %12 : i1 to i32
    %c0_i32_8 = arith.constant 0 : i32
    %14 = arith.cmpi ne, %13, %c0_i32_8 : i32
    scf.if %14 {
      %c0_9 = arith.constant 0 : index
      %c0_10 = arith.constant 0 : index
      %15 = vector.load %arg5[%c0_9, %c0_10] : memref<256x128xf32, #tpu.memory_space<vmem>>, vector<256x128xf32>
      %cst_11 = arith.constant 0.000000e+00 : f32
      %16 = vector.broadcast %cst_11 : f32 to vector<256x128xf32>
      %17 = arith.maximumf %15, %16 : vector<256x128xf32>
      %c0_12 = arith.constant 0 : index
      %c0_13 = arith.constant 0 : index
      %18 = vector.load %arg5[%c0_12, %c0_13] : memref<256x128xf32, #tpu.memory_space<vmem>>, vector<256x128xf32>
      tpu.vector_store %arg5[%c0_12, %c0_13], %17 {strides = array<i32>} : memref<256x128xf32, #tpu.memory_space<vmem>>, vector<256x128xf32>,
    } else {
    }
    return
  }
  func.func @transform_0(%arg0: i32, %arg1: i32) -> (i32, i32) {
    %c0_i32 = arith.constant 0 : i32
    return %arg0, %arg1 : i32, i32
  }
  func.func @transform_1(%arg0: i32, %arg1: i32) -> (i32, i32) {
    %c0_i32 = arith.constant 0 : i32
    %c0_i32_0 = arith.constant 0 : i32
    %c0_i32_1 = arith.constant 0 : i32
    return %c0_i32, %c0_i32_0 : i32, i32
  }
  func.func @transform_2(%arg0: i32, %arg1: i32) -> (i32, i32) {
    %c0_i32 = arith.constant 0 : i32
    %c0_i32_0 = arith.constant 0 : i32
    %c0_i32_1 = arith.constant 0 : i32
    return %c0_i32, %c0_i32_0 : i32, i32
  }
  func.func @transform_3(%arg0: i32, %arg1: i32) -> (i32, i32) {
    %c0_i32 = arith.constant 0 : i32
    %c0_i32_0 = arith.constant 0 : i32
    return %arg0, %c0_i32 : i32, i32
  }
}

module attributes {stable_mosaic.version = 11 : i64} {
  func.func @_aggregate_kernel(%arg0: i32, %arg1: i32, %arg2: memref<256x512xbf16, #tpu.memory_space<vmem>>, %arg3: memref<512x128xbf16, #tpu.memory_space<vmem>>, %arg4: memref<1x128xf32, #tpu.memory_space<vmem>>, %arg5: memref<256x128xf32, #tpu.memory_space<vmem>>) attributes {dimension_semantics = [#tpu.dimension_semantics<parallel>, #tpu.dimension_semantics<arbitrary>], iteration_bounds = array<i64: 2, 1>, scalar_prefetch = 0 : i64, scratch_operands = 0 : i64, tpu.core_type = #tpu.core_type<tc>, window_params = [{transform_indices = @transform_0, window_bounds = array<i64: 256, 512>}, {pipeline_mode = #tpu.pipeline_mode<synchronous>, transform_indices = @transform_1, window_bounds = array<i64: 512, 128>}, {pipeline_mode = #tpu.pipeline_mode<synchronous>, transform_indices = @transform_2, window_bounds = array<i64: 1, 128>}, {transform_indices = @transform_3, window_bounds = array<i64: 256, 128>}]} {
    %c0_i32 = arith.constant 0 : i32
    %0 = arith.cmpi eq, %arg1, %c0_i32 : i32
    %1 = arith.extui %0 : i1 to i32
    %c0_i32_0 = arith.constant 0 : i32
    %2 = arith.cmpi ne, %1, %c0_i32_0 : i32
    scf.if %2 {
      %c0_7 = arith.constant 0 : index
      %c0_8 = arith.constant 0 : index
      %12 = vector.load %arg4[%c0_7, %c0_8] : memref<1x128xf32, #tpu.memory_space<vmem>>, vector<1x128xf32>
      %13 = vector.shape_cast %12 : vector<1x128xf32> to vector<1x128xf32>
      %14 = vector.broadcast %13 : vector<1x128xf32> to vector<256x128xf32>
      %c0_9 = arith.constant 0 : index
      %c0_10 = arith.constant 0 : index
      %15 = vector.load %arg5[%c0_9, %c0_10] : memref<256x128xf32, #tpu.memory_space<vmem>>, vector<256x128xf32>
      tpu.vector_store %arg5[%c0_9, %c0_10], %14 {strides = array<i32>} : memref<256x128xf32, #tpu.memory_space<vmem>>, vector<256x128xf32>,
    } else {
    }
    %c512_i32 = arith.constant 512 : i32
    %3 = arith.muli %arg1, %c512_i32 : i32
    %4 = tpu.assume_multiple %3, 512 : i32
    %5 = arith.index_cast %4 : i32 to index
    %c0 = arith.constant 0 : index
    %6 = vector.load %arg3[%5, %c0] : memref<512x128xbf16, #tpu.memory_space<vmem>>, vector<512x128xbf16>
    %c0_1 = arith.constant 0 : index
    %c0_2 = arith.constant 0 : index
    %7 = vector.load %arg5[%c0_1, %c0_2] : memref<256x128xf32, #tpu.memory_space<vmem>>, vector<256x128xf32>
    %c0_3 = arith.constant 0 : index
    %c0_4 = arith.constant 0 : index
    %8 = vector.load %arg2[%c0_3, %c0_4] : memref<256x512xbf16, #tpu.memory_space<vmem>>, vector<256x512xbf16>
    %cst = arith.constant dense<0.000000e+00> : vector<256x128xf32>
    %9 = tpu.matmul %8, %6, %cst {dimension_numbers = #tpu.dot_dimension_numbers<[1], [0], [0], [1], [0, 0, 1, 1], [], []>} : vector<256x512xbf16>, vector<512x128xbf16>, vector<256x128xf32> -> vector<256x128xf32>
    %10 = arith.addf %7, %9 : vector<256x128xf32>
    %c0_5 = arith.constant 0 : index
    %c0_6 = arith.constant 0 : index
    %11 = vector.load %arg5[%c0_5, %c0_6] : memref<256x128xf32, #tpu.memory_space<vmem>>, vector<256x128xf32>
    tpu.vector_store %arg5[%c0_5, %c0_6], %10 {strides = array<i32>} : memref<256x128xf32, #tpu.memory_space<vmem>>, vector<256x128xf32>,
    return
  }
  func.func @transform_0(%arg0: i32, %arg1: i32) -> (i32, i32) {
    %c0_i32 = arith.constant 0 : i32
    return %arg0, %arg1 : i32, i32
  }
  func.func @transform_1(%arg0: i32, %arg1: i32) -> (i32, i32) {
    %c0_i32 = arith.constant 0 : i32
    %c0_i32_0 = arith.constant 0 : i32
    %c0_i32_1 = arith.constant 0 : i32
    return %c0_i32, %c0_i32_0 : i32, i32
  }
  func.func @transform_2(%arg0: i32, %arg1: i32) -> (i32, i32) {
    %c0_i32 = arith.constant 0 : i32
    %c0_i32_0 = arith.constant 0 : i32
    %c0_i32_1 = arith.constant 0 : i32
    return %c0_i32, %c0_i32_0 : i32, i32
  }
  func.func @transform_3(%arg0: i32, %arg1: i32) -> (i32, i32) {
    %c0_i32 = arith.constant 0 : i32
    %c0_i32_0 = arith.constant 0 : i32
    return %arg0, %c0_i32 : i32, i32
  }
}

</mosaic_0001>

<llo_original>
// kernel: gcn_encoder_forward.6
$region0: #{gcn_encoder_forward.6}
  #allocation0 [shape = 'u32[]', space=smem, size = 0x4, offset = 0x4, fixed_abs, tag = 'smem constant byte address 0x4 - core index']
  #allocation1 [shape = 'u32[144,128]{1,0:T(1,128)}', space=vmem, size = 0x12000, scoped, tag = 'internal scratch']
  %s0 = inlined_call_operand.vmem [shape: f32[512,128], index: 0, kind: input, shape index: {}]
  %s1 = inlined_call_operand.vmem [shape: bf16[128,128], index: 1, kind: input, shape index: {}]
  %s2 = inlined_call_operand.vmem [shape: bf16[512,128], index: 2, kind: output, shape index: {}]
  %s3 = sld [smem:[#allocation0]]
  $region41: #{gcn_encoder_forward.6} parent=0
    _
  %s5 = ssub.s32 1, %s3
  %s6 = scalar_select 0, %s5, %s3
  loop: start=0, step=1, limit=4
  $region2: #{gcn_encoder_forward.6} parent=0 // loop_pre_header
    _
  $region3: #{gcn_encoder_forward.6} parent=0 // loop_header
    %s8 = sphi 0, %s12
    %p9 = scmp.ge.s32.totalorder %s8, 4
    %s18 = sphi 0, %s20
    %s21 = sphi 0, %s18
    %s22 = sphi 0, %s21
    %s38 = sphi 0, %s22
    %s42 = sphi 0, %s42
    %s44 = sphi 0, %s42
    %s45 = sphi 0, %s44
    %s59 = sphi 0, %s45
    %s65 = sphi 0, %s67
    %s68 = sphi 0, %s65
    %s69 = sphi 0, %s68
    %s85 = sphi 0, %s69
  $region4: #{gcn_encoder_forward.6} parent=0 // loop_header_branch
    %11 = sbr.rel (%p9) target = $region8
  $region5: #{gcn_encoder_forward.6} parent=0 // loop_body
    %s13 = ssub.s32 %s8, 1
    %s14 = ssub.s32 %s8, 2
    %s15 = sadd.s32 %s8, 1
    %s16 = ssub.s32 %s8, %s15
    %p17 = scmp.eq.s32.totalorder %s16, 0
    %s19 = sadd.s32 %s18, 1
    %s20 = scalar_select %p17, %s18, %s19
    %p23 = pneg %p17
    %p24 = scmp.eq.s32.totalorder %s8, 1
    %p25 = por %p23, %p24
    %p26 = scmp.ne.s32.totalorder %s18, %s21
    %p27 = scmp.eq.s32.totalorder %s8, 0
    %p28 = por %p26, %p27
    %p29 = scmp.ne.s32.totalorder %s18, %s21
    %p30 = scmp.eq.s32.totalorder %s13, 1
    %p31 = por %p29, %p30
    %p32 = scmp.ne.s32.totalorder %s21, %s22
    %p33 = scmp.eq.s32.totalorder %s13, 0
    %p34 = por %p32, %p33
    %p35 = scmp.ne.s32.totalorder %s21, %s22
    %p36 = scmp.eq.s32.totalorder %s14, 1
    %p37 = por %p35, %p36
    %p39 = scmp.ne.s32.totalorder %s22, %s38
    %p40 = scmp.eq.s32.totalorder %s14, 0
    %p41 = por %p39, %p40
    %s43 = sadd.s32 %s42, 1
    %p46 = scmp.eq.s32.totalorder %s8, 1
    %p47 = scmp.ne.s32.totalorder %s42, %s44
    %p48 = scmp.eq.s32.totalorder %s8, 0
    %p49 = por %p47, %p48
    %p50 = scmp.ne.s32.totalorder %s42, %s44
    %p51 = scmp.eq.s32.totalorder %s13, 1
    %p52 = por %p50, %p51
    %p53 = scmp.ne.s32.totalorder %s44, %s45
    %p54 = scmp.eq.s32.totalorder %s13, 0
    %p55 = por %p53, %p54
    %p56 = scmp.ne.s32.totalorder %s44, %s45
    %p57 = scmp.eq.s32.totalorder %s14, 1
    %p58 = por %p56, %p57
    %p60 = scmp.ne.s32.totalorder %s45, %s59
    %p61 = scmp.eq.s32.totalorder %s14, 0
    %p62 = por %p60, %p61
    %s63 = ssub.s32 %s8, %s15
    %p64 = scmp.eq.s32.totalorder %s63, 0
    %s66 = sadd.s32 %s65, 1
    %s67 = scalar_select %p64, %s65, %s66
    %p70 = pneg %p64
    %p71 = scmp.eq.s32.totalorder %s8, 1
    %p72 = por %p70, %p71
    %p73 = scmp.ne.s32.totalorder %s65, %s68
    %p74 = scmp.eq.s32.totalorder %s8, 0
    %p75 = por %p73, %p74
    %p76 = scmp.ne.s32.totalorder %s65, %s68
    %p77 = scmp.eq.s32.totalorder %s13, 1
    %p78 = por %p76, %p77
    %p79 = scmp.ne.s32.totalorder %s68, %s69
    %p80 = scmp.eq.s32.totalorder %s13, 0
    %p81 = por %p79, %p80
    %p82 = scmp.ne.s32.totalorder %s68, %s69
    %p83 = scmp.eq.s32.totalorder %s14, 1
    %p84 = por %p82, %p83
    %p86 = scmp.ne.s32.totalorder %s69, %s85
    %p87 = scmp.eq.s32.totalorder %s14, 0
    %p88 = por %p86, %p87
    %p89 = scmp.le.s32.totalorder 1, %s8
    %p90 = scmp.lt.s32.totalorder %s8, 3
    %p91 = pnand %p89, %p90
    %p92 = pneg %p91
    // Predicated region
    $region9: #{gcn_encoder_forward.6} parent=5 // pred_check
      _
    $region10: #{gcn_encoder_forward.6} parent=5 // pred_check_branch
      %94 = sbr.rel (%p91) target = $region12
    $region11: #{gcn_encoder_forward.6} parent=5 // pred_region
      %s95 = ssub.s32 %s8, 1
      // Predicated region
      $region13: #{gcn_encoder_forward.6} parent=11 // pred_check
        %p96 = pneg %p55
      $region14: #{gcn_encoder_forward.6} parent=11 // pred_check_branch
        %98 = sbr.rel (%p96) target = $region16
      $region15: #{gcn_encoder_forward.6} parent=11 // pred_region
        _
      $region16: #{gcn_encoder_forward.6} parent=11 // pred_fallthru
        _
    $region12: #{gcn_encoder_forward.6} parent=5 // pred_fallthru
      _
    %p99 = scmp.lt.s32.totalorder %s8, 2
    // Predicated region
    $region17: #{gcn_encoder_forward.6} parent=5 // pred_check
      %p100 = pneg %p99
    $region18: #{gcn_encoder_forward.6} parent=5 // pred_check_branch
      %102 = sbr.rel (%p100) target = $region20
    $region19: #{gcn_encoder_forward.6} parent=5 // pred_region
      // Predicated region
      $region21: #{gcn_encoder_forward.6} parent=19 // pred_check
        %p103 = pneg %p28
      $region22: #{gcn_encoder_forward.6} parent=19 // pred_check_branch
        %105 = sbr.rel (%p103) target = $region24
      $region23: #{gcn_encoder_forward.6} parent=19 // pred_region
        %s106 = smul.u32 32, %s8
        %p107 = scmp.lt.s32.totalorder %s106, 63
        %s108 = scalar_select %p107, %s106, 63
        %s109 = smul.addr %s108, 8
        %s110 = scalar_lea.vmem %s0, %s109
        %s111 = smul.u32 32, %s8
      $region24: #{gcn_encoder_forward.6} parent=19 // pred_fallthru
        _
    $region20: #{gcn_encoder_forward.6} parent=5 // pred_fallthru
      _
    %p112 = scmp.le.s32.totalorder 1, %s8
    %p113 = scmp.lt.s32.totalorder %s8, 3
    %p114 = pnand %p112, %p113
    %p115 = pneg %p114
    // Predicated region
    $region25: #{gcn_encoder_forward.6} parent=5 // pred_check
      _
    $region26: #{gcn_encoder_forward.6} parent=5 // pred_check_branch
      %117 = sbr.rel (%p114) target = $region28
    $region27: #{gcn_encoder_forward.6} parent=5 // pred_region
      %s118 = ssub.s32 %s8, 1
      %s119 = smul.u32 32, %s13
      %p120 = scmp.lt.s32.totalorder %s119, 63
      %s121 = scalar_select %p120, %s119, 63
      %s122 = smul.addr %s121, 8
      %s123 = scalar_lea.vmem %s0, %s122
      %p124 = pneg %p34
      %p125 = pneg %p31
      %p126 = pneg %p55
      %p127 = pneg %p52
      %p128 = pneg %p81
      %p129 = pneg %p78
      %s130 = smul.u32 32, %s13
      %p131 = scmp.lt.s32.totalorder %s130, 63
      %s132 = scalar_select %p131, %s130, 63
      %s133 = smul.addr %s132, 4
      %s134 = scalar_lea.vmem %s2, %s133
      %s135 = smul.u32 32, %s13
      %p136 = scmp.lt.s32.totalorder %s135, 63
      %s137 = scalar_select %p136, %s135, 63
      %s138 = smul.addr %s137, 8
      %s139 = scalar_lea.vmem %s0, %s138
      %s140 = smul.u32 32, %s13
      %s141 = smul.u32 32, %s13
      %p142 = scmp.lt.s32.totalorder %s141, 63
      %s143 = scalar_select %p142, %s141, 63
      %s144 = smul.addr %s143, 4
      %s145 = scalar_lea.vmem %s2, %s144
      %s146 = smul.u32 32, %s13
      %v148 = vld [vmem:[%s139] sm:$0xff]
      %v149 = vld [vmem:[%s139 + $0x8] sm:$0xff]
      %v150 = vld [vmem:[%s139 + $0x10] sm:$0xff]
      %v151 = vld [vmem:[%s139 + $0x18] sm:$0xff]
      %v152 = vld [vmem:[%s139 + $0x20] sm:$0xff]
      %v153 = vld [vmem:[%s139 + $0x28] sm:$0xff]
      %v154 = vld [vmem:[%s139 + $0x30] sm:$0xff]
      %v155 = vld [vmem:[%s139 + $0x38] sm:$0xff]
      %v156 = vld [vmem:[%s139 + $0x40] sm:$0xff]
      %v157 = vld [vmem:[%s139 + $0x48] sm:$0xff]
      %v158 = vld [vmem:[%s139 + $0x50] sm:$0xff]
      %v159 = vld [vmem:[%s139 + $0x58] sm:$0xff]
      %v160 = vld [vmem:[%s139 + $0x60] sm:$0xff]
      %v161 = vld [vmem:[%s139 + $0x68] sm:$0xff]
      %v162 = vld [vmem:[%s139 + $0x70] sm:$0xff]
      %v163 = vld [vmem:[%s139 + $0x78] sm:$0xff]
      %v164 = vld [vmem:[%s139 + $0x80] sm:$0xff]
      %v165 = vld [vmem:[%s139 + $0x88] sm:$0xff]
      %v166 = vld [vmem:[%s139 + $0x90] sm:$0xff]
      %v167 = vld [vmem:[%s139 + $0x98] sm:$0xff]
      %v168 = vld [vmem:[%s139 + $0xa0] sm:$0xff]
      %v169 = vld [vmem:[%s139 + $0xa8] sm:$0xff]
      %v170 = vld [vmem:[%s139 + $0xb0] sm:$0xff]
      %v171 = vld [vmem:[%s139 + $0xb8] sm:$0xff]
      %v172 = vld [vmem:[%s139 + $0xc0] sm:$0xff]
      %v173 = vld [vmem:[%s139 + $0xc8] sm:$0xff]
      %v174 = vld [vmem:[%s139 + $0xd0] sm:$0xff]
      %v175 = vld [vmem:[%s139 + $0xd8] sm:$0xff]
      %v176 = vld [vmem:[%s139 + $0xe0] sm:$0xff]
      %v177 = vld [vmem:[%s139 + $0xe8] sm:$0xff]
      %v178 = vld [vmem:[%s139 + $0xf0] sm:$0xff]
      %v179 = vld [vmem:[%s139 + $0xf8] sm:$0xff]
      %v180 = vpack.c.bf16 %v149, %v148
      %v181 = vpack.c.bf16 %v151, %v150
      %v182 = vpack.c.bf16 %v153, %v152
      %v183 = vpack.c.bf16 %v155, %v154
      %v184 = vpack.c.bf16 %v157, %v156
      %v185 = vpack.c.bf16 %v159, %v158
      %v186 = vpack.c.bf16 %v161, %v160
      %v187 = vpack.c.bf16 %v163, %v162
      %v188 = vpack.c.bf16 %v165, %v164
      %v189 = vpack.c.bf16 %v167, %v166
      %v190 = vpack.c.bf16 %v169, %v168
      %v191 = vpack.c.bf16 %v171, %v170
      %v192 = vpack.c.bf16 %v173, %v172
      %v193 = vpack.c.bf16 %v175, %v174
      %v194 = vpack.c.bf16 %v177, %v176
      %v195 = vpack.c.bf16 %v179, %v178
      %v196 = vld [vmem:[%s1] sm:$0xf]
      %v197 = vld [vmem:[%s1 + $0x4] sm:$0xf]
      %v198 = vld [vmem:[%s1 + $0x8] sm:$0xf]
      %v199 = vld [vmem:[%s1 + $0xc] sm:$0xf]
      %v200 = vld [vmem:[%s1 + $0x10] sm:$0xf]
      %v201 = vld [vmem:[%s1 + $0x14] sm:$0xf]
      %v202 = vld [vmem:[%s1 + $0x18] sm:$0xf]
      %v203 = vld [vmem:[%s1 + $0x1c] sm:$0xf]
      %v204 = vld [vmem:[%s1 + $0x20] sm:$0xf]
      %v205 = vld [vmem:[%s1 + $0x24] sm:$0xf]
      %v206 = vld [vmem:[%s1 + $0x28] sm:$0xf]
      %v207 = vld [vmem:[%s1 + $0x2c] sm:$0xf]
      %v208 = vld [vmem:[%s1 + $0x30] sm:$0xf]
      %v209 = vld [vmem:[%s1 + $0x34] sm:$0xf]
      %v210 = vld [vmem:[%s1 + $0x38] sm:$0xf]
      %v211 = vld [vmem:[%s1 + $0x3c] sm:$0xf]
      %v228 = vunpack.c.l.b16 %v196
      %v229 = vunpack.c.l.b16 %v197
      %v230 = vunpack.c.l.b16 %v198
      %v231 = vunpack.c.l.b16 %v199
      %v232 = vunpack.c.l.b16 %v200
      %v233 = vunpack.c.l.b16 %v201
      %v234 = vunpack.c.l.b16 %v202
      %v235 = vunpack.c.l.b16 %v203
      %v236 = vunpack.c.l.b16 %v204
      %v237 = vunpack.c.l.b16 %v205
      %v238 = vunpack.c.l.b16 %v206
      %v239 = vunpack.c.l.b16 %v207
      %v240 = vunpack.c.l.b16 %v208
      %v241 = vunpack.c.l.b16 %v209
      %v242 = vunpack.c.l.b16 %v210
      %v243 = vunpack.c.l.b16 %v211
      %v244 = vpack.c.b16 %v229, %v228
      %v245 = vpack.c.b16 %v231, %v230
      %v246 = vpack.c.b16 %v233, %v232
      %v247 = vpack.c.b16 %v235, %v234
      %v248 = vpack.c.b16 %v237, %v236
      %v249 = vpack.c.b16 %v239, %v238
      %v250 = vpack.c.b16 %v241, %v240
      %v251 = vpack.c.b16 %v243, %v242
      %260 = vmatprep.subr.bf16.mxu0 0
      %261 = vmatpush1.bf16.msra.mxu0 %v244
      %262 = vmatprep.subr.bf16.mxu0 0
      %263 = vmatpush1.bf16.msra.mxu0 %v245
      %264 = vmatprep.subr.bf16.mxu0 0
      %265 = vmatpush1.bf16.msra.mxu0 %v246
      %266 = vmatprep.subr.bf16.mxu0 0
      %267 = vmatpush1.bf16.msra.mxu0 %v247
      %268 = vmatprep.subr.bf16.mxu0 0
      %269 = vmatpush1.bf16.msra.mxu0 %v248
      %270 = vmatprep.subr.bf16.mxu0 0
      %271 = vmatpush1.bf16.msra.mxu0 %v249
      %272 = vmatprep.subr.bf16.mxu0 0
      %273 = vmatpush1.bf16.msra.mxu0 %v250
      %274 = vmatprep.subr.bf16.mxu0 0
      %275 = vmatpush1.bf16.msra.mxu0 %v251
      %276 = vmatprep.subr.bf16.mxu0 0
      %277 = vmatpush1.bf16.msra.mxu0 0
      %278 = vmatprep.subr.bf16.mxu0 0
      %279 = vmatpush1.bf16.msra.mxu0 0
      %280 = vmatprep.subr.bf16.mxu0 0
      %281 = vmatpush1.bf16.msra.mxu0 0
      %282 = vmatprep.subr.bf16.mxu0 0
      %283 = vmatpush1.bf16.msra.mxu0 0
      %284 = vmatprep.subr.bf16.mxu0 0
      %285 = vmatpush1.bf16.msra.mxu0 0
      %286 = vmatprep.subr.bf16.mxu0 0
      %287 = vmatpush1.bf16.msra.mxu0 0
      %288 = vmatprep.subr.bf16.mxu0 0
      %289 = vmatpush1.bf16.msra.mxu0 0
      %290 = vmatprep.subr.bf16.mxu0 0
      %291 = vmatpush1.bf16.msra.mxu0 0
      %292 = vmatprep.mubr.bf16.mxu0 0
      %293 = vmatmul.mubr.bf16.gmra.mrb[0].mxu0 %v180
      %v294 = vpop.f32.mrb[0].mxu0
      %v295 = vadd.f32 0.0, %v294
      %v296 = vpop.f32.mrb[0].mxu0
      %v297 = vpop.f32.mrb[0].mxu0
      %v298 = vadd.f32 0.0, %v297
      %v299 = vpop.f32.mrb[0].mxu0
      %300 = vmatprep.mubr.bf16.mxu0 0
      %301 = vmatmul.mubr.bf16.gmra.mrb[0].mxu0 %v181
      %v302 = vpop.f32.mrb[0].mxu0
      %v303 = vadd.f32 0.0, %v302
      %v304 = vpop.f32.mrb[0].mxu0
      %v305 = vpop.f32.mrb[0].mxu0
      %v306 = vadd.f32 0.0, %v305
      %v307 = vpop.f32.mrb[0].mxu0
      %308 = vmatprep.mubr.bf16.mxu0 0
      %309 = vmatmul.mubr.bf16.gmra.mrb[0].mxu0 %v182
      %v310 = vpop.f32.mrb[0].mxu0
      %v311 = vadd.f32 0.0, %v310
      %v312 = vpop.f32.mrb[0].mxu0
      %v313 = vpop.f32.mrb[0].mxu0
      %v314 = vadd.f32 0.0, %v313
      %v315 = vpop.f32.mrb[0].mxu0
      %316 = vmatprep.mubr.bf16.mxu0 0
      %317 = vmatmul.mubr.bf16.gmra.mrb[0].mxu0 %v183
      %v318 = vpop.f32.mrb[0].mxu0
      %v319 = vadd.f32 0.0, %v318
      %v320 = vpop.f32.mrb[0].mxu0
      %v321 = vpop.f32.mrb[0].mxu0
      %v322 = vadd.f32 0.0, %v321
      %v323 = vpop.f32.mrb[0].mxu0
      %324 = vmatprep.mubr.bf16.mxu0 0
      %325 = vmatmul.mubr.bf16.gmra.mrb[0].mxu0 %v184
      %v326 = vpop.f32.mrb[0].mxu0
      %v327 = vadd.f32 0.0, %v326
      %v328 = vpop.f32.mrb[0].mxu0
      %v329 = vpop.f32.mrb[0].mxu0
      %v330 = vadd.f32 0.0, %v329
      %v331 = vpop.f32.mrb[0].mxu0
      %332 = vmatprep.mubr.bf16.mxu0 0
      %333 = vmatmul.mubr.bf16.gmra.mrb[0].mxu0 %v185
      %v334 = vpop.f32.mrb[0].mxu0
      %v335 = vadd.f32 0.0, %v334
      %v336 = vpop.f32.mrb[0].mxu0
      %v337 = vpop.f32.mrb[0].mxu0
      %v338 = vadd.f32 0.0, %v337
      %v339 = vpop.f32.mrb[0].mxu0
      %340 = vmatprep.mubr.bf16.mxu0 0
      %341 = vmatmul.mubr.bf16.gmra.mrb[0].mxu0 %v186
      %v342 = vpop.f32.mrb[0].mxu0
      %v343 = vadd.f32 0.0, %v342
      %v344 = vpop.f32.mrb[0].mxu0
      %v345 = vpop.f32.mrb[0].mxu0
      %v346 = vadd.f32 0.0, %v345
      %v347 = vpop.f32.mrb[0].mxu0
      %348 = vmatprep.mubr.bf16.mxu0 0
      %349 = vmatmul.mubr.bf16.gmra.mrb[0].mxu0 %v187
      %v350 = vpop.f32.mrb[0].mxu0
      %v351 = vadd.f32 0.0, %v350
      %v352 = vpop.f32.mrb[0].mxu0
      %v353 = vpop.f32.mrb[0].mxu0
      %v354 = vadd.f32 0.0, %v353
      %v355 = vpop.f32.mrb[0].mxu0
      %356 = vmatprep.mubr.bf16.mxu0 0
      %357 = vmatmul.mubr.bf16.gmra.mrb[0].mxu0 %v188
      %v358 = vpop.f32.mrb[0].mxu0
      %v359 = vadd.f32 0.0, %v358
      %v360 = vpop.f32.mrb[0].mxu0
      %v361 = vpop.f32.mrb[0].mxu0
      %v362 = vadd.f32 0.0, %v361
      %v363 = vpop.f32.mrb[0].mxu0
      %364 = vmatprep.mubr.bf16.mxu0 0
      %365 = vmatmul.mubr.bf16.gmra.mrb[0].mxu0 %v189
      %v366 = vpop.f32.mrb[0].mxu0
      %v367 = vadd.f32 0.0, %v366
      %v368 = vpop.f32.mrb[0].mxu0
      %v369 = vpop.f32.mrb[0].mxu0
      %v370 = vadd.f32 0.0, %v369
      %v371 = vpop.f32.mrb[0].mxu0
      %372 = vmatprep.mubr.bf16.mxu0 0
      %373 = vmatmul.mubr.bf16.gmra.mrb[0].mxu0 %v190
      %v374 = vpop.f32.mrb[0].mxu0
      %v375 = vadd.f32 0.0, %v374
      %v376 = vpop.f32.mrb[0].mxu0
      %v377 = vpop.f32.mrb[0].mxu0
      %v378 = vadd.f32 0.0, %v377
      %v379 = vpop.f32.mrb[0].mxu0
      %380 = vmatprep.mubr.bf16.mxu0 0
      %381 = vmatmul.mubr.bf16.gmra.mrb[0].mxu0 %v191
      %v382 = vpop.f32.mrb[0].mxu0
      %v383 = vadd.f32 0.0, %v382
      %v384 = vpop.f32.mrb[0].mxu0
      %v385 = vpop.f32.mrb[0].mxu0
      %v386 = vadd.f32 0.0, %v385
      %v387 = vpop.f32.mrb[0].mxu0
      %388 = vmatprep.mubr.bf16.mxu0 0
      %389 = vmatmul.mubr.bf16.gmra.mrb[0].mxu0 %v192
      %v390 = vpop.f32.mrb[0].mxu0
      %v391 = vadd.f32 0.0, %v390
      %v392 = vpop.f32.mrb[0].mxu0
      %v393 = vpop.f32.mrb[0].mxu0
      %v394 = vadd.f32 0.0, %v393
      %v395 = vpop.f32.mrb[0].mxu0
      %396 = vmatprep.mubr.bf16.mxu0 0
      %397 = vmatmul.mubr.bf16.gmra.mrb[0].mxu0 %v193
      %v398 = vpop.f32.mrb[0].mxu0
      %v399 = vadd.f32 0.0, %v398
      %v400 = vpop.f32.mrb[0].mxu0
      %v401 = vpop.f32.mrb[0].mxu0
      %v402 = vadd.f32 0.0, %v401
      %v403 = vpop.f32.mrb[0].mxu0
      %404 = vmatprep.mubr.bf16.mxu0 0
      %405 = vmatmul.mubr.bf16.gmra.mrb[0].mxu0 %v194
      %v406 = vpop.f32.mrb[0].mxu0
      %v407 = vadd.f32 0.0, %v406
      %v408 = vpop.f32.mrb[0].mxu0
      %v409 = vpop.f32.mrb[0].mxu0
      %v410 = vadd.f32 0.0, %v409
      %v411 = vpop.f32.mrb[0].mxu0
      %412 = vmatprep.mubr.bf16.mxu0 0
      %413 = vmatmul.mubr.bf16.gmra.mrb[0].mxu0 %v195
      %v414 = vpop.f32.mrb[0].mxu0
      %v415 = vadd.f32 0.0, %v414
      %v416 = vpop.f32.mrb[0].mxu0
      %v417 = vpop.f32.mrb[0].mxu0
      %v418 = vadd.f32 0.0, %v417
      %v419 = vpop.f32.mrb[0].mxu0
      %420 = vdwg.mxu0
      %v421 = vpack.c.bf16 %v298, %v295
      %v422 = vpack.c.bf16 %v306, %v303
      %v423 = vpack.c.bf16 %v314, %v311
      %v424 = vpack.c.bf16 %v322, %v319
      %v425 = vpack.c.bf16 %v330, %v327
      %v426 = vpack.c.bf16 %v338, %v335
      %v427 = vpack.c.bf16 %v346, %v343
      %v428 = vpack.c.bf16 %v354, %v351
      %v429 = vpack.c.bf16 %v362, %v359
      %v430 = vpack.c.bf16 %v370, %v367
      %v431 = vpack.c.bf16 %v378, %v375
      %v432 = vpack.c.bf16 %v386, %v383
      %v433 = vpack.c.bf16 %v394, %v391
      %v434 = vpack.c.bf16 %v402, %v399
      %v435 = vpack.c.bf16 %v410, %v407
      %v436 = vpack.c.bf16 %v418, %v415
      %v453 = vunpack.c.l.b16 %v421
      %v454 = vunpack.c.h.b16 %v421
      %v455 = vunpack.c.l.b16 %v422
      %v456 = vunpack.c.h.b16 %v422
      %v457 = vunpack.c.l.b16 %v423
      %v458 = vunpack.c.h.b16 %v423
      %v459 = vunpack.c.l.b16 %v424
      %v460 = vunpack.c.h.b16 %v424
      %v461 = vunpack.c.l.b16 %v425
      %v462 = vunpack.c.h.b16 %v425
      %v463 = vunpack.c.l.b16 %v426
      %v464 = vunpack.c.h.b16 %v426
      %v465 = vunpack.c.l.b16 %v427
      %v466 = vunpack.c.h.b16 %v427
      %v467 = vunpack.c.l.b16 %v428
      %v468 = vunpack.c.h.b16 %v428
      %v469 = vunpack.c.l.b16 %v429
      %v470 = vunpack.c.h.b16 %v429
      %v471 = vunpack.c.l.b16 %v430
      %v472 = vunpack.c.h.b16 %v430
      %v473 = vunpack.c.l.b16 %v431
      %v474 = vunpack.c.h.b16 %v431
      %v475 = vunpack.c.l.b16 %v432
      %v476 = vunpack.c.h.b16 %v432
      %v477 = vunpack.c.l.b16 %v433
      %v478 = vunpack.c.h.b16 %v433
      %v479 = vunpack.c.l.b16 %v434
      %v480 = vunpack.c.h.b16 %v434
      %v481 = vunpack.c.l.b16 %v435
      %v482 = vunpack.c.h.b16 %v435
      %v483 = vunpack.c.l.b16 %v436
      %v484 = vunpack.c.h.b16 %v436
      %v485 = vpack.c.b16 %v453, %v453
      %v486 = vpack.c.b16 %v454, %v454
      %v487 = vpack.c.b16 %v455, %v455
      %v488 = vpack.c.b16 %v456, %v456
      %v489 = vpack.c.b16 %v457, %v457
      %v490 = vpack.c.b16 %v458, %v458
      %v491 = vpack.c.b16 %v459, %v459
      %v492 = vpack.c.b16 %v460, %v460
      %v493 = vpack.c.b16 %v461, %v461
      %v494 = vpack.c.b16 %v462, %v462
      %v495 = vpack.c.b16 %v463, %v463
      %v496 = vpack.c.b16 %v464, %v464
      %v497 = vpack.c.b16 %v465, %v465
      %v498 = vpack.c.b16 %v466, %v466
      %v499 = vpack.c.b16 %v467, %v467
      %v500 = vpack.c.b16 %v468, %v468
      %v501 = vpack.c.b16 %v469, %v469
      %v502 = vpack.c.b16 %v470, %v470
      %v503 = vpack.c.b16 %v471, %v471
      %v504 = vpack.c.b16 %v472, %v472
      %v505 = vpack.c.b16 %v473, %v473
      %v506 = vpack.c.b16 %v474, %v474
      %v507 = vpack.c.b16 %v475, %v475
      %v508 = vpack.c.b16 %v476, %v476
      %v509 = vpack.c.b16 %v477, %v477
      %v510 = vpack.c.b16 %v478, %v478
      %v511 = vpack.c.b16 %v479, %v479
      %v512 = vpack.c.b16 %v480, %v480
      %v513 = vpack.c.b16 %v481, %v481
      %v514 = vpack.c.b16 %v482, %v482
      %v515 = vpack.c.b16 %v483, %v483
      %v516 = vpack.c.b16 %v484, %v484
      %549 = vst [vmem:[%s145] sm:$0xf] %v485
      %550 = vst [vmem:[%s145 + $0x4] sm:$0xf] %v486
      %551 = vst [vmem:[%s145 + $0x8] sm:$0xf] %v487
      %552 = vst [vmem:[%s145 + $0xc] sm:$0xf] %v488
      %553 = vst [vmem:[%s145 + $0x10] sm:$0xf] %v489
      %554 = vst [vmem:[%s145 + $0x14] sm:$0xf] %v490
      %555 = vst [vmem:[%s145 + $0x18] sm:$0xf] %v491
      %556 = vst [vmem:[%s145 + $0x1c] sm:$0xf] %v492
      %557 = vst [vmem:[%s145 + $0x20] sm:$0xf] %v493
      %558 = vst [vmem:[%s145 + $0x24] sm:$0xf] %v494
      %559 = vst [vmem:[%s145 + $0x28] sm:$0xf] %v495
      %560 = vst [vmem:[%s145 + $0x2c] sm:$0xf] %v496
      %561 = vst [vmem:[%s145 + $0x30] sm:$0xf] %v497
      %562 = vst [vmem:[%s145 + $0x34] sm:$0xf] %v498
      %563 = vst [vmem:[%s145 + $0x38] sm:$0xf] %v499
      %564 = vst [vmem:[%s145 + $0x3c] sm:$0xf] %v500
      %565 = vst [vmem:[%s145 + $0x40] sm:$0xf] %v501
      %566 = vst [vmem:[%s145 + $0x44] sm:$0xf] %v502
      %567 = vst [vmem:[%s145 + $0x48] sm:$0xf] %v503
      %568 = vst [vmem:[%s145 + $0x4c] sm:$0xf] %v504
      %569 = vst [vmem:[%s145 + $0x50] sm:$0xf] %v505
      %570 = vst [vmem:[%s145 + $0x54] sm:$0xf] %v506
      %571 = vst [vmem:[%s145 + $0x58] sm:$0xf] %v507
      %572 = vst [vmem:[%s145 + $0x5c] sm:$0xf] %v508
      %573 = vst [vmem:[%s145 + $0x60] sm:$0xf] %v509
      %574 = vst [vmem:[%s145 + $0x64] sm:$0xf] %v510
      %575 = vst [vmem:[%s145 + $0x68] sm:$0xf] %v511
      %576 = vst [vmem:[%s145 + $0x6c] sm:$0xf] %v512
      %577 = vst [vmem:[%s145 + $0x70] sm:$0xf] %v513
      %578 = vst [vmem:[%s145 + $0x74] sm:$0xf] %v514
      %579 = vst [vmem:[%s145 + $0x78] sm:$0xf] %v515
      %580 = vst [vmem:[%s145 + $0x7c] sm:$0xf] %v516
      %s581 = smul.u32 32, %s13
      %p582 = scmp.lt.s32.totalorder %s581, 63
      %s583 = scalar_select %p582, %s581, 63
      %s584 = smul.addr %s583, 4
      %s585 = scalar_lea.vmem %s2, %s584
      // Predicated region
      $region29: #{gcn_encoder_forward.6} parent=27 // pred_check
        %p586 = pneg %p78
      $region30: #{gcn_encoder_forward.6} parent=27 // pred_check_branch
        %588 = sbr.rel (%p586) target = $region32
      $region31: #{gcn_encoder_forward.6} parent=27 // pred_region
        %s589 = smul.u32 32, %s13
      $region32: #{gcn_encoder_forward.6} parent=27 // pred_fallthru
        _
    $region28: #{gcn_encoder_forward.6} parent=5 // pred_fallthru
      _
    %p590 = scmp.le.s32.totalorder 2, %s8
    // Predicated region
    $region33: #{gcn_encoder_forward.6} parent=5 // pred_check
      %p591 = pneg %p590
    $region34: #{gcn_encoder_forward.6} parent=5 // pred_check_branch
      %593 = sbr.rel (%p591) target = $region36
    $region35: #{gcn_encoder_forward.6} parent=5 // pred_region
      %s594 = ssub.s32 %s8, 2
      // Predicated region
      $region37: #{gcn_encoder_forward.6} parent=35 // pred_check
        %p595 = pneg %p84
      $region38: #{gcn_encoder_forward.6} parent=35 // pred_check_branch
        %597 = sbr.rel (%p595) target = $region40
      $region39: #{gcn_encoder_forward.6} parent=35 // pred_region
        %s598 = smul.u32 32, %s14
        %p599 = scmp.lt.s32.totalorder %s598, 63
        %s600 = scalar_select %p599, %s598, 63
        %s601 = smul.addr %s600, 4
        %s602 = scalar_lea.vmem %s2, %s601
      $region40: #{gcn_encoder_forward.6} parent=35 // pred_fallthru
        _
    $region36: #{gcn_encoder_forward.6} parent=5 // pred_fallthru
      _
  $region6: #{gcn_encoder_forward.6} parent=0 // loop_footer
    %s12 = sadd.s32 1, %s8
  $region7: #{gcn_encoder_forward.6} parent=0 // loop_footer_branch
    %7 = sbr.rel target = $region3
  $region8: #{gcn_encoder_forward.6} parent=0 // loop_exit
    _

// kernel: gcn_encoder_forward.7
$region0: #{gcn_encoder_forward.7}
  #allocation0 [shape = 'u32[]', space=smem, size = 0x4, offset = 0x4, fixed_abs, tag = 'smem constant byte address 0x4 - core index']
  #allocation1 [shape = 'u32[144,128]{1,0:T(1,128)}', space=vmem, size = 0x12000, scoped, tag = 'internal scratch']
  %s0 = inlined_call_operand.vmem [shape: bf16[512,512], index: 0, kind: input, shape index: {}]
  %s1 = inlined_call_operand.vmem [shape: bf16[512,128], index: 1, kind: input, shape index: {}]
  %s2 = inlined_call_operand.vmem [shape: f32[1,128], index: 2, kind: input, shape index: {}]
  %s3 = inlined_call_operand.vmem [shape: f32[512,128], index: 3, kind: output, shape index: {}]
  %s4 = sld [smem:[#allocation0]]
  $region53: #{gcn_encoder_forward.7} parent=0
    _
  %s6 = ssub.s32 1, %s4
  %s7 = scalar_select 0, %s6, %s4
  loop: start=0, step=1, limit=4
  $region2: #{gcn_encoder_forward.7} parent=0 // loop_pre_header
    _
  $region3: #{gcn_encoder_forward.7} parent=0 // loop_header
    %s9 = sphi 0, %s13
    %p10 = scmp.ge.s32.totalorder %s9, 4
    %s16 = sphi 0, %s28
    %s17 = sphi 0, %s24
    %s18 = sphi 0, %s16
    %s19 = sphi 0, %s17
    %s20 = sphi 0, %s18
    %s21 = sphi 0, %s19
    %s33 = sphi 0, %s35
    %s36 = sphi 0, %s33
    %s37 = sphi 0, %s36
    %s53 = sphi 0, %s37
    %s57 = sphi 0, %s57
    %s59 = sphi 0, %s57
    %s60 = sphi 0, %s59
    %s74 = sphi 0, %s60
    %s78 = sphi 0, %s78
    %s80 = sphi 0, %s78
    %s81 = sphi 0, %s80
    %s95 = sphi 0, %s81
    %s101 = sphi 0, %s103
    %s104 = sphi 0, %s101
    %s105 = sphi 0, %s104
    %s121 = sphi 0, %s105
  $region4: #{gcn_encoder_forward.7} parent=0 // loop_header_branch
    %12 = sbr.rel (%p10) target = $region8
  $region5: #{gcn_encoder_forward.7} parent=0 // loop_body
    %s14 = ssub.s32 %s9, 1
    %s15 = ssub.s32 %s9, 2
    %s22 = sadd.s32 1, %s17
    %p23 = scmp.ge.s32.totalorder %s22, 1
    %s24 = scalar_select %p23, 0, %s22
    %s25 = sadd.s32 1, %s16
    %s26 = scalar_select %p23, %s25, %s16
    %p27 = scmp.ge.s32.totalorder %s26, 2
    %s28 = scalar_select %p27, 0, %s26
    %s29 = ssub.s32 %s16, %s28
    %s30 = ssub.s32 %s17, %s24
    %s31 = sor.u32 %s29, %s30
    %p32 = scmp.eq.s32.totalorder %s31, 0
    %s34 = sadd.s32 %s33, 1
    %s35 = scalar_select %p32, %s33, %s34
    %p38 = pneg %p32
    %p39 = scmp.eq.s32.totalorder %s9, 1
    %p40 = por %p38, %p39
    %p41 = scmp.ne.s32.totalorder %s33, %s36
    %p42 = scmp.eq.s32.totalorder %s9, 0
    %p43 = por %p41, %p42
    %p44 = scmp.ne.s32.totalorder %s33, %s36
    %p45 = scmp.eq.s32.totalorder %s14, 1
    %p46 = por %p44, %p45
    %p47 = scmp.ne.s32.totalorder %s36, %s37
    %p48 = scmp.eq.s32.totalorder %s14, 0
    %p49 = por %p47, %p48
    %p50 = scmp.ne.s32.totalorder %s36, %s37
    %p51 = scmp.eq.s32.totalorder %s15, 1
    %p52 = por %p50, %p51
    %p54 = scmp.ne.s32.totalorder %s37, %s53
    %p55 = scmp.eq.s32.totalorder %s15, 0
    %p56 = por %p54, %p55
    %s58 = sadd.s32 %s57, 1
    %p61 = scmp.eq.s32.totalorder %s9, 1
    %p62 = scmp.ne.s32.totalorder %s57, %s59
    %p63 = scmp.eq.s32.totalorder %s9, 0
    %p64 = por %p62, %p63
    %p65 = scmp.ne.s32.totalorder %s57, %s59
    %p66 = scmp.eq.s32.totalorder %s14, 1
    %p67 = por %p65, %p66
    %p68 = scmp.ne.s32.totalorder %s59, %s60
    %p69 = scmp.eq.s32.totalorder %s14, 0
    %p70 = por %p68, %p69
    %p71 = scmp.ne.s32.totalorder %s59, %s60
    %p72 = scmp.eq.s32.totalorder %s15, 1
    %p73 = por %p71, %p72
    %p75 = scmp.ne.s32.totalorder %s60, %s74
    %p76 = scmp.eq.s32.totalorder %s15, 0
    %p77 = por %p75, %p76
    %s79 = sadd.s32 %s78, 1
    %p82 = scmp.eq.s32.totalorder %s9, 1
    %p83 = scmp.ne.s32.totalorder %s78, %s80
    %p84 = scmp.eq.s32.totalorder %s9, 0
    %p85 = por %p83, %p84
    %p86 = scmp.ne.s32.totalorder %s78, %s80
    %p87 = scmp.eq.s32.totalorder %s14, 1
    %p88 = por %p86, %p87
    %p89 = scmp.ne.s32.totalorder %s80, %s81
    %p90 = scmp.eq.s32.totalorder %s14, 0
    %p91 = por %p89, %p90
    %p92 = scmp.ne.s32.totalorder %s80, %s81
    %p93 = scmp.eq.s32.totalorder %s15, 1
    %p94 = por %p92, %p93
    %p96 = scmp.ne.s32.totalorder %s81, %s95
    %p97 = scmp.eq.s32.totalorder %s15, 0
    %p98 = por %p96, %p97
    %s99 = ssub.s32 %s16, %s28
    %p100 = scmp.eq.s32.totalorder %s99, 0
    %s102 = sadd.s32 %s101, 1
    %s103 = scalar_select %p100, %s101, %s102
    %p106 = pneg %p100
    %p107 = scmp.eq.s32.totalorder %s9, 1
    %p108 = por %p106, %p107
    %p109 = scmp.ne.s32.totalorder %s101, %s104
    %p110 = scmp.eq.s32.totalorder %s9, 0
    %p111 = por %p109, %p110
    %p112 = scmp.ne.s32.totalorder %s101, %s104
    %p113 = scmp.eq.s32.totalorder %s14, 1
    %p114 = por %p112, %p113
    %p115 = scmp.ne.s32.totalorder %s104, %s105
    %p116 = scmp.eq.s32.totalorder %s14, 0
    %p117 = por %p115, %p116
    %p118 = scmp.ne.s32.totalorder %s104, %s105
    %p119 = scmp.eq.s32.totalorder %s15, 1
    %p120 = por %p118, %p119
    %p122 = scmp.ne.s32.totalorder %s105, %s121
    %p123 = scmp.eq.s32.totalorder %s15, 0
    %p124 = por %p122, %p123
    %p125 = scmp.le.s32.totalorder 1, %s9
    %p126 = scmp.lt.s32.totalorder %s9, 3
    %p127 = pnand %p125, %p126
    %p128 = pneg %p127
    // Predicated region
    $region9: #{gcn_encoder_forward.7} parent=5 // pred_check
      _
    $region10: #{gcn_encoder_forward.7} parent=5 // pred_check_branch
      %130 = sbr.rel (%p127) target = $region12
    $region11: #{gcn_encoder_forward.7} parent=5 // pred_region
      %s131 = ssub.s32 %s9, 1
      // Predicated region
      $region13: #{gcn_encoder_forward.7} parent=11 // pred_check
        %p132 = pneg %p70
      $region14: #{gcn_encoder_forward.7} parent=11 // pred_check_branch
        %134 = sbr.rel (%p132) target = $region16
      $region15: #{gcn_encoder_forward.7} parent=11 // pred_region
        _
      $region16: #{gcn_encoder_forward.7} parent=11 // pred_fallthru
        _
      // Predicated region
      $region17: #{gcn_encoder_forward.7} parent=11 // pred_check
        %p135 = pneg %p91
      $region18: #{gcn_encoder_forward.7} parent=11 // pred_check_branch
        %137 = sbr.rel (%p135) target = $region20
      $region19: #{gcn_encoder_forward.7} parent=11 // pred_region
        _
      $region20: #{gcn_encoder_forward.7} parent=11 // pred_fallthru
        _
    $region12: #{gcn_encoder_forward.7} parent=5 // pred_fallthru
      _
    %p138 = scmp.lt.s32.totalorder %s9, 2
    // Predicated region
    $region21: #{gcn_encoder_forward.7} parent=5 // pred_check
      %p139 = pneg %p138
    $region22: #{gcn_encoder_forward.7} parent=5 // pred_check_branch
      %141 = sbr.rel (%p139) target = $region24
    $region23: #{gcn_encoder_forward.7} parent=5 // pred_region
      // Predicated region
      $region25: #{gcn_encoder_forward.7} parent=23 // pred_check
        %p142 = pneg %p43
      $region26: #{gcn_encoder_forward.7} parent=23 // pred_check_branch
        %144 = sbr.rel (%p142) target = $region28
      $region27: #{gcn_encoder_forward.7} parent=23 // pred_region
        %s145 = smul.u32 32, %s16
        %s146 = smul.u32 4, %s17
        %p147 = scmp.lt.s32.totalorder %s145, 63
        %s148 = scalar_select %p147, %s145, 63
        %p149 = scmp.lt.s32.totalorder %s146, 3
        %s150 = scalar_select %p149, %s146, 3
        %s151 = smul.addr %s148, 4
        %s152 = sadd.s32 %s150, %s151
        %s153 = smul.addr %s152, 4
        %s154 = scalar_lea.vmem %s0, %s153
        %s155 = smul.u32 32, %s16
        %s156 = smul.u32 4, %s17
      $region28: #{gcn_encoder_forward.7} parent=23 // pred_fallthru
        _
    $region24: #{gcn_encoder_forward.7} parent=5 // pred_fallthru
      _
    %p157 = scmp.le.s32.totalorder 1, %s9
    %p158 = scmp.lt.s32.totalorder %s9, 3
    %p159 = pnand %p157, %p158
    %p160 = pneg %p159
    // Predicated region
    $region29: #{gcn_encoder_forward.7} parent=5 // pred_check
      _
    $region30: #{gcn_encoder_forward.7} parent=5 // pred_check_branch
      %162 = sbr.rel (%p159) target = $region32
    $region31: #{gcn_encoder_forward.7} parent=5 // pred_region
      %s163 = ssub.s32 %s9, 1
      %s164 = smul.u32 32, %s18
      %s165 = smul.u32 4, %s19
      %p166 = scmp.lt.s32.totalorder %s164, 63
      %s167 = scalar_select %p166, %s164, 63
      %p168 = scmp.lt.s32.totalorder %s165, 3
      %s169 = scalar_select %p168, %s165, 3
      %s170 = smul.addr %s167, 4
      %s171 = sadd.s32 %s169, %s170
      %s172 = smul.addr %s171, 4
      %s173 = scalar_lea.vmem %s0, %s172
      %p174 = pneg %p49
      %p175 = pneg %p46
      %p176 = pneg %p70
      %p177 = pneg %p67
      %p178 = pneg %p91
      %p179 = pneg %p88
      %p180 = pneg %p117
      %p181 = pneg %p114
      %s182 = smul.u32 32, %s18
      %p183 = scmp.lt.s32.totalorder %s182, 63
      %s184 = scalar_select %p183, %s182, 63
      %s185 = smul.addr %s184, 8
      %s186 = scalar_lea.vmem %s3, %s185
      %s187 = smul.u32 32, %s18
      %s188 = smul.u32 4, %s19
      %p189 = scmp.lt.s32.totalorder %s187, 63
      %s190 = scalar_select %p189, %s187, 63
      %p191 = scmp.lt.s32.totalorder %s188, 3
      %s192 = scalar_select %p191, %s188, 3
      %s193 = smul.addr %s190, 4
      %s194 = sadd.s32 %s192, %s193
      %s195 = smul.addr %s194, 4
      %s196 = scalar_lea.vmem %s0, %s195
      %s197 = smul.u32 32, %s18
      %s198 = smul.u32 4, %s19
      %s199 = smul.u32 32, %s18
      %p200 = scmp.lt.s32.totalorder %s199, 63
      %s201 = scalar_select %p200, %s199, 63
      %s202 = smul.addr %s201, 8
      %s203 = scalar_lea.vmem %s3, %s202
      %s204 = smul.u32 32, %s18
      %p206 = scmp.eq.s32.totalorder %s19, 0
      // Predicated region
      $region33: #{gcn_encoder_forward.7} parent=31 // pred_check
        %p207 = pneg %p206
      $region34: #{gcn_encoder_forward.7} parent=31 // pred_check_branch
        %209 = sbr.rel (%p207) target = $region36
      $region35: #{gcn_encoder_forward.7} parent=31 // pred_region
        %v210 = vld [vmem:[%s2] sm:$0x1]
        %v212 = vlaneseq
        %v213 = vshrl.u32 %v212, 7
        %v214 = vsub.s32 0, %v213
        %v215 = vrot.slane %v210, %v214
        %217 = vst [vmem:[%s203] sm:$0xff] %v215
        %218 = vst [vmem:[%s203 + $0x8] sm:$0xff] %v215
        %219 = vst [vmem:[%s203 + $0x10] sm:$0xff] %v215
        %220 = vst [vmem:[%s203 + $0x18] sm:$0xff] %v215
        %221 = vst [vmem:[%s203 + $0x20] sm:$0xff] %v215
        %222 = vst [vmem:[%s203 + $0x28] sm:$0xff] %v215
        %223 = vst [vmem:[%s203 + $0x30] sm:$0xff] %v215
        %224 = vst [vmem:[%s203 + $0x38] sm:$0xff] %v215
        %225 = vst [vmem:[%s203 + $0x40] sm:$0xff] %v215
        %226 = vst [vmem:[%s203 + $0x48] sm:$0xff] %v215
        %227 = vst [vmem:[%s203 + $0x50] sm:$0xff] %v215
        %228 = vst [vmem:[%s203 + $0x58] sm:$0xff] %v215
        %229 = vst [vmem:[%s203 + $0x60] sm:$0xff] %v215
        %230 = vst [vmem:[%s203 + $0x68] sm:$0xff] %v215
        %231 = vst [vmem:[%s203 + $0x70] sm:$0xff] %v215
        %232 = vst [vmem:[%s203 + $0x78] sm:$0xff] %v215
        %233 = vst [vmem:[%s203 + $0x80] sm:$0xff] %v215
        %234 = vst [vmem:[%s203 + $0x88] sm:$0xff] %v215
        %235 = vst [vmem:[%s203 + $0x90] sm:$0xff] %v215
        %236 = vst [vmem:[%s203 + $0x98] sm:$0xff] %v215
        %237 = vst [vmem:[%s203 + $0xa0] sm:$0xff] %v215
        %238 = vst [vmem:[%s203 + $0xa8] sm:$0xff] %v215
        %239 = vst [vmem:[%s203 + $0xb0] sm:$0xff] %v215
        %240 = vst [vmem:[%s203 + $0xb8] sm:$0xff] %v215
        %241 = vst [vmem:[%s203 + $0xc0] sm:$0xff] %v215
        %242 = vst [vmem:[%s203 + $0xc8] sm:$0xff] %v215
        %243 = vst [vmem:[%s203 + $0xd0] sm:$0xff] %v215
        %244 = vst [vmem:[%s203 + $0xd8] sm:$0xff] %v215
        %245 = vst [vmem:[%s203 + $0xe0] sm:$0xff] %v215
        %246 = vst [vmem:[%s203 + $0xe8] sm:$0xff] %v215
        %247 = vst [vmem:[%s203 + $0xf0] sm:$0xff] %v215
        %248 = vst [vmem:[%s203 + $0xf8] sm:$0xff] %v215
      $region36: #{gcn_encoder_forward.7} parent=31 // pred_fallthru
        _
      %s249 = smul.u32 %s19, 512
      %s250 = sshra.s32 %s249, 3
      %s251 = sand.u32 %s249, 7
      %s252 = smul.addr %s250, 4
      %s253 = scalar_lea.vmem %s1, %s252
      %v254 = vld [vmem:[%s253] sm:$0xf]
      %v255 = vld [vmem:[%s253 + $0x4] sm:$0xf]
      %v256 = vld [vmem:[%s253 + $0x8] sm:$0xf]
      %v257 = vld [vmem:[%s253 + $0xc] sm:$0xf]
      %v258 = vld [vmem:[%s253 + $0x10] sm:$0xf]
      %v259 = vld [vmem:[%s253 + $0x14] sm:$0xf]
      %v260 = vld [vmem:[%s253 + $0x18] sm:$0xf]
      %v261 = vld [vmem:[%s253 + $0x1c] sm:$0xf]
      %v262 = vld [vmem:[%s253 + $0x20] sm:$0xf]
      %v263 = vld [vmem:[%s253 + $0x24] sm:$0xf]
      %v264 = vld [vmem:[%s253 + $0x28] sm:$0xf]
      %v265 = vld [vmem:[%s253 + $0x2c] sm:$0xf]
      %v266 = vld [vmem:[%s253 + $0x30] sm:$0xf]
      %v267 = vld [vmem:[%s253 + $0x34] sm:$0xf]
      %v268 = vld [vmem:[%s253 + $0x38] sm:$0xf]
      %v269 = vld [vmem:[%s253 + $0x3c] sm:$0xf]
      %v270 = vld [vmem:[%s253 + $0x40] sm:$0xf]
      %v271 = vld [vmem:[%s253 + $0x44] sm:$0xf]
      %v272 = vld [vmem:[%s253 + $0x48] sm:$0xf]
      %v273 = vld [vmem:[%s253 + $0x4c] sm:$0xf]
      %v274 = vld [vmem:[%s253 + $0x50] sm:$0xf]
      %v275 = vld [vmem:[%s253 + $0x54] sm:$0xf]
      %v276 = vld [vmem:[%s253 + $0x58] sm:$0xf]
      %v277 = vld [vmem:[%s253 + $0x5c] sm:$0xf]
      %v278 = vld [vmem:[%s253 + $0x60] sm:$0xf]
      %v279 = vld [vmem:[%s253 + $0x64] sm:$0xf]
      %v280 = vld [vmem:[%s253 + $0x68] sm:$0xf]
      %v281 = vld [vmem:[%s253 + $0x6c] sm:$0xf]
      %v282 = vld [vmem:[%s253 + $0x70] sm:$0xf]
      %v283 = vld [vmem:[%s253 + $0x74] sm:$0xf]
      %v284 = vld [vmem:[%s253 + $0x78] sm:$0xf]
      %v285 = vld [vmem:[%s253 + $0x7c] sm:$0xf]
      %v286 = vld [vmem:[%s253 + $0x80] sm:$0xf]
      %v287 = vld [vmem:[%s253 + $0x84] sm:$0xf]
      %v288 = vld [vmem:[%s253 + $0x88] sm:$0xf]
      %v289 = vld [vmem:[%s253 + $0x8c] sm:$0xf]
      %v290 = vld [vmem:[%s253 + $0x90] sm:$0xf]
      %v291 = vld [vmem:[%s253 + $0x94] sm:$0xf]
      %v292 = vld [vmem:[%s253 + $0x98] sm:$0xf]
      %v293 = vld [vmem:[%s253 + $0x9c] sm:$0xf]
      %v294 = vld [vmem:[%s253 + $0xa0] sm:$0xf]
      %v295 = vld [vmem:[%s253 + $0xa4] sm:$0xf]
      %v296 = vld [vmem:[%s253 + $0xa8] sm:$0xf]
      %v297 = vld [vmem:[%s253 + $0xac] sm:$0xf]
      %v298 = vld [vmem:[%s253 + $0xb0] sm:$0xf]
      %v299 = vld [vmem:[%s253 + $0xb4] sm:$0xf]
      %v300 = vld [vmem:[%s253 + $0xb8] sm:$0xf]
      %v301 = vld [vmem:[%s253 + $0xbc] sm:$0xf]
      %v302 = vld [vmem:[%s253 + $0xc0] sm:$0xf]
      %v303 = vld [vmem:[%s253 + $0xc4] sm:$0xf]
      %v304 = vld [vmem:[%s253 + $0xc8] sm:$0xf]
      %v305 = vld [vmem:[%s253 + $0xcc] sm:$0xf]
      %v306 = vld [vmem:[%s253 + $0xd0] sm:$0xf]
      %v307 = vld [vmem:[%s253 + $0xd4] sm:$0xf]
      %v308 = vld [vmem:[%s253 + $0xd8] sm:$0xf]
      %v309 = vld [vmem:[%s253 + $0xdc] sm:$0xf]
      %v310 = vld [vmem:[%s253 + $0xe0] sm:$0xf]
      %v311 = vld [vmem:[%s253 + $0xe4] sm:$0xf]
      %v312 = vld [vmem:[%s253 + $0xe8] sm:$0xf]
      %v313 = vld [vmem:[%s253 + $0xec] sm:$0xf]
      %v314 = vld [vmem:[%s253 + $0xf0] sm:$0xf]
      %v315 = vld [vmem:[%s253 + $0xf4] sm:$0xf]
      %v316 = vld [vmem:[%s253 + $0xf8] sm:$0xf]
      %v317 = vld [vmem:[%s253 + $0xfc] sm:$0xf]
      %v318 = vld [vmem:[%s203] sm:$0xff]
      %v319 = vld [vmem:[%s203 + $0x8] sm:$0xff]
      %v320 = vld [vmem:[%s203 + $0x10] sm:$0xff]
      %v321 = vld [vmem:[%s203 + $0x18] sm:$0xff]
      %v322 = vld [vmem:[%s203 + $0x20] sm:$0xff]
      %v323 = vld [vmem:[%s203 + $0x28] sm:$0xff]
      %v324 = vld [vmem:[%s203 + $0x30] sm:$0xff]
      %v325 = vld [vmem:[%s203 + $0x38] sm:$0xff]
      %v326 = vld [vmem:[%s203 + $0x40] sm:$0xff]
      %v327 = vld [vmem:[%s203 + $0x48] sm:$0xff]
      %v328 = vld [vmem:[%s203 + $0x50] sm:$0xff]
      %v329 = vld [vmem:[%s203 + $0x58] sm:$0xff]
      %v330 = vld [vmem:[%s203 + $0x60] sm:$0xff]
      %v331 = vld [vmem:[%s203 + $0x68] sm:$0xff]
      %v332 = vld [vmem:[%s203 + $0x70] sm:$0xff]
      %v333 = vld [vmem:[%s203 + $0x78] sm:$0xff]
      %v334 = vld [vmem:[%s203 + $0x80] sm:$0xff]
      %v335 = vld [vmem:[%s203 + $0x88] sm:$0xff]
      %v336 = vld [vmem:[%s203 + $0x90] sm:$0xff]
      %v337 = vld [vmem:[%s203 + $0x98] sm:$0xff]
      %v338 = vld [vmem:[%s203 + $0xa0] sm:$0xff]
      %v339 = vld [vmem:[%s203 + $0xa8] sm:$0xff]
      %v340 = vld [vmem:[%s203 + $0xb0] sm:$0xff]
      %v341 = vld [vmem:[%s203 + $0xb8] sm:$0xff]
      %v342 = vld [vmem:[%s203 + $0xc0] sm:$0xff]
      %v343 = vld [vmem:[%s203 + $0xc8] sm:$0xff]
      %v344 = vld [vmem:[%s203 + $0xd0] sm:$0xff]
      %v345 = vld [vmem:[%s203 + $0xd8] sm:$0xff]
      %v346 = vld [vmem:[%s203 + $0xe0] sm:$0xff]
      %v347 = vld [vmem:[%s203 + $0xe8] sm:$0xff]
      %v348 = vld [vmem:[%s203 + $0xf0] sm:$0xff]
      %v349 = vld [vmem:[%s203 + $0xf8] sm:$0xff]
      %v350 = vld [vmem:[%s196] sm:$0xff]
      %v351 = vld [vmem:[%s196 + $0x8] sm:$0xff]
      %v352 = vld [vmem:[%s196 + $0x10] sm:$0xff]
      %v353 = vld [vmem:[%s196 + $0x18] sm:$0xff]
      %v354 = vld [vmem:[%s196 + $0x20] sm:$0xff]
      %v355 = vld [vmem:[%s196 + $0x28] sm:$0xff]
      %v356 = vld [vmem:[%s196 + $0x30] sm:$0xff]
      %v357 = vld [vmem:[%s196 + $0x38] sm:$0xff]
      %v358 = vld [vmem:[%s196 + $0x40] sm:$0xff]
      %v359 = vld [vmem:[%s196 + $0x48] sm:$0xff]
      %v360 = vld [vmem:[%s196 + $0x50] sm:$0xff]
      %v361 = vld [vmem:[%s196 + $0x58] sm:$0xff]
      %v362 = vld [vmem:[%s196 + $0x60] sm:$0xff]
      %v363 = vld [vmem:[%s196 + $0x68] sm:$0xff]
      %v364 = vld [vmem:[%s196 + $0x70] sm:$0xff]
      %v365 = vld [vmem:[%s196 + $0x78] sm:$0xff]
      %v366 = vld [vmem:[%s196 + $0x80] sm:$0xff]
      %v367 = vld [vmem:[%s196 + $0x88] sm:$0xff]
      %v368 = vld [vmem:[%s196 + $0x90] sm:$0xff]
      %v369 = vld [vmem:[%s196 + $0x98] sm:$0xff]
      %v370 = vld [vmem:[%s196 + $0xa0] sm:$0xff]
      %v371 = vld [vmem:[%s196 + $0xa8] sm:$0xff]
      %v372 = vld [vmem:[%s196 + $0xb0] sm:$0xff]
      %v373 = vld [vmem:[%s196 + $0xb8] sm:$0xff]
      %v374 = vld [vmem:[%s196 + $0xc0] sm:$0xff]
      %v375 = vld [vmem:[%s196 + $0xc8] sm:$0xff]
      %v376 = vld [vmem:[%s196 + $0xd0] sm:$0xff]
      %v377 = vld [vmem:[%s196 + $0xd8] sm:$0xff]
      %v378 = vld [vmem:[%s196 + $0xe0] sm:$0xff]
      %v379 = vld [vmem:[%s196 + $0xe8] sm:$0xff]
      %v380 = vld [vmem:[%s196 + $0xf0] sm:$0xff]
      %v381 = vld [vmem:[%s196 + $0xf8] sm:$0xff]
      %v382 = vld [vmem:[%s196 + $0x100] sm:$0xff]
      %v383 = vld [vmem:[%s196 + $0x108] sm:$0xff]
      %v384 = vld [vmem:[%s196 + $0x110] sm:$0xff]
      %v385 = vld [vmem:[%s196 + $0x118] sm:$0xff]
      %v386 = vld [vmem:[%s196 + $0x120] sm:$0xff]
      %v387 = vld [vmem:[%s196 + $0x128] sm:$0xff]
      %v388 = vld [vmem:[%s196 + $0x130] sm:$0xff]
      %v389 = vld [vmem:[%s196 + $0x138] sm:$0xff]
      %v390 = vld [vmem:[%s196 + $0x140] sm:$0xff]
      %v391 = vld [vmem:[%s196 + $0x148] sm:$0xff]
      %v392 = vld [vmem:[%s196 + $0x150] sm:$0xff]
      %v393 = vld [vmem:[%s196 + $0x158] sm:$0xff]
      %v394 = vld [vmem:[%s196 + $0x160] sm:$0xff]
      %v395 = vld [vmem:[%s196 + $0x168] sm:$0xff]
      %v396 = vld [vmem:[%s196 + $0x170] sm:$0xff]
      %v397 = vld [vmem:[%s196 + $0x178] sm:$0xff]
      %v398 = vld [vmem:[%s196 + $0x180] sm:$0xff]
      %v399 = vld [vmem:[%s196 + $0x188] sm:$0xff]
      %v400 = vld [vmem:[%s196 + $0x190] sm:$0xff]
      %v401 = vld [vmem:[%s196 + $0x198] sm:$0xff]
      %v402 = vld [vmem:[%s196 + $0x1a0] sm:$0xff]
      %v403 = vld [vmem:[%s196 + $0x1a8] sm:$0xff]
      %v404 = vld [vmem:[%s196 + $0x1b0] sm:$0xff]
      %v405 = vld [vmem:[%s196 + $0x1b8] sm:$0xff]
      %v406 = vld [vmem:[%s196 + $0x1c0] sm:$0xff]
      %v407 = vld [vmem:[%s196 + $0x1c8] sm:$0xff]
      %v408 = vld [vmem:[%s196 + $0x1d0] sm:$0xff]
      %v409 = vld [vmem:[%s196 + $0x1d8] sm:$0xff]
      %v410 = vld [vmem:[%s196 + $0x1e0] sm:$0xff]
      %v411 = vld [vmem:[%s196 + $0x1e8] sm:$0xff]
      %v412 = vld [vmem:[%s196 + $0x1f0] sm:$0xff]
      %v413 = vld [vmem:[%s196 + $0x1f8] sm:$0xff]
      %v478 = vunpack.c.l.b16 %v350
      %v479 = vunpack.c.h.b16 %v350
      %v480 = vunpack.c.l.b16 %v351
      %v481 = vunpack.c.h.b16 %v351
      %v482 = vunpack.c.l.b16 %v352
      %v483 = vunpack.c.h.b16 %v352
      %v484 = vunpack.c.l.b16 %v353
      %v485 = vunpack.c.h.b16 %v353
      %v486 = vunpack.c.l.b16 %v354
      %v487 = vunpack.c.h.b16 %v354
      %v488 = vunpack.c.l.b16 %v355
      %v489 = vunpack.c.h.b16 %v355
      %v490 = vunpack.c.l.b16 %v356
      %v491 = vunpack.c.h.b16 %v356
      %v492 = vunpack.c.l.b16 %v357
      %v493 = vunpack.c.h.b16 %v357
      %v494 = vunpack.c.l.b16 %v358
      %v495 = vunpack.c.h.b16 %v358
      %v496 = vunpack.c.l.b16 %v359
      %v497 = vunpack.c.h.b16 %v359
      %v498 = vunpack.c.l.b16 %v360
      %v499 = vunpack.c.h.b16 %v360
      %v500 = vunpack.c.l.b16 %v361
      %v501 = vunpack.c.h.b16 %v361
      %v502 = vunpack.c.l.b16 %v362
      %v503 = vunpack.c.h.b16 %v362
      %v504 = vunpack.c.l.b16 %v363
      %v505 = vunpack.c.h.b16 %v363
      %v506 = vunpack.c.l.b16 %v364
      %v507 = vunpack.c.h.b16 %v364
      %v508 = vunpack.c.l.b16 %v365
      %v509 = vunpack.c.h.b16 %v365
      %v510 = vunpack.c.l.b16 %v366
      %v511 = vunpack.c.h.b16 %v366
      %v512 = vunpack.c.l.b16 %v367
      %v513 = vunpack.c.h.b16 %v367
      %v514 = vunpack.c.l.b16 %v368
      %v515 = vunpack.c.h.b16 %v368
      %v516 = vunpack.c.l.b16 %v369
      %v517 = vunpack.c.h.b16 %v369
      %v518 = vunpack.c.l.b16 %v370
      %v519 = vunpack.c.h.b16 %v370
      %v520 = vunpack.c.l.b16 %v371
      %v521 = vunpack.c.h.b16 %v371
      %v522 = vunpack.c.l.b16 %v372
      %v523 = vunpack.c.h.b16 %v372
      %v524 = vunpack.c.l.b16 %v373
      %v525 = vunpack.c.h.b16 %v373
      %v526 = vunpack.c.l.b16 %v374
      %v527 = vunpack.c.h.b16 %v374
      %v528 = vunpack.c.l.b16 %v375
      %v529 = vunpack.c.h.b16 %v375
      %v530 = vunpack.c.l.b16 %v376
      %v531 = vunpack.c.h.b16 %v376
      %v532 = vunpack.c.l.b16 %v377
      %v533 = vunpack.c.h.b16 %v377
      %v534 = vunpack.c.l.b16 %v378
      %v535 = vunpack.c.h.b16 %v378
      %v536 = vunpack.c.l.b16 %v379
      %v537 = vunpack.c.h.b16 %v379
      %v538 = vunpack.c.l.b16 %v380
      %v539 = vunpack.c.h.b16 %v380
      %v540 = vunpack.c.l.b16 %v381
      %v541 = vunpack.c.h.b16 %v381
      %v542 = vunpack.c.l.b16 %v382
      %v543 = vunpack.c.h.b16 %v382
      %v544 = vunpack.c.l.b16 %v383
      %v545 = vunpack.c.h.b16 %v383
      %v546 = vunpack.c.l.b16 %v384
      %v547 = vunpack.c.h.b16 %v384
      %v548 = vunpack.c.l.b16 %v385
      %v549 = vunpack.c.h.b16 %v385
      %v550 = vunpack.c.l.b16 %v386
      %v551 = vunpack.c.h.b16 %v386
      %v552 = vunpack.c.l.b16 %v387
      %v553 = vunpack.c.h.b16 %v387
      %v554 = vunpack.c.l.b16 %v388
      %v555 = vunpack.c.h.b16 %v388
      %v556 = vunpack.c.l.b16 %v389
      %v557 = vunpack.c.h.b16 %v389
      %v558 = vunpack.c.l.b16 %v390
      %v559 = vunpack.c.h.b16 %v390
      %v560 = vunpack.c.l.b16 %v391
      %v561 = vunpack.c.h.b16 %v391
      %v562 = vunpack.c.l.b16 %v392
      %v563 = vunpack.c.h.b16 %v392
      %v564 = vunpack.c.l.b16 %v393
      %v565 = vunpack.c.h.b16 %v393
      %v566 = vunpack.c.l.b16 %v394
      %v567 = vunpack.c.h.b16 %v394
      %v568 = vunpack.c.l.b16 %v395
      %v569 = vunpack.c.h.b16 %v395
      %v570 = vunpack.c.l.b16 %v396
      %v571 = vunpack.c.h.b16 %v396
      %v572 = vunpack.c.l.b16 %v397
      %v573 = vunpack.c.h.b16 %v397
      %v574 = vunpack.c.l.b16 %v398
      %v575 = vunpack.c.h.b16 %v398
      %v576 = vunpack.c.l.b16 %v399
      %v577 = vunpack.c.h.b16 %v399
      %v578 = vunpack.c.l.b16 %v400
      %v579 = vunpack.c.h.b16 %v400
      %v580 = vunpack.c.l.b16 %v401
      %v581 = vunpack.c.h.b16 %v401
      %v582 = vunpack.c.l.b16 %v402
      %v583 = vunpack.c.h.b16 %v402
      %v584 = vunpack.c.l.b16 %v403
      %v585 = vunpack.c.h.b16 %v403
      %v586 = vunpack.c.l.b16 %v404
      %v587 = vunpack.c.h.b16 %v404
      %v588 = vunpack.c.l.b16 %v405
      %v589 = vunpack.c.h.b16 %v405
      %v590 = vunpack.c.l.b16 %v406
      %v591 = vunpack.c.h.b16 %v406
      %v592 = vunpack.c.l.b16 %v407
      %v593 = vunpack.c.h.b16 %v407
      %v594 = vunpack.c.l.b16 %v408
      %v595 = vunpack.c.h.b16 %v408
      %v596 = vunpack.c.l.b16 %v409
      %v597 = vunpack.c.h.b16 %v409
      %v598 = vunpack.c.l.b16 %v410
      %v599 = vunpack.c.h.b16 %v410
      %v600 = vunpack.c.l.b16 %v411
      %v601 = vunpack.c.h.b16 %v411
      %v602 = vunpack.c.l.b16 %v412
      %v603 = vunpack.c.h.b16 %v412
      %v604 = vunpack.c.l.b16 %v413
      %v605 = vunpack.c.h.b16 %v413
      %v606 = vpack.c.b16 %v482, %v478
      %v607 = vpack.c.b16 %v483, %v479
      %v608 = vpack.c.b16 %v484, %v480
      %v609 = vpack.c.b16 %v485, %v481
      %v610 = vpack.c.b16 %v490, %v486
      %v611 = vpack.c.b16 %v491, %v487
      %v612 = vpack.c.b16 %v492, %v488
      %v613 = vpack.c.b16 %v493, %v489
      %v614 = vpack.c.b16 %v498, %v494
      %v615 = vpack.c.b16 %v499, %v495
      %v616 = vpack.c.b16 %v500, %v496
      %v617 = vpack.c.b16 %v501, %v497
      %v618 = vpack.c.b16 %v506, %v502
      %v619 = vpack.c.b16 %v507, %v503
      %v620 = vpack.c.b16 %v508, %v504
      %v621 = vpack.c.b16 %v509, %v505
      %v622 = vpack.c.b16 %v514, %v510
      %v623 = vpack.c.b16 %v515, %v511
      %v624 = vpack.c.b16 %v516, %v512
      %v625 = vpack.c.b16 %v517, %v513
      %v626 = vpack.c.b16 %v522, %v518
      %v627 = vpack.c.b16 %v523, %v519
      %v628 = vpack.c.b16 %v524, %v520
      %v629 = vpack.c.b16 %v525, %v521
      %v630 = vpack.c.b16 %v530, %v526
      %v631 = vpack.c.b16 %v531, %v527
      %v632 = vpack.c.b16 %v532, %v528
      %v633 = vpack.c.b16 %v533, %v529
      %v634 = vpack.c.b16 %v538, %v534
      %v635 = vpack.c.b16 %v539, %v535
      %v636 = vpack.c.b16 %v540, %v536
      %v637 = vpack.c.b16 %v541, %v537
      %v638 = vpack.c.b16 %v546, %v542
      %v639 = vpack.c.b16 %v547, %v543
      %v640 = vpack.c.b16 %v548, %v544
      %v641 = vpack.c.b16 %v549, %v545
      %v642 = vpack.c.b16 %v554, %v550
      %v643 = vpack.c.b16 %v555, %v551
      %v644 = vpack.c.b16 %v556, %v552
      %v645 = vpack.c.b16 %v557, %v553
      %v646 = vpack.c.b16 %v562, %v558
      %v647 = vpack.c.b16 %v563, %v559
      %v648 = vpack.c.b16 %v564, %v560
      %v649 = vpack.c.b16 %v565, %v561
      %v650 = vpack.c.b16 %v570, %v566
      %v651 = vpack.c.b16 %v571, %v567
      %v652 = vpack.c.b16 %v572, %v568
      %v653 = vpack.c.b16 %v573, %v569
      %v654 = vpack.c.b16 %v578, %v574
      %v655 = vpack.c.b16 %v579, %v575
      %v656 = vpack.c.b16 %v580, %v576
      %v657 = vpack.c.b16 %v581, %v577
      %v658 = vpack.c.b16 %v586, %v582
      %v659 = vpack.c.b16 %v587, %v583
      %v660 = vpack.c.b16 %v588, %v584
      %v661 = vpack.c.b16 %v589, %v585
      %v662 = vpack.c.b16 %v594, %v590
      %v663 = vpack.c.b16 %v595, %v591
      %v664 = vpack.c.b16 %v596, %v592
      %v665 = vpack.c.b16 %v597, %v593
      %v666 = vpack.c.b16 %v602, %v598
      %v667 = vpack.c.b16 %v603, %v599
      %v668 = vpack.c.b16 %v604, %v600
      %v669 = vpack.c.b16 %v605, %v601
      %v798 = vunpack.c.l.b16 %v254
      %v799 = vunpack.c.l.b16 %v255
      %v800 = vunpack.c.l.b16 %v256
      %v801 = vunpack.c.l.b16 %v257
      %v802 = vunpack.c.l.b16 %v258
      %v803 = vunpack.c.l.b16 %v259
      %v804 = vunpack.c.l.b16 %v260
      %v805 = vunpack.c.l.b16 %v261
      %v806 = vunpack.c.l.b16 %v262
      %v807 = vunpack.c.l.b16 %v263
      %v808 = vunpack.c.l.b16 %v264
      %v809 = vunpack.c.l.b16 %v265
      %v810 = vunpack.c.l.b16 %v266
      %v811 = vunpack.c.l.b16 %v267
      %v812 = vunpack.c.l.b16 %v268
      %v813 = vunpack.c.l.b16 %v269
      %v814 = vunpack.c.l.b16 %v270
      %v815 = vunpack.c.l.b16 %v271
      %v816 = vunpack.c.l.b16 %v272
      %v817 = vunpack.c.l.b16 %v273
      %v818 = vunpack.c.l.b16 %v274
      %v819 = vunpack.c.l.b16 %v275
      %v820 = vunpack.c.l.b16 %v276
      %v821 = vunpack.c.l.b16 %v277
      %v822 = vunpack.c.l.b16 %v278
      %v823 = vunpack.c.l.b16 %v279
      %v824 = vunpack.c.l.b16 %v280
      %v825 = vunpack.c.l.b16 %v281
      %v826 = vunpack.c.l.b16 %v282
      %v827 = vunpack.c.l.b16 %v283
      %v828 = vunpack.c.l.b16 %v284
      %v829 = vunpack.c.l.b16 %v285
      %v830 = vunpack.c.l.b16 %v286
      %v831 = vunpack.c.l.b16 %v287
      %v832 = vunpack.c.l.b16 %v288
      %v833 = vunpack.c.l.b16 %v289
      %v834 = vunpack.c.l.b16 %v290
      %v835 = vunpack.c.l.b16 %v291
      %v836 = vunpack.c.l.b16 %v292
      %v837 = vunpack.c.l.b16 %v293
      %v838 = vunpack.c.l.b16 %v294
      %v839 = vunpack.c.l.b16 %v295
      %v840 = vunpack.c.l.b16 %v296
      %v841 = vunpack.c.l.b16 %v297
      %v842 = vunpack.c.l.b16 %v298
      %v843 = vunpack.c.l.b16 %v299
      %v844 = vunpack.c.l.b16 %v300
      %v845 = vunpack.c.l.b16 %v301
      %v846 = vunpack.c.l.b16 %v302
      %v847 = vunpack.c.l.b16 %v303
      %v848 = vunpack.c.l.b16 %v304
      %v849 = vunpack.c.l.b16 %v305
      %v850 = vunpack.c.l.b16 %v306
      %v851 = vunpack.c.l.b16 %v307
      %v852 = vunpack.c.l.b16 %v308
      %v853 = vunpack.c.l.b16 %v309
      %v854 = vunpack.c.l.b16 %v310
      %v855 = vunpack.c.l.b16 %v311
      %v856 = vunpack.c.l.b16 %v312
      %v857 = vunpack.c.l.b16 %v313
      %v858 = vunpack.c.l.b16 %v314
      %v859 = vunpack.c.l.b16 %v315
      %v860 = vunpack.c.l.b16 %v316
      %v861 = vunpack.c.l.b16 %v317
      %v862 = vpack.c.b16 %v799, %v798
      %v863 = vpack.c.b16 %v801, %v800
      %v864 = vpack.c.b16 %v803, %v802
      %v865 = vpack.c.b16 %v805, %v804
      %v866 = vpack.c.b16 %v807, %v806
      %v867 = vpack.c.b16 %v809, %v808
      %v868 = vpack.c.b16 %v811, %v810
      %v869 = vpack.c.b16 %v813, %v812
      %v870 = vpack.c.b16 %v815, %v814
      %v871 = vpack.c.b16 %v817, %v816
      %v872 = vpack.c.b16 %v819, %v818
      %v873 = vpack.c.b16 %v821, %v820
      %v874 = vpack.c.b16 %v823, %v822
      %v875 = vpack.c.b16 %v825, %v824
      %v876 = vpack.c.b16 %v827, %v826
      %v877 = vpack.c.b16 %v829, %v828
      %v878 = vpack.c.b16 %v831, %v830
      %v879 = vpack.c.b16 %v833, %v832
      %v880 = vpack.c.b16 %v835, %v834
      %v881 = vpack.c.b16 %v837, %v836
      %v882 = vpack.c.b16 %v839, %v838
      %v883 = vpack.c.b16 %v841, %v840
      %v884 = vpack.c.b16 %v843, %v842
      %v885 = vpack.c.b16 %v845, %v844
      %v886 = vpack.c.b16 %v847, %v846
      %v887 = vpack.c.b16 %v849, %v848
      %v888 = vpack.c.b16 %v851, %v850
      %v889 = vpack.c.b16 %v853, %v852
      %v890 = vpack.c.b16 %v855, %v854
      %v891 = vpack.c.b16 %v857, %v856
      %v892 = vpack.c.b16 %v859, %v858
      %v893 = vpack.c.b16 %v861, %v860
      %926 = vmatprep.subr.bf16.mxu0 0
      %927 = vmatpush1.bf16.msra.mxu0 %v862
      %928 = vmatprep.subr.bf16.mxu0 0
      %929 = vmatpush1.bf16.msra.mxu0 %v863
      %930 = vmatprep.subr.bf16.mxu0 0
      %931 = vmatpush1.bf16.msra.mxu0 %v864
      %932 = vmatprep.subr.bf16.mxu0 0
      %933 = vmatpush1.bf16.msra.mxu0 %v865
      %934 = vmatprep.subr.bf16.mxu0 0
      %935 = vmatpush1.bf16.msra.mxu0 %v866
      %936 = vmatprep.subr.bf16.mxu0 0
      %937 = vmatpush1.bf16.msra.mxu0 %v867
      %938 = vmatprep.subr.bf16.mxu0 0
      %939 = vmatpush1.bf16.msra.mxu0 %v868
      %940 = vmatprep.subr.bf16.mxu0 0
      %941 = vmatpush1.bf16.msra.mxu0 %v869
      %942 = vmatprep.subr.bf16.mxu0 0
      %943 = vmatpush1.bf16.msra.mxu0 %v870
      %944 = vmatprep.subr.bf16.mxu0 0
      %945 = vmatpush1.bf16.msra.mxu0 %v871
      %946 = vmatprep.subr.bf16.mxu0 0
      %947 = vmatpush1.bf16.msra.mxu0 %v872
      %948 = vmatprep.subr.bf16.mxu0 0
      %949 = vmatpush1.bf16.msra.mxu0 %v873
      %950 = vmatprep.subr.bf16.mxu0 0
      %951 = vmatpush1.bf16.msra.mxu0 %v874
      %952 = vmatprep.subr.bf16.mxu0 0
      %953 = vmatpush1.bf16.msra.mxu0 %v875
      %954 = vmatprep.subr.bf16.mxu0 0
      %955 = vmatpush1.bf16.msra.mxu0 %v876
      %956 = vmatprep.subr.bf16.mxu0 0
      %957 = vmatpush1.bf16.msra.mxu0 %v877
      %958 = vmatprep.mubr.bf16.mxu0 %v607
      %959 = vmatmul.mubr.bf16.gmra.mrb[0].mxu0 %v606
      %v960 = vpop.f32.mrb[0].mxu0
      %v961 = vadd.f32 0.0, %v960
      %v962 = vpop.f32.mrb[0].mxu0
      %v963 = vpop.f32.mrb[0].mxu0
      %v964 = vadd.f32 0.0, %v963
      %v965 = vpop.f32.mrb[0].mxu0
      %966 = vmatprep.mubr.bf16.mxu0 %v611
      %967 = vmatmul.mubr.bf16.gmra.mrb[0].mxu0 %v610
      %v968 = vpop.f32.mrb[0].mxu0
      %v969 = vadd.f32 0.0, %v968
      %v970 = vpop.f32.mrb[0].mxu0
      %v971 = vpop.f32.mrb[0].mxu0
      %v972 = vadd.f32 0.0, %v971
      %v973 = vpop.f32.mrb[0].mxu0
      %974 = vmatprep.mubr.bf16.mxu0 %v615
      %975 = vmatmul.mubr.bf16.gmra.mrb[0].mxu0 %v614
      %v976 = vpop.f32.mrb[0].mxu0
      %v977 = vadd.f32 0.0, %v976
      %v978 = vpop.f32.mrb[0].mxu0
      %v979 = vpop.f32.mrb[0].mxu0
      %v980 = vadd.f32 0.0, %v979
      %v981 = vpop.f32.mrb[0].mxu0
      %982 = vmatprep.mubr.bf16.mxu0 %v619
      %983 = vmatmul.mubr.bf16.gmra.mrb[0].mxu0 %v618
      %v984 = vpop.f32.mrb[0].mxu0
      %v985 = vadd.f32 0.0, %v984
      %v986 = vpop.f32.mrb[0].mxu0
      %v987 = vpop.f32.mrb[0].mxu0
      %v988 = vadd.f32 0.0, %v987
      %v989 = vpop.f32.mrb[0].mxu0
      %990 = vmatprep.mubr.bf16.mxu0 %v623
      %991 = vmatmul.mubr.bf16.gmra.mrb[0].mxu0 %v622
      %v992 = vpop.f32.mrb[0].mxu0
      %v993 = vadd.f32 0.0, %v992
      %v994 = vpop.f32.mrb[0].mxu0
      %v995 = vpop.f32.mrb[0].mxu0
      %v996 = vadd.f32 0.0, %v995
      %v997 = vpop.f32.mrb[0].mxu0
      %998 = vmatprep.mubr.bf16.mxu0 %v627
      %999 = vmatmul.mubr.bf16.gmra.mrb[0].mxu0 %v626
      %v1000 = vpop.f32.mrb[0].mxu0
      %v1001 = vadd.f32 0.0, %v1000
      %v1002 = vpop.f32.mrb[0].mxu0
      %v1003 = vpop.f32.mrb[0].mxu0
      %v1004 = vadd.f32 0.0, %v1003
      %v1005 = vpop.f32.mrb[0].mxu0
      %1006 = vmatprep.mubr.bf16.mxu0 %v631
      %1007 = vmatmul.mubr.bf16.gmra.mrb[0].mxu0 %v630
      %v1008 = vpop.f32.mrb[0].mxu0
      %v1009 = vadd.f32 0.0, %v1008
      %v1010 = vpop.f32.mrb[0].mxu0
      %v1011 = vpop.f32.mrb[0].mxu0
      %v1012 = vadd.f32 0.0, %v1011
      %v1013 = vpop.f32.mrb[0].mxu0
      %1014 = vmatprep.mubr.bf16.mxu0 %v635
      %1015 = vmatmul.mubr.bf16.gmra.mrb[0].mxu0 %v634
      %v1016 = vpop.f32.mrb[0].mxu0
      %v1017 = vadd.f32 0.0, %v1016
      %v1018 = vpop.f32.mrb[0].mxu0
      %v1019 = vpop.f32.mrb[0].mxu0
      %v1020 = vadd.f32 0.0, %v1019
      %v1021 = vpop.f32.mrb[0].mxu0
      %1022 = vmatprep.mubr.bf16.mxu0 %v639
      %1023 = vmatmul.mubr.bf16.gmra.mrb[0].mxu0 %v638
      %v1024 = vpop.f32.mrb[0].mxu0
      %v1025 = vadd.f32 0.0, %v1024
      %v1026 = vpop.f32.mrb[0].mxu0
      %v1027 = vpop.f32.mrb[0].mxu0
      %v1028 = vadd.f32 0.0, %v1027
      %v1029 = vpop.f32.mrb[0].mxu0
      %1030 = vmatprep.mubr.bf16.mxu0 %v643
      %1031 = vmatmul.mubr.bf16.gmra.mrb[0].mxu0 %v642
      %v1032 = vpop.f32.mrb[0].mxu0
      %v1033 = vadd.f32 0.0, %v1032
      %v1034 = vpop.f32.mrb[0].mxu0
      %v1035 = vpop.f32.mrb[0].mxu0
      %v1036 = vadd.f32 0.0, %v1035
      %v1037 = vpop.f32.mrb[0].mxu0
      %1038 = vmatprep.mubr.bf16.mxu0 %v647
      %1039 = vmatmul.mubr.bf16.gmra.mrb[0].mxu0 %v646
      %v1040 = vpop.f32.mrb[0].mxu0
      %v1041 = vadd.f32 0.0, %v1040
      %v1042 = vpop.f32.mrb[0].mxu0
      %v1043 = vpop.f32.mrb[0].mxu0
      %v1044 = vadd.f32 0.0, %v1043
      %v1045 = vpop.f32.mrb[0].mxu0
      %1046 = vmatprep.mubr.bf16.mxu0 %v651
      %1047 = vmatmul.mubr.bf16.gmra.mrb[0].mxu0 %v650
      %v1048 = vpop.f32.mrb[0].mxu0
      %v1049 = vadd.f32 0.0, %v1048
      %v1050 = vpop.f32.mrb[0].mxu0
      %v1051 = vpop.f32.mrb[0].mxu0
      %v1052 = vadd.f32 0.0, %v1051
      %v1053 = vpop.f32.mrb[0].mxu0
      %1054 = vmatprep.mubr.bf16.mxu0 %v655
      %1055 = vmatmul.mubr.bf16.gmra.mrb[0].mxu0 %v654
      %v1056 = vpop.f32.mrb[0].mxu0
      %v1057 = vadd.f32 0.0, %v1056
      %v1058 = vpop.f32.mrb[0].mxu0
      %v1059 = vpop.f32.mrb[0].mxu0
      %v1060 = vadd.f32 0.0, %v1059
      %v1061 = vpop.f32.mrb[0].mxu0
      %1062 = vmatprep.mubr.bf16.mxu0 %v659
      %1063 = vmatmul.mubr.bf16.gmra.mrb[0].mxu0 %v658
      %v1064 = vpop.f32.mrb[0].mxu0
      %v1065 = vadd.f32 0.0, %v1064
      %v1066 = vpop.f32.mrb[0].mxu0
      %v1067 = vpop.f32.mrb[0].mxu0
      %v1068 = vadd.f32 0.0, %v1067
      %v1069 = vpop.f32.mrb[0].mxu0
      %1070 = vmatprep.mubr.bf16.mxu0 %v663
      %1071 = vmatmul.mubr.bf16.gmra.mrb[0].mxu0 %v662
      %v1072 = vpop.f32.mrb[0].mxu0
      %v1073 = vadd.f32 0.0, %v1072
      %v1074 = vpop.f32.mrb[0].mxu0
      %v1075 = vpop.f32.mrb[0].mxu0
      %v1076 = vadd.f32 0.0, %v1075
      %v1077 = vpop.f32.mrb[0].mxu0
      %1078 = vmatprep.mubr.bf16.mxu0 %v667
      %1079 = vmatmul.mubr.bf16.gmra.mrb[0].mxu0 %v666
      %v1080 = vpop.f32.mrb[0].mxu0
      %v1081 = vadd.f32 0.0, %v1080
      %v1082 = vpop.f32.mrb[0].mxu0
      %v1083 = vpop.f32.mrb[0].mxu0
      %v1084 = vadd.f32 0.0, %v1083
      %v1085 = vpop.f32.mrb[0].mxu0
      %1086 = vdwg.mxu0
      %1087 = vmatprep.subr.bf16.mxu0 0
      %1088 = vmatpush1.bf16.msra.mxu0 %v878
      %1089 = vmatprep.subr.bf16.mxu0 0
      %1090 = vmatpush1.bf16.msra.mxu0 %v879
      %1091 = vmatprep.subr.bf16.mxu0 0
      %1092 = vmatpush1.bf16.msra.mxu0 %v880
      %1093 = vmatprep.subr.bf16.mxu0 0
      %1094 = vmatpush1.bf16.msra.mxu0 %v881
      %1095 = vmatprep.subr.bf16.mxu0 0
      %1096 = vmatpush1.bf16.msra.mxu0 %v882
      %1097 = vmatprep.subr.bf16.mxu0 0
      %1098 = vmatpush1.bf16.msra.mxu0 %v883
      %1099 = vmatprep.subr.bf16.mxu0 0
      %1100 = vmatpush1.bf16.msra.mxu0 %v884
      %1101 = vmatprep.subr.bf16.mxu0 0
      %1102 = vmatpush1.bf16.msra.mxu0 %v885
      %1103 = vmatprep.subr.bf16.mxu0 0
      %1104 = vmatpush1.bf16.msra.mxu0 %v886
      %1105 = vmatprep.subr.bf16.mxu0 0
      %1106 = vmatpush1.bf16.msra.mxu0 %v887
      %1107 = vmatprep.subr.bf16.mxu0 0
      %1108 = vmatpush1.bf16.msra.mxu0 %v888
      %1109 = vmatprep.subr.bf16.mxu0 0
      %1110 = vmatpush1.bf16.msra.mxu0 %v889
      %1111 = vmatprep.subr.bf16.mxu0 0
      %1112 = vmatpush1.bf16.msra.mxu0 %v890
      %1113 = vmatprep.subr.bf16.mxu0 0
      %1114 = vmatpush1.bf16.msra.mxu0 %v891
      %1115 = vmatprep.subr.bf16.mxu0 0
      %1116 = vmatpush1.bf16.msra.mxu0 %v892
      %1117 = vmatprep.subr.bf16.mxu0 0
      %1118 = vmatpush1.bf16.msra.mxu0 %v893
      %1119 = vmatprep.mubr.bf16.mxu0 %v609
      %1120 = vmatmul.mubr.bf16.gmra.mrb[0].mxu0 %v608
      %v1121 = vpop.f32.mrb[0].mxu0
      %v1122 = vadd.f32 %v961, %v1121
      %v1123 = vpop.f32.mrb[0].mxu0
      %v1124 = vpop.f32.mrb[0].mxu0
      %v1125 = vadd.f32 %v964, %v1124
      %v1126 = vpop.f32.mrb[0].mxu0
      %1127 = vmatprep.mubr.bf16.mxu0 %v613
      %1128 = vmatmul.mubr.bf16.gmra.mrb[0].mxu0 %v612
      %v1129 = vpop.f32.mrb[0].mxu0
      %v1130 = vadd.f32 %v969, %v1129
      %v1131 = vpop.f32.mrb[0].mxu0
      %v1132 = vpop.f32.mrb[0].mxu0
      %v1133 = vadd.f32 %v972, %v1132
      %v1134 = vpop.f32.mrb[0].mxu0
      %1135 = vmatprep.mubr.bf16.mxu0 %v617
      %1136 = vmatmul.mubr.bf16.gmra.mrb[0].mxu0 %v616
      %v1137 = vpop.f32.mrb[0].mxu0
      %v1138 = vadd.f32 %v977, %v1137
      %v1139 = vpop.f32.mrb[0].mxu0
      %v1140 = vpop.f32.mrb[0].mxu0
      %v1141 = vadd.f32 %v980, %v1140
      %v1142 = vpop.f32.mrb[0].mxu0
      %1143 = vmatprep.mubr.bf16.mxu0 %v621
      %1144 = vmatmul.mubr.bf16.gmra.mrb[0].mxu0 %v620
      %v1145 = vpop.f32.mrb[0].mxu0
      %v1146 = vadd.f32 %v985, %v1145
      %v1147 = vpop.f32.mrb[0].mxu0
      %v1148 = vpop.f32.mrb[0].mxu0
      %v1149 = vadd.f32 %v988, %v1148
      %v1150 = vpop.f32.mrb[0].mxu0
      %1151 = vmatprep.mubr.bf16.mxu0 %v625
      %1152 = vmatmul.mubr.bf16.gmra.mrb[0].mxu0 %v624
      %v1153 = vpop.f32.mrb[0].mxu0
      %v1154 = vadd.f32 %v993, %v1153
      %v1155 = vpop.f32.mrb[0].mxu0
      %v1156 = vpop.f32.mrb[0].mxu0
      %v1157 = vadd.f32 %v996, %v1156
      %v1158 = vpop.f32.mrb[0].mxu0
      %1159 = vmatprep.mubr.bf16.mxu0 %v629
      %1160 = vmatmul.mubr.bf16.gmra.mrb[0].mxu0 %v628
      %v1161 = vpop.f32.mrb[0].mxu0
      %v1162 = vadd.f32 %v1001, %v1161
      %v1163 = vpop.f32.mrb[0].mxu0
      %v1164 = vpop.f32.mrb[0].mxu0
      %v1165 = vadd.f32 %v1004, %v1164
      %v1166 = vpop.f32.mrb[0].mxu0
      %1167 = vmatprep.mubr.bf16.mxu0 %v633
      %1168 = vmatmul.mubr.bf16.gmra.mrb[0].mxu0 %v632
      %v1169 = vpop.f32.mrb[0].mxu0
      %v1170 = vadd.f32 %v1009, %v1169
      %v1171 = vpop.f32.mrb[0].mxu0
      %v1172 = vpop.f32.mrb[0].mxu0
      %v1173 = vadd.f32 %v1012, %v1172
      %v1174 = vpop.f32.mrb[0].mxu0
      %1175 = vmatprep.mubr.bf16.mxu0 %v637
      %1176 = vmatmul.mubr.bf16.gmra.mrb[0].mxu0 %v636
      %v1177 = vpop.f32.mrb[0].mxu0
      %v1178 = vadd.f32 %v1017, %v1177
      %v1179 = vpop.f32.mrb[0].mxu0
      %v1180 = vpop.f32.mrb[0].mxu0
      %v1181 = vadd.f32 %v1020, %v1180
      %v1182 = vpop.f32.mrb[0].mxu0
      %1183 = vmatprep.mubr.bf16.mxu0 %v641
      %1184 = vmatmul.mubr.bf16.gmra.mrb[0].mxu0 %v640
      %v1185 = vpop.f32.mrb[0].mxu0
      %v1186 = vadd.f32 %v1025, %v1185
      %v1187 = vpop.f32.mrb[0].mxu0
      %v1188 = vpop.f32.mrb[0].mxu0
      %v1189 = vadd.f32 %v1028, %v1188
      %v1190 = vpop.f32.mrb[0].mxu0
      %1191 = vmatprep.mubr.bf16.mxu0 %v645
      %1192 = vmatmul.mubr.bf16.gmra.mrb[0].mxu0 %v644
      %v1193 = vpop.f32.mrb[0].mxu0
      %v1194 = vadd.f32 %v1033, %v1193
      %v1195 = vpop.f32.mrb[0].mxu0
      %v1196 = vpop.f32.mrb[0].mxu0
      %v1197 = vadd.f32 %v1036, %v1196
      %v1198 = vpop.f32.mrb[0].mxu0
      %1199 = vmatprep.mubr.bf16.mxu0 %v649
      %1200 = vmatmul.mubr.bf16.gmra.mrb[0].mxu0 %v648
      %v1201 = vpop.f32.mrb[0].mxu0
      %v1202 = vadd.f32 %v1041, %v1201
      %v1203 = vpop.f32.mrb[0].mxu0
      %v1204 = vpop.f32.mrb[0].mxu0
      %v1205 = vadd.f32 %v1044, %v1204
      %v1206 = vpop.f32.mrb[0].mxu0
      %1207 = vmatprep.mubr.bf16.mxu0 %v653
      %1208 = vmatmul.mubr.bf16.gmra.mrb[0].mxu0 %v652
      %v1209 = vpop.f32.mrb[0].mxu0
      %v1210 = vadd.f32 %v1049, %v1209
      %v1211 = vpop.f32.mrb[0].mxu0
      %v1212 = vpop.f32.mrb[0].mxu0
      %v1213 = vadd.f32 %v1052, %v1212
      %v1214 = vpop.f32.mrb[0].mxu0
      %1215 = vmatprep.mubr.bf16.mxu0 %v657
      %1216 = vmatmul.mubr.bf16.gmra.mrb[0].mxu0 %v656
      %v1217 = vpop.f32.mrb[0].mxu0
      %v1218 = vadd.f32 %v1057, %v1217
      %v1219 = vpop.f32.mrb[0].mxu0
      %v1220 = vpop.f32.mrb[0].mxu0
      %v1221 = vadd.f32 %v1060, %v1220
      %v1222 = vpop.f32.mrb[0].mxu0
      %1223 = vmatprep.mubr.bf16.mxu0 %v661
      %1224 = vmatmul.mubr.bf16.gmra.mrb[0].mxu0 %v660
      %v1225 = vpop.f32.mrb[0].mxu0
      %v1226 = vadd.f32 %v1065, %v1225
      %v1227 = vpop.f32.mrb[0].mxu0
      %v1228 = vpop.f32.mrb[0].mxu0
      %v1229 = vadd.f32 %v1068, %v1228
      %v1230 = vpop.f32.mrb[0].mxu0
      %1231 = vmatprep.mubr.bf16.mxu0 %v665
      %1232 = vmatmul.mubr.bf16.gmra.mrb[0].mxu0 %v664
      %v1233 = vpop.f32.mrb[0].mxu0
      %v1234 = vadd.f32 %v1073, %v1233
      %v1235 = vpop.f32.mrb[0].mxu0
      %v1236 = vpop.f32.mrb[0].mxu0
      %v1237 = vadd.f32 %v1076, %v1236
      %v1238 = vpop.f32.mrb[0].mxu0
      %1239 = vmatprep.mubr.bf16.mxu0 %v669
      %1240 = vmatmul.mubr.bf16.gmra.mrb[0].mxu0 %v668
      %v1241 = vpop.f32.mrb[0].mxu0
      %v1242 = vadd.f32 %v1081, %v1241
      %v1243 = vpop.f32.mrb[0].mxu0
      %v1244 = vpop.f32.mrb[0].mxu0
      %v1245 = vadd.f32 %v1084, %v1244
      %v1246 = vpop.f32.mrb[0].mxu0
      %1247 = vdwg.mxu0
      %v1248 = vadd.f32 %v318, %v1122
      %v1249 = vadd.f32 %v319, %v1125
      %v1250 = vadd.f32 %v320, %v1130
      %v1251 = vadd.f32 %v321, %v1133
      %v1252 = vadd.f32 %v322, %v1138
      %v1253 = vadd.f32 %v323, %v1141
      %v1254 = vadd.f32 %v324, %v1146
      %v1255 = vadd.f32 %v325, %v1149
      %v1256 = vadd.f32 %v326, %v1154
      %v1257 = vadd.f32 %v327, %v1157
      %v1258 = vadd.f32 %v328, %v1162
      %v1259 = vadd.f32 %v329, %v1165
      %v1260 = vadd.f32 %v330, %v1170
      %v1261 = vadd.f32 %v331, %v1173
      %v1262 = vadd.f32 %v332, %v1178
      %v1263 = vadd.f32 %v333, %v1181
      %v1264 = vadd.f32 %v334, %v1186
      %v1265 = vadd.f32 %v335, %v1189
      %v1266 = vadd.f32 %v336, %v1194
      %v1267 = vadd.f32 %v337, %v1197
      %v1268 = vadd.f32 %v338, %v1202
      %v1269 = vadd.f32 %v339, %v1205
      %v1270 = vadd.f32 %v340, %v1210
      %v1271 = vadd.f32 %v341, %v1213
      %v1272 = vadd.f32 %v342, %v1218
      %v1273 = vadd.f32 %v343, %v1221
      %v1274 = vadd.f32 %v344, %v1226
      %v1275 = vadd.f32 %v345, %v1229
      %v1276 = vadd.f32 %v346, %v1234
      %v1277 = vadd.f32 %v347, %v1237
      %v1278 = vadd.f32 %v348, %v1242
      %v1279 = vadd.f32 %v349, %v1245
      %1280 = vst [vmem:[%s203] sm:$0xff] %v1248
      %1281 = vst [vmem:[%s203 + $0x8] sm:$0xff] %v1249
      %1282 = vst [vmem:[%s203 + $0x10] sm:$0xff] %v1250
      %1283 = vst [vmem:[%s203 + $0x18] sm:$0xff] %v1251
      %1284 = vst [vmem:[%s203 + $0x20] sm:$0xff] %v1252
      %1285 = vst [vmem:[%s203 + $0x28] sm:$0xff] %v1253
      %1286 = vst [vmem:[%s203 + $0x30] sm:$0xff] %v1254
      %1287 = vst [vmem:[%s203 + $0x38] sm:$0xff] %v1255
      %1288 = vst [vmem:[%s203 + $0x40] sm:$0xff] %v1256
      %1289 = vst [vmem:[%s203 + $0x48] sm:$0xff] %v1257
      %1290 = vst [vmem:[%s203 + $0x50] sm:$0xff] %v1258
      %1291 = vst [vmem:[%s203 + $0x58] sm:$0xff] %v1259
      %1292 = vst [vmem:[%s203 + $0x60] sm:$0xff] %v1260
      %1293 = vst [vmem:[%s203 + $0x68] sm:$0xff] %v1261
      %1294 = vst [vmem:[%s203 + $0x70] sm:$0xff] %v1262
      %1295 = vst [vmem:[%s203 + $0x78] sm:$0xff] %v1263
      %1296 = vst [vmem:[%s203 + $0x80] sm:$0xff] %v1264
      %1297 = vst [vmem:[%s203 + $0x88] sm:$0xff] %v1265
      %1298 = vst [vmem:[%s203 + $0x90] sm:$0xff] %v1266
      %1299 = vst [vmem:[%s203 + $0x98] sm:$0xff] %v1267
      %1300 = vst [vmem:[%s203 + $0xa0] sm:$0xff] %v1268
      %1301 = vst [vmem:[%s203 + $0xa8] sm:$0xff] %v1269
      %1302 = vst [vmem:[%s203 + $0xb0] sm:$0xff] %v1270
      %1303 = vst [vmem:[%s203 + $0xb8] sm:$0xff] %v1271
      %1304 = vst [vmem:[%s203 + $0xc0] sm:$0xff] %v1272
      %1305 = vst [vmem:[%s203 + $0xc8] sm:$0xff] %v1273
      %1306 = vst [vmem:[%s203 + $0xd0] sm:$0xff] %v1274
      %1307 = vst [vmem:[%s203 + $0xd8] sm:$0xff] %v1275
      %1308 = vst [vmem:[%s203 + $0xe0] sm:$0xff] %v1276
      %1309 = vst [vmem:[%s203 + $0xe8] sm:$0xff] %v1277
      %1310 = vst [vmem:[%s203 + $0xf0] sm:$0xff] %v1278
      %1311 = vst [vmem:[%s203 + $0xf8] sm:$0xff] %v1279
      // Predicated region
      $region37: #{gcn_encoder_forward.7} parent=31 // pred_check
        %p1312 = pneg %p206
      $region38: #{gcn_encoder_forward.7} parent=31 // pred_check_branch
        %1314 = sbr.rel (%p1312) target = $region40
      $region39: #{gcn_encoder_forward.7} parent=31 // pred_region
        %v1315 = vld [vmem:[%s203] sm:$0xff]
        %v1316 = vld [vmem:[%s203 + $0x8] sm:$0xff]
        %v1317 = vld [vmem:[%s203 + $0x10] sm:$0xff]
        %v1318 = vld [vmem:[%s203 + $0x18] sm:$0xff]
        %v1319 = vld [vmem:[%s203 + $0x20] sm:$0xff]
        %v1320 = vld [vmem:[%s203 + $0x28] sm:$0xff]
        %v1321 = vld [vmem:[%s203 + $0x30] sm:$0xff]
        %v1322 = vld [vmem:[%s203 + $0x38] sm:$0xff]
        %v1323 = vld [vmem:[%s203 + $0x40] sm:$0xff]
        %v1324 = vld [vmem:[%s203 + $0x48] sm:$0xff]
        %v1325 = vld [vmem:[%s203 + $0x50] sm:$0xff]
        %v1326 = vld [vmem:[%s203 + $0x58] sm:$0xff]
        %v1327 = vld [vmem:[%s203 + $0x60] sm:$0xff]
        %v1328 = vld [vmem:[%s203 + $0x68] sm:$0xff]
        %v1329 = vld [vmem:[%s203 + $0x70] sm:$0xff]
        %v1330 = vld [vmem:[%s203 + $0x78] sm:$0xff]
        %v1331 = vld [vmem:[%s203 + $0x80] sm:$0xff]
        %v1332 = vld [vmem:[%s203 + $0x88] sm:$0xff]
        %v1333 = vld [vmem:[%s203 + $0x90] sm:$0xff]
        %v1334 = vld [vmem:[%s203 + $0x98] sm:$0xff]
        %v1335 = vld [vmem:[%s203 + $0xa0] sm:$0xff]
        %v1336 = vld [vmem:[%s203 + $0xa8] sm:$0xff]
        %v1337 = vld [vmem:[%s203 + $0xb0] sm:$0xff]
        %v1338 = vld [vmem:[%s203 + $0xb8] sm:$0xff]
        %v1339 = vld [vmem:[%s203 + $0xc0] sm:$0xff]
        %v1340 = vld [vmem:[%s203 + $0xc8] sm:$0xff]
        %v1341 = vld [vmem:[%s203 + $0xd0] sm:$0xff]
        %v1342 = vld [vmem:[%s203 + $0xd8] sm:$0xff]
        %v1343 = vld [vmem:[%s203 + $0xe0] sm:$0xff]
        %v1344 = vld [vmem:[%s203 + $0xe8] sm:$0xff]
        %v1345 = vld [vmem:[%s203 + $0xf0] sm:$0xff]
        %v1346 = vld [vmem:[%s203 + $0xf8] sm:$0xff]
        %v1347 = vmax.f32 %v1315, 0.0
        %v1348 = vmax.f32 %v1316, 0.0
        %v1349 = vmax.f32 %v1317, 0.0
        %v1350 = vmax.f32 %v1318, 0.0
        %v1351 = vmax.f32 %v1319, 0.0
        %v1352 = vmax.f32 %v1320, 0.0
        %v1353 = vmax.f32 %v1321, 0.0
        %v1354 = vmax.f32 %v1322, 0.0
        %v1355 = vmax.f32 %v1323, 0.0
        %v1356 = vmax.f32 %v1324, 0.0
        %v1357 = vmax.f32 %v1325, 0.0
        %v1358 = vmax.f32 %v1326, 0.0
        %v1359 = vmax.f32 %v1327, 0.0
        %v1360 = vmax.f32 %v1328, 0.0
        %v1361 = vmax.f32 %v1329, 0.0
        %v1362 = vmax.f32 %v1330, 0.0
        %v1363 = vmax.f32 %v1331, 0.0
        %v1364 = vmax.f32 %v1332, 0.0
        %v1365 = vmax.f32 %v1333, 0.0
        %v1366 = vmax.f32 %v1334, 0.0
        %v1367 = vmax.f32 %v1335, 0.0
        %v1368 = vmax.f32 %v1336, 0.0
        %v1369 = vmax.f32 %v1337, 0.0
        %v1370 = vmax.f32 %v1338, 0.0
        %v1371 = vmax.f32 %v1339, 0.0
        %v1372 = vmax.f32 %v1340, 0.0
        %v1373 = vmax.f32 %v1341, 0.0
        %v1374 = vmax.f32 %v1342, 0.0
        %v1375 = vmax.f32 %v1343, 0.0
        %v1376 = vmax.f32 %v1344, 0.0
        %v1377 = vmax.f32 %v1345, 0.0
        %v1378 = vmax.f32 %v1346, 0.0
        %1379 = vst [vmem:[%s203] sm:$0xff] %v1347
        %1380 = vst [vmem:[%s203 + $0x8] sm:$0xff] %v1348
        %1381 = vst [vmem:[%s203 + $0x10] sm:$0xff] %v1349
        %1382 = vst [vmem:[%s203 + $0x18] sm:$0xff] %v1350
        %1383 = vst [vmem:[%s203 + $0x20] sm:$0xff] %v1351
        %1384 = vst [vmem:[%s203 + $0x28] sm:$0xff] %v1352
        %1385 = vst [vmem:[%s203 + $0x30] sm:$0xff] %v1353
        %1386 = vst [vmem:[%s203 + $0x38] sm:$0xff] %v1354
        %1387 = vst [vmem:[%s203 + $0x40] sm:$0xff] %v1355
        %1388 = vst [vmem:[%s203 + $0x48] sm:$0xff] %v1356
        %1389 = vst [vmem:[%s203 + $0x50] sm:$0xff] %v1357
        %1390 = vst [vmem:[%s203 + $0x58] sm:$0xff] %v1358
        %1391 = vst [vmem:[%s203 + $0x60] sm:$0xff] %v1359
        %1392 = vst [vmem:[%s203 + $0x68] sm:$0xff] %v1360
        %1393 = vst [vmem:[%s203 + $0x70] sm:$0xff] %v1361
        %1394 = vst [vmem:[%s203 + $0x78] sm:$0xff] %v1362
        %1395 = vst [vmem:[%s203 + $0x80] sm:$0xff] %v1363
        %1396 = vst [vmem:[%s203 + $0x88] sm:$0xff] %v1364
        %1397 = vst [vmem:[%s203 + $0x90] sm:$0xff] %v1365
        %1398 = vst [vmem:[%s203 + $0x98] sm:$0xff] %v1366
        %1399 = vst [vmem:[%s203 + $0xa0] sm:$0xff] %v1367
        %1400 = vst [vmem:[%s203 + $0xa8] sm:$0xff] %v1368
        %1401 = vst [vmem:[%s203 + $0xb0] sm:$0xff] %v1369
        %1402 = vst [vmem:[%s203 + $0xb8] sm:$0xff] %v1370
        %1403 = vst [vmem:[%s203 + $0xc0] sm:$0xff] %v1371
        %1404 = vst [vmem:[%s203 + $0xc8] sm:$0xff] %v1372
        %1405 = vst [vmem:[%s203 + $0xd0] sm:$0xff] %v1373
        %1406 = vst [vmem:[%s203 + $0xd8] sm:$0xff] %v1374
        %1407 = vst [vmem:[%s203 + $0xe0] sm:$0xff] %v1375
        %1408 = vst [vmem:[%s203 + $0xe8] sm:$0xff] %v1376
        %1409 = vst [vmem:[%s203 + $0xf0] sm:$0xff] %v1377
        %1410 = vst [vmem:[%s203 + $0xf8] sm:$0xff] %v1378
      $region40: #{gcn_encoder_forward.7} parent=31 // pred_fallthru
        _
      %s1411 = smul.u32 32, %s18
      %p1412 = scmp.lt.s32.totalorder %s1411, 63
      %s1413 = scalar_select %p1412, %s1411, 63
      %s1414 = smul.addr %s1413, 8
      %s1415 = scalar_lea.vmem %s3, %s1414
      // Predicated region
      $region41: #{gcn_encoder_forward.7} parent=31 // pred_check
        %p1416 = pneg %p114
      $region42: #{gcn_encoder_forward.7} parent=31 // pred_check_branch
        %1418 = sbr.rel (%p1416) target = $region44
      $region43: #{gcn_encoder_forward.7} parent=31 // pred_region
        %s1419 = smul.u32 32, %s18
      $region44: #{gcn_encoder_forward.7} parent=31 // pred_fallthru
        _
    $region32: #{gcn_encoder_forward.7} parent=5 // pred_fallthru
      _
    %p1420 = scmp.le.s32.totalorder 2, %s9
    // Predicated region
    $region45: #{gcn_encoder_forward.7} parent=5 // pred_check
      %p1421 = pneg %p1420
    $region46: #{gcn_encoder_forward.7} parent=5 // pred_check_branch
      %1423 = sbr.rel (%p1421) target = $region48
    $region47: #{gcn_encoder_forward.7} parent=5 // pred_region
      %s1424 = ssub.s32 %s9, 2
      // Predicated region
      $region49: #{gcn_encoder_forward.7} parent=47 // pred_check
        %p1425 = pneg %p120
      $region50: #{gcn_encoder_forward.7} parent=47 // pred_check_branch
        %1427 = sbr.rel (%p1425) target = $region52
      $region51: #{gcn_encoder_forward.7} parent=47 // pred_region
        %s1428 = smul.u32 32, %s20
        %p1429 = scmp.lt.s32.totalorder %s1428, 63
        %s1430 = scalar_select %p1429, %s1428, 63
        %s1431 = smul.addr %s1430, 8
        %s1432 = scalar_lea.vmem %s3, %s1431
      $region52: #{gcn_encoder_forward.7} parent=47 // pred_fallthru
        _
    $region48: #{gcn_encoder_forward.7} parent=5 // pred_fallthru
      _
  $region6: #{gcn_encoder_forward.7} parent=0 // loop_footer
    %s13 = sadd.s32 1, %s9
  $region7: #{gcn_encoder_forward.7} parent=0 // loop_footer_branch
    %8 = sbr.rel target = $region3
  $region8: #{gcn_encoder_forward.7} parent=0 // loop_exit
    _

// kernel: gcn_encoder_forward.11
$region0: #{gcn_encoder_forward.11}
  #allocation0 [shape = 'u32[]', space=smem, size = 0x4, offset = 0x4, fixed_abs, tag = 'smem constant byte address 0x4 - core index']
  #allocation1 [shape = 'u32[144,128]{1,0:T(1,128)}', space=vmem, size = 0x12000, scoped, tag = 'internal scratch']
  %s0 = inlined_call_operand.vmem [shape: bf16[512,512], index: 0, kind: input, shape index: {}]
  %s1 = inlined_call_operand.vmem [shape: bf16[512,128], index: 1, kind: input, shape index: {}]
  %s2 = inlined_call_operand.vmem [shape: f32[1,128], index: 2, kind: input, shape index: {}]
  %s3 = inlined_call_operand.vmem [shape: f32[512,128], index: 3, kind: output, shape index: {}]
  %s4 = sld [smem:[#allocation0]]
  $region49: #{gcn_encoder_forward.11} parent=0
    _
  %s6 = ssub.s32 1, %s4
  %s7 = scalar_select 0, %s6, %s4
  loop: start=0, step=1, limit=4
  $region2: #{gcn_encoder_forward.11} parent=0 // loop_pre_header
    _
  $region3: #{gcn_encoder_forward.11} parent=0 // loop_header
    %s9 = sphi 0, %s13
    %p10 = scmp.ge.s32.totalorder %s9, 4
    %s16 = sphi 0, %s28
    %s17 = sphi 0, %s24
    %s18 = sphi 0, %s16
    %s19 = sphi 0, %s17
    %s20 = sphi 0, %s18
    %s21 = sphi 0, %s19
    %s33 = sphi 0, %s35
    %s36 = sphi 0, %s33
    %s37 = sphi 0, %s36
    %s53 = sphi 0, %s37
    %s57 = sphi 0, %s57
    %s59 = sphi 0, %s57
    %s60 = sphi 0, %s59
    %s74 = sphi 0, %s60
    %s78 = sphi 0, %s78
    %s80 = sphi 0, %s78
    %s81 = sphi 0, %s80
    %s95 = sphi 0, %s81
    %s101 = sphi 0, %s103
    %s104 = sphi 0, %s101
    %s105 = sphi 0, %s104
    %s121 = sphi 0, %s105
  $region4: #{gcn_encoder_forward.11} parent=0 // loop_header_branch
    %12 = sbr.rel (%p10) target = $region8
  $region5: #{gcn_encoder_forward.11} parent=0 // loop_body
    %s14 = ssub.s32 %s9, 1
    %s15 = ssub.s32 %s9, 2
    %s22 = sadd.s32 1, %s17
    %p23 = scmp.ge.s32.totalorder %s22, 1
    %s24 = scalar_select %p23, 0, %s22
    %s25 = sadd.s32 1, %s16
    %s26 = scalar_select %p23, %s25, %s16
    %p27 = scmp.ge.s32.totalorder %s26, 2
    %s28 = scalar_select %p27, 0, %s26
    %s29 = ssub.s32 %s16, %s28
    %s30 = ssub.s32 %s17, %s24
    %s31 = sor.u32 %s29, %s30
    %p32 = scmp.eq.s32.totalorder %s31, 0
    %s34 = sadd.s32 %s33, 1
    %s35 = scalar_select %p32, %s33, %s34
    %p38 = pneg %p32
    %p39 = scmp.eq.s32.totalorder %s9, 1
    %p40 = por %p38, %p39
    %p41 = scmp.ne.s32.totalorder %s33, %s36
    %p42 = scmp.eq.s32.totalorder %s9, 0
    %p43 = por %p41, %p42
    %p44 = scmp.ne.s32.totalorder %s33, %s36
    %p45 = scmp.eq.s32.totalorder %s14, 1
    %p46 = por %p44, %p45
    %p47 = scmp.ne.s32.totalorder %s36, %s37
    %p48 = scmp.eq.s32.totalorder %s14, 0
    %p49 = por %p47, %p48
    %p50 = scmp.ne.s32.totalorder %s36, %s37
    %p51 = scmp.eq.s32.totalorder %s15, 1
    %p52 = por %p50, %p51
    %p54 = scmp.ne.s32.totalorder %s37, %s53
    %p55 = scmp.eq.s32.totalorder %s15, 0
    %p56 = por %p54, %p55
    %s58 = sadd.s32 %s57, 1
    %p61 = scmp.eq.s32.totalorder %s9, 1
    %p62 = scmp.ne.s32.totalorder %s57, %s59
    %p63 = scmp.eq.s32.totalorder %s9, 0
    %p64 = por %p62, %p63
    %p65 = scmp.ne.s32.totalorder %s57, %s59
    %p66 = scmp.eq.s32.totalorder %s14, 1
    %p67 = por %p65, %p66
    %p68 = scmp.ne.s32.totalorder %s59, %s60
    %p69 = scmp.eq.s32.totalorder %s14, 0
    %p70 = por %p68, %p69
    %p71 = scmp.ne.s32.totalorder %s59, %s60
    %p72 = scmp.eq.s32.totalorder %s15, 1
    %p73 = por %p71, %p72
    %p75 = scmp.ne.s32.totalorder %s60, %s74
    %p76 = scmp.eq.s32.totalorder %s15, 0
    %p77 = por %p75, %p76
    %s79 = sadd.s32 %s78, 1
    %p82 = scmp.eq.s32.totalorder %s9, 1
    %p83 = scmp.ne.s32.totalorder %s78, %s80
    %p84 = scmp.eq.s32.totalorder %s9, 0
    %p85 = por %p83, %p84
    %p86 = scmp.ne.s32.totalorder %s78, %s80
    %p87 = scmp.eq.s32.totalorder %s14, 1
    %p88 = por %p86, %p87
    %p89 = scmp.ne.s32.totalorder %s80, %s81
    %p90 = scmp.eq.s32.totalorder %s14, 0
    %p91 = por %p89, %p90
    %p92 = scmp.ne.s32.totalorder %s80, %s81
    %p93 = scmp.eq.s32.totalorder %s15, 1
    %p94 = por %p92, %p93
    %p96 = scmp.ne.s32.totalorder %s81, %s95
    %p97 = scmp.eq.s32.totalorder %s15, 0
    %p98 = por %p96, %p97
    %s99 = ssub.s32 %s16, %s28
    %p100 = scmp.eq.s32.totalorder %s99, 0
    %s102 = sadd.s32 %s101, 1
    %s103 = scalar_select %p100, %s101, %s102
    %p106 = pneg %p100
    %p107 = scmp.eq.s32.totalorder %s9, 1
    %p108 = por %p106, %p107
    %p109 = scmp.ne.s32.totalorder %s101, %s104
    %p110 = scmp.eq.s32.totalorder %s9, 0
    %p111 = por %p109, %p110
    %p112 = scmp.ne.s32.totalorder %s101, %s104
    %p113 = scmp.eq.s32.totalorder %s14, 1
    %p114 = por %p112, %p113
    %p115 = scmp.ne.s32.totalorder %s104, %s105
    %p116 = scmp.eq.s32.totalorder %s14, 0
    %p117 = por %p115, %p116
    %p118 = scmp.ne.s32.totalorder %s104, %s105
    %p119 = scmp.eq.s32.totalorder %s15, 1
    %p120 = por %p118, %p119
    %p122 = scmp.ne.s32.totalorder %s105, %s121
    %p123 = scmp.eq.s32.totalorder %s15, 0
    %p124 = por %p122, %p123
    %p125 = scmp.le.s32.totalorder 1, %s9
    %p126 = scmp.lt.s32.totalorder %s9, 3
    %p127 = pnand %p125, %p126
    %p128 = pneg %p127
    // Predicated region
    $region9: #{gcn_encoder_forward.11} parent=5 // pred_check
      _
    $region10: #{gcn_encoder_forward.11} parent=5 // pred_check_branch
      %130 = sbr.rel (%p127) target = $region12
    $region11: #{gcn_encoder_forward.11} parent=5 // pred_region
      %s131 = ssub.s32 %s9, 1
      // Predicated region
      $region13: #{gcn_encoder_forward.11} parent=11 // pred_check
        %p132 = pneg %p70
      $region14: #{gcn_encoder_forward.11} parent=11 // pred_check_branch
        %134 = sbr.rel (%p132) target = $region16
      $region15: #{gcn_encoder_forward.11} parent=11 // pred_region
        _
      $region16: #{gcn_encoder_forward.11} parent=11 // pred_fallthru
        _
      // Predicated region
      $region17: #{gcn_encoder_forward.11} parent=11 // pred_check
        %p135 = pneg %p91
      $region18: #{gcn_encoder_forward.11} parent=11 // pred_check_branch
        %137 = sbr.rel (%p135) target = $region20
      $region19: #{gcn_encoder_forward.11} parent=11 // pred_region
        _
      $region20: #{gcn_encoder_forward.11} parent=11 // pred_fallthru
        _
    $region12: #{gcn_encoder_forward.11} parent=5 // pred_fallthru
      _
    %p138 = scmp.lt.s32.totalorder %s9, 2
    // Predicated region
    $region21: #{gcn_encoder_forward.11} parent=5 // pred_check
      %p139 = pneg %p138
    $region22: #{gcn_encoder_forward.11} parent=5 // pred_check_branch
      %141 = sbr.rel (%p139) target = $region24
    $region23: #{gcn_encoder_forward.11} parent=5 // pred_region
      // Predicated region
      $region25: #{gcn_encoder_forward.11} parent=23 // pred_check
        %p142 = pneg %p43
      $region26: #{gcn_encoder_forward.11} parent=23 // pred_check_branch
        %144 = sbr.rel (%p142) target = $region28
      $region27: #{gcn_encoder_forward.11} parent=23 // pred_region
        %s145 = smul.u32 32, %s16
        %s146 = smul.u32 4, %s17
        %p147 = scmp.lt.s32.totalorder %s145, 63
        %s148 = scalar_select %p147, %s145, 63
        %p149 = scmp.lt.s32.totalorder %s146, 3
        %s150 = scalar_select %p149, %s146, 3
        %s151 = smul.addr %s148, 4
        %s152 = sadd.s32 %s150, %s151
        %s153 = smul.addr %s152, 4
        %s154 = scalar_lea.vmem %s0, %s153
        %s155 = smul.u32 32, %s16
        %s156 = smul.u32 4, %s17
      $region28: #{gcn_encoder_forward.11} parent=23 // pred_fallthru
        _
    $region24: #{gcn_encoder_forward.11} parent=5 // pred_fallthru
      _
    %p157 = scmp.le.s32.totalorder 1, %s9
    %p158 = scmp.lt.s32.totalorder %s9, 3
    %p159 = pnand %p157, %p158
    %p160 = pneg %p159
    // Predicated region
    $region29: #{gcn_encoder_forward.11} parent=5 // pred_check
      _
    $region30: #{gcn_encoder_forward.11} parent=5 // pred_check_branch
      %162 = sbr.rel (%p159) target = $region32
    $region31: #{gcn_encoder_forward.11} parent=5 // pred_region
      %s163 = ssub.s32 %s9, 1
      %s164 = smul.u32 32, %s18
      %s165 = smul.u32 4, %s19
      %p166 = scmp.lt.s32.totalorder %s164, 63
      %s167 = scalar_select %p166, %s164, 63
      %p168 = scmp.lt.s32.totalorder %s165, 3
      %s169 = scalar_select %p168, %s165, 3
      %s170 = smul.addr %s167, 4
      %s171 = sadd.s32 %s169, %s170
      %s172 = smul.addr %s171, 4
      %s173 = scalar_lea.vmem %s0, %s172
      %p174 = pneg %p49
      %p175 = pneg %p46
      %p176 = pneg %p70
      %p177 = pneg %p67
      %p178 = pneg %p91
      %p179 = pneg %p88
      %p180 = pneg %p117
      %p181 = pneg %p114
      %s182 = smul.u32 32, %s18
      %p183 = scmp.lt.s32.totalorder %s182, 63
      %s184 = scalar_select %p183, %s182, 63
      %s185 = smul.addr %s184, 8
      %s186 = scalar_lea.vmem %s3, %s185
      %s187 = smul.u32 32, %s18
      %s188 = smul.u32 4, %s19
      %p189 = scmp.lt.s32.totalorder %s187, 63
      %s190 = scalar_select %p189, %s187, 63
      %p191 = scmp.lt.s32.totalorder %s188, 3
      %s192 = scalar_select %p191, %s188, 3
      %s193 = smul.addr %s190, 4
      %s194 = sadd.s32 %s192, %s193
      %s195 = smul.addr %s194, 4
      %s196 = scalar_lea.vmem %s0, %s195
      %s197 = smul.u32 32, %s18
      %s198 = smul.u32 4, %s19
      %s199 = smul.u32 32, %s18
      %p200 = scmp.lt.s32.totalorder %s199, 63
      %s201 = scalar_select %p200, %s199, 63
      %s202 = smul.addr %s201, 8
      %s203 = scalar_lea.vmem %s3, %s202
      %s204 = smul.u32 32, %s18
      %p206 = scmp.eq.s32.totalorder %s19, 0
      // Predicated region
      $region33: #{gcn_encoder_forward.11} parent=31 // pred_check
        %p207 = pneg %p206
      $region34: #{gcn_encoder_forward.11} parent=31 // pred_check_branch
        %209 = sbr.rel (%p207) target = $region36
      $region35: #{gcn_encoder_forward.11} parent=31 // pred_region
        %v210 = vld [vmem:[%s2] sm:$0x1]
        %v212 = vlaneseq
        %v213 = vshrl.u32 %v212, 7
        %v214 = vsub.s32 0, %v213
        %v215 = vrot.slane %v210, %v214
        %217 = vst [vmem:[%s203] sm:$0xff] %v215
        %218 = vst [vmem:[%s203 + $0x8] sm:$0xff] %v215
        %219 = vst [vmem:[%s203 + $0x10] sm:$0xff] %v215
        %220 = vst [vmem:[%s203 + $0x18] sm:$0xff] %v215
        %221 = vst [vmem:[%s203 + $0x20] sm:$0xff] %v215
        %222 = vst [vmem:[%s203 + $0x28] sm:$0xff] %v215
        %223 = vst [vmem:[%s203 + $0x30] sm:$0xff] %v215
        %224 = vst [vmem:[%s203 + $0x38] sm:$0xff] %v215
        %225 = vst [vmem:[%s203 + $0x40] sm:$0xff] %v215
        %226 = vst [vmem:[%s203 + $0x48] sm:$0xff] %v215
        %227 = vst [vmem:[%s203 + $0x50] sm:$0xff] %v215
        %228 = vst [vmem:[%s203 + $0x58] sm:$0xff] %v215
        %229 = vst [vmem:[%s203 + $0x60] sm:$0xff] %v215
        %230 = vst [vmem:[%s203 + $0x68] sm:$0xff] %v215
        %231 = vst [vmem:[%s203 + $0x70] sm:$0xff] %v215
        %232 = vst [vmem:[%s203 + $0x78] sm:$0xff] %v215
        %233 = vst [vmem:[%s203 + $0x80] sm:$0xff] %v215
        %234 = vst [vmem:[%s203 + $0x88] sm:$0xff] %v215
        %235 = vst [vmem:[%s203 + $0x90] sm:$0xff] %v215
        %236 = vst [vmem:[%s203 + $0x98] sm:$0xff] %v215
        %237 = vst [vmem:[%s203 + $0xa0] sm:$0xff] %v215
        %238 = vst [vmem:[%s203 + $0xa8] sm:$0xff] %v215
        %239 = vst [vmem:[%s203 + $0xb0] sm:$0xff] %v215
        %240 = vst [vmem:[%s203 + $0xb8] sm:$0xff] %v215
        %241 = vst [vmem:[%s203 + $0xc0] sm:$0xff] %v215
        %242 = vst [vmem:[%s203 + $0xc8] sm:$0xff] %v215
        %243 = vst [vmem:[%s203 + $0xd0] sm:$0xff] %v215
        %244 = vst [vmem:[%s203 + $0xd8] sm:$0xff] %v215
        %245 = vst [vmem:[%s203 + $0xe0] sm:$0xff] %v215
        %246 = vst [vmem:[%s203 + $0xe8] sm:$0xff] %v215
        %247 = vst [vmem:[%s203 + $0xf0] sm:$0xff] %v215
        %248 = vst [vmem:[%s203 + $0xf8] sm:$0xff] %v215
      $region36: #{gcn_encoder_forward.11} parent=31 // pred_fallthru
        _
      %s249 = smul.u32 %s19, 512
      %s250 = sshra.s32 %s249, 3
      %s251 = sand.u32 %s249, 7
      %s252 = smul.addr %s250, 4
      %s253 = scalar_lea.vmem %s1, %s252
      %v254 = vld [vmem:[%s253] sm:$0xf]
      %v255 = vld [vmem:[%s253 + $0x4] sm:$0xf]
      %v256 = vld [vmem:[%s253 + $0x8] sm:$0xf]
      %v257 = vld [vmem:[%s253 + $0xc] sm:$0xf]
      %v258 = vld [vmem:[%s253 + $0x10] sm:$0xf]
      %v259 = vld [vmem:[%s253 + $0x14] sm:$0xf]
      %v260 = vld [vmem:[%s253 + $0x18] sm:$0xf]
      %v261 = vld [vmem:[%s253 + $0x1c] sm:$0xf]
      %v262 = vld [vmem:[%s253 + $0x20] sm:$0xf]
      %v263 = vld [vmem:[%s253 + $0x24] sm:$0xf]
      %v264 = vld [vmem:[%s253 + $0x28] sm:$0xf]
      %v265 = vld [vmem:[%s253 + $0x2c] sm:$0xf]
      %v266 = vld [vmem:[%s253 + $0x30] sm:$0xf]
      %v267 = vld [vmem:[%s253 + $0x34] sm:$0xf]
      %v268 = vld [vmem:[%s253 + $0x38] sm:$0xf]
      %v269 = vld [vmem:[%s253 + $0x3c] sm:$0xf]
      %v270 = vld [vmem:[%s253 + $0x40] sm:$0xf]
      %v271 = vld [vmem:[%s253 + $0x44] sm:$0xf]
      %v272 = vld [vmem:[%s253 + $0x48] sm:$0xf]
      %v273 = vld [vmem:[%s253 + $0x4c] sm:$0xf]
      %v274 = vld [vmem:[%s253 + $0x50] sm:$0xf]
      %v275 = vld [vmem:[%s253 + $0x54] sm:$0xf]
      %v276 = vld [vmem:[%s253 + $0x58] sm:$0xf]
      %v277 = vld [vmem:[%s253 + $0x5c] sm:$0xf]
      %v278 = vld [vmem:[%s253 + $0x60] sm:$0xf]
      %v279 = vld [vmem:[%s253 + $0x64] sm:$0xf]
      %v280 = vld [vmem:[%s253 + $0x68] sm:$0xf]
      %v281 = vld [vmem:[%s253 + $0x6c] sm:$0xf]
      %v282 = vld [vmem:[%s253 + $0x70] sm:$0xf]
      %v283 = vld [vmem:[%s253 + $0x74] sm:$0xf]
      %v284 = vld [vmem:[%s253 + $0x78] sm:$0xf]
      %v285 = vld [vmem:[%s253 + $0x7c] sm:$0xf]
      %v286 = vld [vmem:[%s253 + $0x80] sm:$0xf]
      %v287 = vld [vmem:[%s253 + $0x84] sm:$0xf]
      %v288 = vld [vmem:[%s253 + $0x88] sm:$0xf]
      %v289 = vld [vmem:[%s253 + $0x8c] sm:$0xf]
      %v290 = vld [vmem:[%s253 + $0x90] sm:$0xf]
      %v291 = vld [vmem:[%s253 + $0x94] sm:$0xf]
      %v292 = vld [vmem:[%s253 + $0x98] sm:$0xf]
      %v293 = vld [vmem:[%s253 + $0x9c] sm:$0xf]
      %v294 = vld [vmem:[%s253 + $0xa0] sm:$0xf]
      %v295 = vld [vmem:[%s253 + $0xa4] sm:$0xf]
      %v296 = vld [vmem:[%s253 + $0xa8] sm:$0xf]
      %v297 = vld [vmem:[%s253 + $0xac] sm:$0xf]
      %v298 = vld [vmem:[%s253 + $0xb0] sm:$0xf]
      %v299 = vld [vmem:[%s253 + $0xb4] sm:$0xf]
      %v300 = vld [vmem:[%s253 + $0xb8] sm:$0xf]
      %v301 = vld [vmem:[%s253 + $0xbc] sm:$0xf]
      %v302 = vld [vmem:[%s253 + $0xc0] sm:$0xf]
      %v303 = vld [vmem:[%s253 + $0xc4] sm:$0xf]
      %v304 = vld [vmem:[%s253 + $0xc8] sm:$0xf]
      %v305 = vld [vmem:[%s253 + $0xcc] sm:$0xf]
      %v306 = vld [vmem:[%s253 + $0xd0] sm:$0xf]
      %v307 = vld [vmem:[%s253 + $0xd4] sm:$0xf]
      %v308 = vld [vmem:[%s253 + $0xd8] sm:$0xf]
      %v309 = vld [vmem:[%s253 + $0xdc] sm:$0xf]
      %v310 = vld [vmem:[%s253 + $0xe0] sm:$0xf]
      %v311 = vld [vmem:[%s253 + $0xe4] sm:$0xf]
      %v312 = vld [vmem:[%s253 + $0xe8] sm:$0xf]
      %v313 = vld [vmem:[%s253 + $0xec] sm:$0xf]
      %v314 = vld [vmem:[%s253 + $0xf0] sm:$0xf]
      %v315 = vld [vmem:[%s253 + $0xf4] sm:$0xf]
      %v316 = vld [vmem:[%s253 + $0xf8] sm:$0xf]
      %v317 = vld [vmem:[%s253 + $0xfc] sm:$0xf]
      %v318 = vld [vmem:[%s203] sm:$0xff]
      %v319 = vld [vmem:[%s203 + $0x8] sm:$0xff]
      %v320 = vld [vmem:[%s203 + $0x10] sm:$0xff]
      %v321 = vld [vmem:[%s203 + $0x18] sm:$0xff]
      %v322 = vld [vmem:[%s203 + $0x20] sm:$0xff]
      %v323 = vld [vmem:[%s203 + $0x28] sm:$0xff]
      %v324 = vld [vmem:[%s203 + $0x30] sm:$0xff]
      %v325 = vld [vmem:[%s203 + $0x38] sm:$0xff]
      %v326 = vld [vmem:[%s203 + $0x40] sm:$0xff]
      %v327 = vld [vmem:[%s203 + $0x48] sm:$0xff]
      %v328 = vld [vmem:[%s203 + $0x50] sm:$0xff]
      %v329 = vld [vmem:[%s203 + $0x58] sm:$0xff]
      %v330 = vld [vmem:[%s203 + $0x60] sm:$0xff]
      %v331 = vld [vmem:[%s203 + $0x68] sm:$0xff]
      %v332 = vld [vmem:[%s203 + $0x70] sm:$0xff]
      %v333 = vld [vmem:[%s203 + $0x78] sm:$0xff]
      %v334 = vld [vmem:[%s203 + $0x80] sm:$0xff]
      %v335 = vld [vmem:[%s203 + $0x88] sm:$0xff]
      %v336 = vld [vmem:[%s203 + $0x90] sm:$0xff]
      %v337 = vld [vmem:[%s203 + $0x98] sm:$0xff]
      %v338 = vld [vmem:[%s203 + $0xa0] sm:$0xff]
      %v339 = vld [vmem:[%s203 + $0xa8] sm:$0xff]
      %v340 = vld [vmem:[%s203 + $0xb0] sm:$0xff]
      %v341 = vld [vmem:[%s203 + $0xb8] sm:$0xff]
      %v342 = vld [vmem:[%s203 + $0xc0] sm:$0xff]
      %v343 = vld [vmem:[%s203 + $0xc8] sm:$0xff]
      %v344 = vld [vmem:[%s203 + $0xd0] sm:$0xff]
      %v345 = vld [vmem:[%s203 + $0xd8] sm:$0xff]
      %v346 = vld [vmem:[%s203 + $0xe0] sm:$0xff]
      %v347 = vld [vmem:[%s203 + $0xe8] sm:$0xff]
      %v348 = vld [vmem:[%s203 + $0xf0] sm:$0xff]
      %v349 = vld [vmem:[%s203 + $0xf8] sm:$0xff]
      %v350 = vld [vmem:[%s196] sm:$0xff]
      %v351 = vld [vmem:[%s196 + $0x8] sm:$0xff]
      %v352 = vld [vmem:[%s196 + $0x10] sm:$0xff]
      %v353 = vld [vmem:[%s196 + $0x18] sm:$0xff]
      %v354 = vld [vmem:[%s196 + $0x20] sm:$0xff]
      %v355 = vld [vmem:[%s196 + $0x28] sm:$0xff]
      %v356 = vld [vmem:[%s196 + $0x30] sm:$0xff]
      %v357 = vld [vmem:[%s196 + $0x38] sm:$0xff]
      %v358 = vld [vmem:[%s196 + $0x40] sm:$0xff]
      %v359 = vld [vmem:[%s196 + $0x48] sm:$0xff]
      %v360 = vld [vmem:[%s196 + $0x50] sm:$0xff]
      %v361 = vld [vmem:[%s196 + $0x58] sm:$0xff]
      %v362 = vld [vmem:[%s196 + $0x60] sm:$0xff]
      %v363 = vld [vmem:[%s196 + $0x68] sm:$0xff]
      %v364 = vld [vmem:[%s196 + $0x70] sm:$0xff]
      %v365 = vld [vmem:[%s196 + $0x78] sm:$0xff]
      %v366 = vld [vmem:[%s196 + $0x80] sm:$0xff]
      %v367 = vld [vmem:[%s196 + $0x88] sm:$0xff]
      %v368 = vld [vmem:[%s196 + $0x90] sm:$0xff]
      %v369 = vld [vmem:[%s196 + $0x98] sm:$0xff]
      %v370 = vld [vmem:[%s196 + $0xa0] sm:$0xff]
      %v371 = vld [vmem:[%s196 + $0xa8] sm:$0xff]
      %v372 = vld [vmem:[%s196 + $0xb0] sm:$0xff]
      %v373 = vld [vmem:[%s196 + $0xb8] sm:$0xff]
      %v374 = vld [vmem:[%s196 + $0xc0] sm:$0xff]
      %v375 = vld [vmem:[%s196 + $0xc8] sm:$0xff]
      %v376 = vld [vmem:[%s196 + $0xd0] sm:$0xff]
      %v377 = vld [vmem:[%s196 + $0xd8] sm:$0xff]
      %v378 = vld [vmem:[%s196 + $0xe0] sm:$0xff]
      %v379 = vld [vmem:[%s196 + $0xe8] sm:$0xff]
      %v380 = vld [vmem:[%s196 + $0xf0] sm:$0xff]
      %v381 = vld [vmem:[%s196 + $0xf8] sm:$0xff]
      %v382 = vld [vmem:[%s196 + $0x100] sm:$0xff]
      %v383 = vld [vmem:[%s196 + $0x108] sm:$0xff]
      %v384 = vld [vmem:[%s196 + $0x110] sm:$0xff]
      %v385 = vld [vmem:[%s196 + $0x118] sm:$0xff]
      %v386 = vld [vmem:[%s196 + $0x120] sm:$0xff]
      %v387 = vld [vmem:[%s196 + $0x128] sm:$0xff]
      %v388 = vld [vmem:[%s196 + $0x130] sm:$0xff]
      %v389 = vld [vmem:[%s196 + $0x138] sm:$0xff]
      %v390 = vld [vmem:[%s196 + $0x140] sm:$0xff]
      %v391 = vld [vmem:[%s196 + $0x148] sm:$0xff]
      %v392 = vld [vmem:[%s196 + $0x150] sm:$0xff]
      %v393 = vld [vmem:[%s196 + $0x158] sm:$0xff]
      %v394 = vld [vmem:[%s196 + $0x160] sm:$0xff]
      %v395 = vld [vmem:[%s196 + $0x168] sm:$0xff]
      %v396 = vld [vmem:[%s196 + $0x170] sm:$0xff]
      %v397 = vld [vmem:[%s196 + $0x178] sm:$0xff]
      %v398 = vld [vmem:[%s196 + $0x180] sm:$0xff]
      %v399 = vld [vmem:[%s196 + $0x188] sm:$0xff]
      %v400 = vld [vmem:[%s196 + $0x190] sm:$0xff]
      %v401 = vld [vmem:[%s196 + $0x198] sm:$0xff]
      %v402 = vld [vmem:[%s196 + $0x1a0] sm:$0xff]
      %v403 = vld [vmem:[%s196 + $0x1a8] sm:$0xff]
      %v404 = vld [vmem:[%s196 + $0x1b0] sm:$0xff]
      %v405 = vld [vmem:[%s196 + $0x1b8] sm:$0xff]
      %v406 = vld [vmem:[%s196 + $0x1c0] sm:$0xff]
      %v407 = vld [vmem:[%s196 + $0x1c8] sm:$0xff]
      %v408 = vld [vmem:[%s196 + $0x1d0] sm:$0xff]
      %v409 = vld [vmem:[%s196 + $0x1d8] sm:$0xff]
      %v410 = vld [vmem:[%s196 + $0x1e0] sm:$0xff]
      %v411 = vld [vmem:[%s196 + $0x1e8] sm:$0xff]
      %v412 = vld [vmem:[%s196 + $0x1f0] sm:$0xff]
      %v413 = vld [vmem:[%s196 + $0x1f8] sm:$0xff]
      %v478 = vunpack.c.l.b16 %v350
      %v479 = vunpack.c.h.b16 %v350
      %v480 = vunpack.c.l.b16 %v351
      %v481 = vunpack.c.h.b16 %v351
      %v482 = vunpack.c.l.b16 %v352
      %v483 = vunpack.c.h.b16 %v352
      %v484 = vunpack.c.l.b16 %v353
      %v485 = vunpack.c.h.b16 %v353
      %v486 = vunpack.c.l.b16 %v354
      %v487 = vunpack.c.h.b16 %v354
      %v488 = vunpack.c.l.b16 %v355
      %v489 = vunpack.c.h.b16 %v355
      %v490 = vunpack.c.l.b16 %v356
      %v491 = vunpack.c.h.b16 %v356
      %v492 = vunpack.c.l.b16 %v357
      %v493 = vunpack.c.h.b16 %v357
      %v494 = vunpack.c.l.b16 %v358
      %v495 = vunpack.c.h.b16 %v358
      %v496 = vunpack.c.l.b16 %v359
      %v497 = vunpack.c.h.b16 %v359
      %v498 = vunpack.c.l.b16 %v360
      %v499 = vunpack.c.h.b16 %v360
      %v500 = vunpack.c.l.b16 %v361
      %v501 = vunpack.c.h.b16 %v361
      %v502 = vunpack.c.l.b16 %v362
      %v503 = vunpack.c.h.b16 %v362
      %v504 = vunpack.c.l.b16 %v363
      %v505 = vunpack.c.h.b16 %v363
      %v506 = vunpack.c.l.b16 %v364
      %v507 = vunpack.c.h.b16 %v364
      %v508 = vunpack.c.l.b16 %v365
      %v509 = vunpack.c.h.b16 %v365
      %v510 = vunpack.c.l.b16 %v366
      %v511 = vunpack.c.h.b16 %v366
      %v512 = vunpack.c.l.b16 %v367
      %v513 = vunpack.c.h.b16 %v367
      %v514 = vunpack.c.l.b16 %v368
      %v515 = vunpack.c.h.b16 %v368
      %v516 = vunpack.c.l.b16 %v369
      %v517 = vunpack.c.h.b16 %v369
      %v518 = vunpack.c.l.b16 %v370
      %v519 = vunpack.c.h.b16 %v370
      %v520 = vunpack.c.l.b16 %v371
      %v521 = vunpack.c.h.b16 %v371
      %v522 = vunpack.c.l.b16 %v372
      %v523 = vunpack.c.h.b16 %v372
      %v524 = vunpack.c.l.b16 %v373
      %v525 = vunpack.c.h.b16 %v373
      %v526 = vunpack.c.l.b16 %v374
      %v527 = vunpack.c.h.b16 %v374
      %v528 = vunpack.c.l.b16 %v375
      %v529 = vunpack.c.h.b16 %v375
      %v530 = vunpack.c.l.b16 %v376
      %v531 = vunpack.c.h.b16 %v376
      %v532 = vunpack.c.l.b16 %v377
      %v533 = vunpack.c.h.b16 %v377
      %v534 = vunpack.c.l.b16 %v378
      %v535 = vunpack.c.h.b16 %v378
      %v536 = vunpack.c.l.b16 %v379
      %v537 = vunpack.c.h.b16 %v379
      %v538 = vunpack.c.l.b16 %v380
      %v539 = vunpack.c.h.b16 %v380
      %v540 = vunpack.c.l.b16 %v381
      %v541 = vunpack.c.h.b16 %v381
      %v542 = vunpack.c.l.b16 %v382
      %v543 = vunpack.c.h.b16 %v382
      %v544 = vunpack.c.l.b16 %v383
      %v545 = vunpack.c.h.b16 %v383
      %v546 = vunpack.c.l.b16 %v384
      %v547 = vunpack.c.h.b16 %v384
      %v548 = vunpack.c.l.b16 %v385
      %v549 = vunpack.c.h.b16 %v385
      %v550 = vunpack.c.l.b16 %v386
      %v551 = vunpack.c.h.b16 %v386
      %v552 = vunpack.c.l.b16 %v387
      %v553 = vunpack.c.h.b16 %v387
      %v554 = vunpack.c.l.b16 %v388
      %v555 = vunpack.c.h.b16 %v388
      %v556 = vunpack.c.l.b16 %v389
      %v557 = vunpack.c.h.b16 %v389
      %v558 = vunpack.c.l.b16 %v390
      %v559 = vunpack.c.h.b16 %v390
      %v560 = vunpack.c.l.b16 %v391
      %v561 = vunpack.c.h.b16 %v391
      %v562 = vunpack.c.l.b16 %v392
      %v563 = vunpack.c.h.b16 %v392
      %v564 = vunpack.c.l.b16 %v393
      %v565 = vunpack.c.h.b16 %v393
      %v566 = vunpack.c.l.b16 %v394
      %v567 = vunpack.c.h.b16 %v394
      %v568 = vunpack.c.l.b16 %v395
      %v569 = vunpack.c.h.b16 %v395
      %v570 = vunpack.c.l.b16 %v396
      %v571 = vunpack.c.h.b16 %v396
      %v572 = vunpack.c.l.b16 %v397
      %v573 = vunpack.c.h.b16 %v397
      %v574 = vunpack.c.l.b16 %v398
      %v575 = vunpack.c.h.b16 %v398
      %v576 = vunpack.c.l.b16 %v399
      %v577 = vunpack.c.h.b16 %v399
      %v578 = vunpack.c.l.b16 %v400
      %v579 = vunpack.c.h.b16 %v400
      %v580 = vunpack.c.l.b16 %v401
      %v581 = vunpack.c.h.b16 %v401
      %v582 = vunpack.c.l.b16 %v402
      %v583 = vunpack.c.h.b16 %v402
      %v584 = vunpack.c.l.b16 %v403
      %v585 = vunpack.c.h.b16 %v403
      %v586 = vunpack.c.l.b16 %v404
      %v587 = vunpack.c.h.b16 %v404
      %v588 = vunpack.c.l.b16 %v405
      %v589 = vunpack.c.h.b16 %v405
      %v590 = vunpack.c.l.b16 %v406
      %v591 = vunpack.c.h.b16 %v406
      %v592 = vunpack.c.l.b16 %v407
      %v593 = vunpack.c.h.b16 %v407
      %v594 = vunpack.c.l.b16 %v408
      %v595 = vunpack.c.h.b16 %v408
      %v596 = vunpack.c.l.b16 %v409
      %v597 = vunpack.c.h.b16 %v409
      %v598 = vunpack.c.l.b16 %v410
      %v599 = vunpack.c.h.b16 %v410
      %v600 = vunpack.c.l.b16 %v411
      %v601 = vunpack.c.h.b16 %v411
      %v602 = vunpack.c.l.b16 %v412
      %v603 = vunpack.c.h.b16 %v412
      %v604 = vunpack.c.l.b16 %v413
      %v605 = vunpack.c.h.b16 %v413
      %v606 = vpack.c.b16 %v482, %v478
      %v607 = vpack.c.b16 %v483, %v479
      %v608 = vpack.c.b16 %v484, %v480
      %v609 = vpack.c.b16 %v485, %v481
      %v610 = vpack.c.b16 %v490, %v486
      %v611 = vpack.c.b16 %v491, %v487
      %v612 = vpack.c.b16 %v492, %v488
      %v613 = vpack.c.b16 %v493, %v489
      %v614 = vpack.c.b16 %v498, %v494
      %v615 = vpack.c.b16 %v499, %v495
      %v616 = vpack.c.b16 %v500, %v496
      %v617 = vpack.c.b16 %v501, %v497
      %v618 = vpack.c.b16 %v506, %v502
      %v619 = vpack.c.b16 %v507, %v503
      %v620 = vpack.c.b16 %v508, %v504
      %v621 = vpack.c.b16 %v509, %v505
      %v622 = vpack.c.b16 %v514, %v510
      %v623 = vpack.c.b16 %v515, %v511
      %v624 = vpack.c.b16 %v516, %v512
      %v625 = vpack.c.b16 %v517, %v513
      %v626 = vpack.c.b16 %v522, %v518
      %v627 = vpack.c.b16 %v523, %v519
      %v628 = vpack.c.b16 %v524, %v520
      %v629 = vpack.c.b16 %v525, %v521
      %v630 = vpack.c.b16 %v530, %v526
      %v631 = vpack.c.b16 %v531, %v527
      %v632 = vpack.c.b16 %v532, %v528
      %v633 = vpack.c.b16 %v533, %v529
      %v634 = vpack.c.b16 %v538, %v534
      %v635 = vpack.c.b16 %v539, %v535
      %v636 = vpack.c.b16 %v540, %v536
      %v637 = vpack.c.b16 %v541, %v537
      %v638 = vpack.c.b16 %v546, %v542
      %v639 = vpack.c.b16 %v547, %v543
      %v640 = vpack.c.b16 %v548, %v544
      %v641 = vpack.c.b16 %v549, %v545
      %v642 = vpack.c.b16 %v554, %v550
      %v643 = vpack.c.b16 %v555, %v551
      %v644 = vpack.c.b16 %v556, %v552
      %v645 = vpack.c.b16 %v557, %v553
      %v646 = vpack.c.b16 %v562, %v558
      %v647 = vpack.c.b16 %v563, %v559
      %v648 = vpack.c.b16 %v564, %v560
      %v649 = vpack.c.b16 %v565, %v561
      %v650 = vpack.c.b16 %v570, %v566
      %v651 = vpack.c.b16 %v571, %v567
      %v652 = vpack.c.b16 %v572, %v568
      %v653 = vpack.c.b16 %v573, %v569
      %v654 = vpack.c.b16 %v578, %v574
      %v655 = vpack.c.b16 %v579, %v575
      %v656 = vpack.c.b16 %v580, %v576
      %v657 = vpack.c.b16 %v581, %v577
      %v658 = vpack.c.b16 %v586, %v582
      %v659 = vpack.c.b16 %v587, %v583
      %v660 = vpack.c.b16 %v588, %v584
      %v661 = vpack.c.b16 %v589, %v585
      %v662 = vpack.c.b16 %v594, %v590
      %v663 = vpack.c.b16 %v595, %v591
      %v664 = vpack.c.b16 %v596, %v592
      %v665 = vpack.c.b16 %v597, %v593
      %v666 = vpack.c.b16 %v602, %v598
      %v667 = vpack.c.b16 %v603, %v599
      %v668 = vpack.c.b16 %v604, %v600
      %v669 = vpack.c.b16 %v605, %v601
      %v798 = vunpack.c.l.b16 %v254
      %v799 = vunpack.c.l.b16 %v255
      %v800 = vunpack.c.l.b16 %v256
      %v801 = vunpack.c.l.b16 %v257
      %v802 = vunpack.c.l.b16 %v258
      %v803 = vunpack.c.l.b16 %v259
      %v804 = vunpack.c.l.b16 %v260
      %v805 = vunpack.c.l.b16 %v261
      %v806 = vunpack.c.l.b16 %v262
      %v807 = vunpack.c.l.b16 %v263
      %v808 = vunpack.c.l.b16 %v264
      %v809 = vunpack.c.l.b16 %v265
      %v810 = vunpack.c.l.b16 %v266
      %v811 = vunpack.c.l.b16 %v267
      %v812 = vunpack.c.l.b16 %v268
      %v813 = vunpack.c.l.b16 %v269
      %v814 = vunpack.c.l.b16 %v270
      %v815 = vunpack.c.l.b16 %v271
      %v816 = vunpack.c.l.b16 %v272
      %v817 = vunpack.c.l.b16 %v273
      %v818 = vunpack.c.l.b16 %v274
      %v819 = vunpack.c.l.b16 %v275
      %v820 = vunpack.c.l.b16 %v276
      %v821 = vunpack.c.l.b16 %v277
      %v822 = vunpack.c.l.b16 %v278
      %v823 = vunpack.c.l.b16 %v279
      %v824 = vunpack.c.l.b16 %v280
      %v825 = vunpack.c.l.b16 %v281
      %v826 = vunpack.c.l.b16 %v282
      %v827 = vunpack.c.l.b16 %v283
      %v828 = vunpack.c.l.b16 %v284
      %v829 = vunpack.c.l.b16 %v285
      %v830 = vunpack.c.l.b16 %v286
      %v831 = vunpack.c.l.b16 %v287
      %v832 = vunpack.c.l.b16 %v288
      %v833 = vunpack.c.l.b16 %v289
      %v834 = vunpack.c.l.b16 %v290
      %v835 = vunpack.c.l.b16 %v291
      %v836 = vunpack.c.l.b16 %v292
      %v837 = vunpack.c.l.b16 %v293
      %v838 = vunpack.c.l.b16 %v294
      %v839 = vunpack.c.l.b16 %v295
      %v840 = vunpack.c.l.b16 %v296
      %v841 = vunpack.c.l.b16 %v297
      %v842 = vunpack.c.l.b16 %v298
      %v843 = vunpack.c.l.b16 %v299
      %v844 = vunpack.c.l.b16 %v300
      %v845 = vunpack.c.l.b16 %v301
      %v846 = vunpack.c.l.b16 %v302
      %v847 = vunpack.c.l.b16 %v303
      %v848 = vunpack.c.l.b16 %v304
      %v849 = vunpack.c.l.b16 %v305
      %v850 = vunpack.c.l.b16 %v306
      %v851 = vunpack.c.l.b16 %v307
      %v852 = vunpack.c.l.b16 %v308
      %v853 = vunpack.c.l.b16 %v309
      %v854 = vunpack.c.l.b16 %v310
      %v855 = vunpack.c.l.b16 %v311
      %v856 = vunpack.c.l.b16 %v312
      %v857 = vunpack.c.l.b16 %v313
      %v858 = vunpack.c.l.b16 %v314
      %v859 = vunpack.c.l.b16 %v315
      %v860 = vunpack.c.l.b16 %v316
      %v861 = vunpack.c.l.b16 %v317
      %v862 = vpack.c.b16 %v799, %v798
      %v863 = vpack.c.b16 %v801, %v800
      %v864 = vpack.c.b16 %v803, %v802
      %v865 = vpack.c.b16 %v805, %v804
      %v866 = vpack.c.b16 %v807, %v806
      %v867 = vpack.c.b16 %v809, %v808
      %v868 = vpack.c.b16 %v811, %v810
      %v869 = vpack.c.b16 %v813, %v812
      %v870 = vpack.c.b16 %v815, %v814
      %v871 = vpack.c.b16 %v817, %v816
      %v872 = vpack.c.b16 %v819, %v818
      %v873 = vpack.c.b16 %v821, %v820
      %v874 = vpack.c.b16 %v823, %v822
      %v875 = vpack.c.b16 %v825, %v824
      %v876 = vpack.c.b16 %v827, %v826
      %v877 = vpack.c.b16 %v829, %v828
      %v878 = vpack.c.b16 %v831, %v830
      %v879 = vpack.c.b16 %v833, %v832
      %v880 = vpack.c.b16 %v835, %v834
      %v881 = vpack.c.b16 %v837, %v836
      %v882 = vpack.c.b16 %v839, %v838
      %v883 = vpack.c.b16 %v841, %v840
      %v884 = vpack.c.b16 %v843, %v842
      %v885 = vpack.c.b16 %v845, %v844
      %v886 = vpack.c.b16 %v847, %v846
      %v887 = vpack.c.b16 %v849, %v848
      %v888 = vpack.c.b16 %v851, %v850
      %v889 = vpack.c.b16 %v853, %v852
      %v890 = vpack.c.b16 %v855, %v854
      %v891 = vpack.c.b16 %v857, %v856
      %v892 = vpack.c.b16 %v859, %v858
      %v893 = vpack.c.b16 %v861, %v860
      %926 = vmatprep.subr.bf16.mxu0 0
      %927 = vmatpush1.bf16.msra.mxu0 %v862
      %928 = vmatprep.subr.bf16.mxu0 0
      %929 = vmatpush1.bf16.msra.mxu0 %v863
      %930 = vmatprep.subr.bf16.mxu0 0
      %931 = vmatpush1.bf16.msra.mxu0 %v864
      %932 = vmatprep.subr.bf16.mxu0 0
      %933 = vmatpush1.bf16.msra.mxu0 %v865
      %934 = vmatprep.subr.bf16.mxu0 0
      %935 = vmatpush1.bf16.msra.mxu0 %v866
      %936 = vmatprep.subr.bf16.mxu0 0
      %937 = vmatpush1.bf16.msra.mxu0 %v867
      %938 = vmatprep.subr.bf16.mxu0 0
      %939 = vmatpush1.bf16.msra.mxu0 %v868
      %940 = vmatprep.subr.bf16.mxu0 0
      %941 = vmatpush1.bf16.msra.mxu0 %v869
      %942 = vmatprep.subr.bf16.mxu0 0
      %943 = vmatpush1.bf16.msra.mxu0 %v870
      %944 = vmatprep.subr.bf16.mxu0 0
      %945 = vmatpush1.bf16.msra.mxu0 %v871
      %946 = vmatprep.subr.bf16.mxu0 0
      %947 = vmatpush1.bf16.msra.mxu0 %v872
      %948 = vmatprep.subr.bf16.mxu0 0
      %949 = vmatpush1.bf16.msra.mxu0 %v873
      %950 = vmatprep.subr.bf16.mxu0 0
      %951 = vmatpush1.bf16.msra.mxu0 %v874
      %952 = vmatprep.subr.bf16.mxu0 0
      %953 = vmatpush1.bf16.msra.mxu0 %v875
      %954 = vmatprep.subr.bf16.mxu0 0
      %955 = vmatpush1.bf16.msra.mxu0 %v876
      %956 = vmatprep.subr.bf16.mxu0 0
      %957 = vmatpush1.bf16.msra.mxu0 %v877
      %958 = vmatprep.mubr.bf16.mxu0 %v607
      %959 = vmatmul.mubr.bf16.gmra.mrb[0].mxu0 %v606
      %v960 = vpop.f32.mrb[0].mxu0
      %v961 = vadd.f32 0.0, %v960
      %v962 = vpop.f32.mrb[0].mxu0
      %v963 = vpop.f32.mrb[0].mxu0
      %v964 = vadd.f32 0.0, %v963
      %v965 = vpop.f32.mrb[0].mxu0
      %966 = vmatprep.mubr.bf16.mxu0 %v611
      %967 = vmatmul.mubr.bf16.gmra.mrb[0].mxu0 %v610
      %v968 = vpop.f32.mrb[0].mxu0
      %v969 = vadd.f32 0.0, %v968
      %v970 = vpop.f32.mrb[0].mxu0
      %v971 = vpop.f32.mrb[0].mxu0
      %v972 = vadd.f32 0.0, %v971
      %v973 = vpop.f32.mrb[0].mxu0
      %974 = vmatprep.mubr.bf16.mxu0 %v615
      %975 = vmatmul.mubr.bf16.gmra.mrb[0].mxu0 %v614
      %v976 = vpop.f32.mrb[0].mxu0
      %v977 = vadd.f32 0.0, %v976
      %v978 = vpop.f32.mrb[0].mxu0
      %v979 = vpop.f32.mrb[0].mxu0
      %v980 = vadd.f32 0.0, %v979
      %v981 = vpop.f32.mrb[0].mxu0
      %982 = vmatprep.mubr.bf16.mxu0 %v619
      %983 = vmatmul.mubr.bf16.gmra.mrb[0].mxu0 %v618
      %v984 = vpop.f32.mrb[0].mxu0
      %v985 = vadd.f32 0.0, %v984
      %v986 = vpop.f32.mrb[0].mxu0
      %v987 = vpop.f32.mrb[0].mxu0
      %v988 = vadd.f32 0.0, %v987
      %v989 = vpop.f32.mrb[0].mxu0
      %990 = vmatprep.mubr.bf16.mxu0 %v623
      %991 = vmatmul.mubr.bf16.gmra.mrb[0].mxu0 %v622
      %v992 = vpop.f32.mrb[0].mxu0
      %v993 = vadd.f32 0.0, %v992
      %v994 = vpop.f32.mrb[0].mxu0
      %v995 = vpop.f32.mrb[0].mxu0
      %v996 = vadd.f32 0.0, %v995
      %v997 = vpop.f32.mrb[0].mxu0
      %998 = vmatprep.mubr.bf16.mxu0 %v627
      %999 = vmatmul.mubr.bf16.gmra.mrb[0].mxu0 %v626
      %v1000 = vpop.f32.mrb[0].mxu0
      %v1001 = vadd.f32 0.0, %v1000
      %v1002 = vpop.f32.mrb[0].mxu0
      %v1003 = vpop.f32.mrb[0].mxu0
      %v1004 = vadd.f32 0.0, %v1003
      %v1005 = vpop.f32.mrb[0].mxu0
      %1006 = vmatprep.mubr.bf16.mxu0 %v631
      %1007 = vmatmul.mubr.bf16.gmra.mrb[0].mxu0 %v630
      %v1008 = vpop.f32.mrb[0].mxu0
      %v1009 = vadd.f32 0.0, %v1008
      %v1010 = vpop.f32.mrb[0].mxu0
      %v1011 = vpop.f32.mrb[0].mxu0
      %v1012 = vadd.f32 0.0, %v1011
      %v1013 = vpop.f32.mrb[0].mxu0
      %1014 = vmatprep.mubr.bf16.mxu0 %v635
      %1015 = vmatmul.mubr.bf16.gmra.mrb[0].mxu0 %v634
      %v1016 = vpop.f32.mrb[0].mxu0
      %v1017 = vadd.f32 0.0, %v1016
      %v1018 = vpop.f32.mrb[0].mxu0
      %v1019 = vpop.f32.mrb[0].mxu0
      %v1020 = vadd.f32 0.0, %v1019
      %v1021 = vpop.f32.mrb[0].mxu0
      %1022 = vmatprep.mubr.bf16.mxu0 %v639
      %1023 = vmatmul.mubr.bf16.gmra.mrb[0].mxu0 %v638
      %v1024 = vpop.f32.mrb[0].mxu0
      %v1025 = vadd.f32 0.0, %v1024
      %v1026 = vpop.f32.mrb[0].mxu0
      %v1027 = vpop.f32.mrb[0].mxu0
      %v1028 = vadd.f32 0.0, %v1027
      %v1029 = vpop.f32.mrb[0].mxu0
      %1030 = vmatprep.mubr.bf16.mxu0 %v643
      %1031 = vmatmul.mubr.bf16.gmra.mrb[0].mxu0 %v642
      %v1032 = vpop.f32.mrb[0].mxu0
      %v1033 = vadd.f32 0.0, %v1032
      %v1034 = vpop.f32.mrb[0].mxu0
      %v1035 = vpop.f32.mrb[0].mxu0
      %v1036 = vadd.f32 0.0, %v1035
      %v1037 = vpop.f32.mrb[0].mxu0
      %1038 = vmatprep.mubr.bf16.mxu0 %v647
      %1039 = vmatmul.mubr.bf16.gmra.mrb[0].mxu0 %v646
      %v1040 = vpop.f32.mrb[0].mxu0
      %v1041 = vadd.f32 0.0, %v1040
      %v1042 = vpop.f32.mrb[0].mxu0
      %v1043 = vpop.f32.mrb[0].mxu0
      %v1044 = vadd.f32 0.0, %v1043
      %v1045 = vpop.f32.mrb[0].mxu0
      %1046 = vmatprep.mubr.bf16.mxu0 %v651
      %1047 = vmatmul.mubr.bf16.gmra.mrb[0].mxu0 %v650
      %v1048 = vpop.f32.mrb[0].mxu0
      %v1049 = vadd.f32 0.0, %v1048
      %v1050 = vpop.f32.mrb[0].mxu0
      %v1051 = vpop.f32.mrb[0].mxu0
      %v1052 = vadd.f32 0.0, %v1051
      %v1053 = vpop.f32.mrb[0].mxu0
      %1054 = vmatprep.mubr.bf16.mxu0 %v655
      %1055 = vmatmul.mubr.bf16.gmra.mrb[0].mxu0 %v654
      %v1056 = vpop.f32.mrb[0].mxu0
      %v1057 = vadd.f32 0.0, %v1056
      %v1058 = vpop.f32.mrb[0].mxu0
      %v1059 = vpop.f32.mrb[0].mxu0
      %v1060 = vadd.f32 0.0, %v1059
      %v1061 = vpop.f32.mrb[0].mxu0
      %1062 = vmatprep.mubr.bf16.mxu0 %v659
      %1063 = vmatmul.mubr.bf16.gmra.mrb[0].mxu0 %v658
      %v1064 = vpop.f32.mrb[0].mxu0
      %v1065 = vadd.f32 0.0, %v1064
      %v1066 = vpop.f32.mrb[0].mxu0
      %v1067 = vpop.f32.mrb[0].mxu0
      %v1068 = vadd.f32 0.0, %v1067
      %v1069 = vpop.f32.mrb[0].mxu0
      %1070 = vmatprep.mubr.bf16.mxu0 %v663
      %1071 = vmatmul.mubr.bf16.gmra.mrb[0].mxu0 %v662
      %v1072 = vpop.f32.mrb[0].mxu0
      %v1073 = vadd.f32 0.0, %v1072
      %v1074 = vpop.f32.mrb[0].mxu0
      %v1075 = vpop.f32.mrb[0].mxu0
      %v1076 = vadd.f32 0.0, %v1075
      %v1077 = vpop.f32.mrb[0].mxu0
      %1078 = vmatprep.mubr.bf16.mxu0 %v667
      %1079 = vmatmul.mubr.bf16.gmra.mrb[0].mxu0 %v666
      %v1080 = vpop.f32.mrb[0].mxu0
      %v1081 = vadd.f32 0.0, %v1080
      %v1082 = vpop.f32.mrb[0].mxu0
      %v1083 = vpop.f32.mrb[0].mxu0
      %v1084 = vadd.f32 0.0, %v1083
      %v1085 = vpop.f32.mrb[0].mxu0
      %1086 = vdwg.mxu0
      %1087 = vmatprep.subr.bf16.mxu0 0
      %1088 = vmatpush1.bf16.msra.mxu0 %v878
      %1089 = vmatprep.subr.bf16.mxu0 0
      %1090 = vmatpush1.bf16.msra.mxu0 %v879
      %1091 = vmatprep.subr.bf16.mxu0 0
      %1092 = vmatpush1.bf16.msra.mxu0 %v880
      %1093 = vmatprep.subr.bf16.mxu0 0
      %1094 = vmatpush1.bf16.msra.mxu0 %v881
      %1095 = vmatprep.subr.bf16.mxu0 0
      %1096 = vmatpush1.bf16.msra.mxu0 %v882
      %1097 = vmatprep.subr.bf16.mxu0 0
      %1098 = vmatpush1.bf16.msra.mxu0 %v883
      %1099 = vmatprep.subr.bf16.mxu0 0
      %1100 = vmatpush1.bf16.msra.mxu0 %v884
      %1101 = vmatprep.subr.bf16.mxu0 0
      %1102 = vmatpush1.bf16.msra.mxu0 %v885
      %1103 = vmatprep.subr.bf16.mxu0 0
      %1104 = vmatpush1.bf16.msra.mxu0 %v886
      %1105 = vmatprep.subr.bf16.mxu0 0
      %1106 = vmatpush1.bf16.msra.mxu0 %v887
      %1107 = vmatprep.subr.bf16.mxu0 0
      %1108 = vmatpush1.bf16.msra.mxu0 %v888
      %1109 = vmatprep.subr.bf16.mxu0 0
      %1110 = vmatpush1.bf16.msra.mxu0 %v889
      %1111 = vmatprep.subr.bf16.mxu0 0
      %1112 = vmatpush1.bf16.msra.mxu0 %v890
      %1113 = vmatprep.subr.bf16.mxu0 0
      %1114 = vmatpush1.bf16.msra.mxu0 %v891
      %1115 = vmatprep.subr.bf16.mxu0 0
      %1116 = vmatpush1.bf16.msra.mxu0 %v892
      %1117 = vmatprep.subr.bf16.mxu0 0
      %1118 = vmatpush1.bf16.msra.mxu0 %v893
      %1119 = vmatprep.mubr.bf16.mxu0 %v609
      %1120 = vmatmul.mubr.bf16.gmra.mrb[0].mxu0 %v608
      %v1121 = vpop.f32.mrb[0].mxu0
      %v1122 = vadd.f32 %v961, %v1121
      %v1123 = vpop.f32.mrb[0].mxu0
      %v1124 = vpop.f32.mrb[0].mxu0
      %v1125 = vadd.f32 %v964, %v1124
      %v1126 = vpop.f32.mrb[0].mxu0
      %1127 = vmatprep.mubr.bf16.mxu0 %v613
      %1128 = vmatmul.mubr.bf16.gmra.mrb[0].mxu0 %v612
      %v1129 = vpop.f32.mrb[0].mxu0
      %v1130 = vadd.f32 %v969, %v1129
      %v1131 = vpop.f32.mrb[0].mxu0
      %v1132 = vpop.f32.mrb[0].mxu0
      %v1133 = vadd.f32 %v972, %v1132
      %v1134 = vpop.f32.mrb[0].mxu0
      %1135 = vmatprep.mubr.bf16.mxu0 %v617
      %1136 = vmatmul.mubr.bf16.gmra.mrb[0].mxu0 %v616
      %v1137 = vpop.f32.mrb[0].mxu0
      %v1138 = vadd.f32 %v977, %v1137
      %v1139 = vpop.f32.mrb[0].mxu0
      %v1140 = vpop.f32.mrb[0].mxu0
      %v1141 = vadd.f32 %v980, %v1140
      %v1142 = vpop.f32.mrb[0].mxu0
      %1143 = vmatprep.mubr.bf16.mxu0 %v621
      %1144 = vmatmul.mubr.bf16.gmra.mrb[0].mxu0 %v620
      %v1145 = vpop.f32.mrb[0].mxu0
      %v1146 = vadd.f32 %v985, %v1145
      %v1147 = vpop.f32.mrb[0].mxu0
      %v1148 = vpop.f32.mrb[0].mxu0
      %v1149 = vadd.f32 %v988, %v1148
      %v1150 = vpop.f32.mrb[0].mxu0
      %1151 = vmatprep.mubr.bf16.mxu0 %v625
      %1152 = vmatmul.mubr.bf16.gmra.mrb[0].mxu0 %v624
      %v1153 = vpop.f32.mrb[0].mxu0
      %v1154 = vadd.f32 %v993, %v1153
      %v1155 = vpop.f32.mrb[0].mxu0
      %v1156 = vpop.f32.mrb[0].mxu0
      %v1157 = vadd.f32 %v996, %v1156
      %v1158 = vpop.f32.mrb[0].mxu0
      %1159 = vmatprep.mubr.bf16.mxu0 %v629
      %1160 = vmatmul.mubr.bf16.gmra.mrb[0].mxu0 %v628
      %v1161 = vpop.f32.mrb[0].mxu0
      %v1162 = vadd.f32 %v1001, %v1161
      %v1163 = vpop.f32.mrb[0].mxu0
      %v1164 = vpop.f32.mrb[0].mxu0
      %v1165 = vadd.f32 %v1004, %v1164
      %v1166 = vpop.f32.mrb[0].mxu0
      %1167 = vmatprep.mubr.bf16.mxu0 %v633
      %1168 = vmatmul.mubr.bf16.gmra.mrb[0].mxu0 %v632
      %v1169 = vpop.f32.mrb[0].mxu0
      %v1170 = vadd.f32 %v1009, %v1169
      %v1171 = vpop.f32.mrb[0].mxu0
      %v1172 = vpop.f32.mrb[0].mxu0
      %v1173 = vadd.f32 %v1012, %v1172
      %v1174 = vpop.f32.mrb[0].mxu0
      %1175 = vmatprep.mubr.bf16.mxu0 %v637
      %1176 = vmatmul.mubr.bf16.gmra.mrb[0].mxu0 %v636
      %v1177 = vpop.f32.mrb[0].mxu0
      %v1178 = vadd.f32 %v1017, %v1177
      %v1179 = vpop.f32.mrb[0].mxu0
      %v1180 = vpop.f32.mrb[0].mxu0
      %v1181 = vadd.f32 %v1020, %v1180
      %v1182 = vpop.f32.mrb[0].mxu0
      %1183 = vmatprep.mubr.bf16.mxu0 %v641
      %1184 = vmatmul.mubr.bf16.gmra.mrb[0].mxu0 %v640
      %v1185 = vpop.f32.mrb[0].mxu0
      %v1186 = vadd.f32 %v1025, %v1185
      %v1187 = vpop.f32.mrb[0].mxu0
      %v1188 = vpop.f32.mrb[0].mxu0
      %v1189 = vadd.f32 %v1028, %v1188
      %v1190 = vpop.f32.mrb[0].mxu0
      %1191 = vmatprep.mubr.bf16.mxu0 %v645
      %1192 = vmatmul.mubr.bf16.gmra.mrb[0].mxu0 %v644
      %v1193 = vpop.f32.mrb[0].mxu0
      %v1194 = vadd.f32 %v1033, %v1193
      %v1195 = vpop.f32.mrb[0].mxu0
      %v1196 = vpop.f32.mrb[0].mxu0
      %v1197 = vadd.f32 %v1036, %v1196
      %v1198 = vpop.f32.mrb[0].mxu0
      %1199 = vmatprep.mubr.bf16.mxu0 %v649
      %1200 = vmatmul.mubr.bf16.gmra.mrb[0].mxu0 %v648
      %v1201 = vpop.f32.mrb[0].mxu0
      %v1202 = vadd.f32 %v1041, %v1201
      %v1203 = vpop.f32.mrb[0].mxu0
      %v1204 = vpop.f32.mrb[0].mxu0
      %v1205 = vadd.f32 %v1044, %v1204
      %v1206 = vpop.f32.mrb[0].mxu0
      %1207 = vmatprep.mubr.bf16.mxu0 %v653
      %1208 = vmatmul.mubr.bf16.gmra.mrb[0].mxu0 %v652
      %v1209 = vpop.f32.mrb[0].mxu0
      %v1210 = vadd.f32 %v1049, %v1209
      %v1211 = vpop.f32.mrb[0].mxu0
      %v1212 = vpop.f32.mrb[0].mxu0
      %v1213 = vadd.f32 %v1052, %v1212
      %v1214 = vpop.f32.mrb[0].mxu0
      %1215 = vmatprep.mubr.bf16.mxu0 %v657
      %1216 = vmatmul.mubr.bf16.gmra.mrb[0].mxu0 %v656
      %v1217 = vpop.f32.mrb[0].mxu0
      %v1218 = vadd.f32 %v1057, %v1217
      %v1219 = vpop.f32.mrb[0].mxu0
      %v1220 = vpop.f32.mrb[0].mxu0
      %v1221 = vadd.f32 %v1060, %v1220
      %v1222 = vpop.f32.mrb[0].mxu0
      %1223 = vmatprep.mubr.bf16.mxu0 %v661
      %1224 = vmatmul.mubr.bf16.gmra.mrb[0].mxu0 %v660
      %v1225 = vpop.f32.mrb[0].mxu0
      %v1226 = vadd.f32 %v1065, %v1225
      %v1227 = vpop.f32.mrb[0].mxu0
      %v1228 = vpop.f32.mrb[0].mxu0
      %v1229 = vadd.f32 %v1068, %v1228
      %v1230 = vpop.f32.mrb[0].mxu0
      %1231 = vmatprep.mubr.bf16.mxu0 %v665
      %1232 = vmatmul.mubr.bf16.gmra.mrb[0].mxu0 %v664
      %v1233 = vpop.f32.mrb[0].mxu0
      %v1234 = vadd.f32 %v1073, %v1233
      %v1235 = vpop.f32.mrb[0].mxu0
      %v1236 = vpop.f32.mrb[0].mxu0
      %v1237 = vadd.f32 %v1076, %v1236
      %v1238 = vpop.f32.mrb[0].mxu0
      %1239 = vmatprep.mubr.bf16.mxu0 %v669
      %1240 = vmatmul.mubr.bf16.gmra.mrb[0].mxu0 %v668
      %v1241 = vpop.f32.mrb[0].mxu0
      %v1242 = vadd.f32 %v1081, %v1241
      %v1243 = vpop.f32.mrb[0].mxu0
      %v1244 = vpop.f32.mrb[0].mxu0
      %v1245 = vadd.f32 %v1084, %v1244
      %v1246 = vpop.f32.mrb[0].mxu0
      %1247 = vdwg.mxu0
      %v1248 = vadd.f32 %v318, %v1122
      %v1249 = vadd.f32 %v319, %v1125
      %v1250 = vadd.f32 %v320, %v1130
      %v1251 = vadd.f32 %v321, %v1133
      %v1252 = vadd.f32 %v322, %v1138
      %v1253 = vadd.f32 %v323, %v1141
      %v1254 = vadd.f32 %v324, %v1146
      %v1255 = vadd.f32 %v325, %v1149
      %v1256 = vadd.f32 %v326, %v1154
      %v1257 = vadd.f32 %v327, %v1157
      %v1258 = vadd.f32 %v328, %v1162
      %v1259 = vadd.f32 %v329, %v1165
      %v1260 = vadd.f32 %v330, %v1170
      %v1261 = vadd.f32 %v331, %v1173
      %v1262 = vadd.f32 %v332, %v1178
      %v1263 = vadd.f32 %v333, %v1181
      %v1264 = vadd.f32 %v334, %v1186
      %v1265 = vadd.f32 %v335, %v1189
      %v1266 = vadd.f32 %v336, %v1194
      %v1267 = vadd.f32 %v337, %v1197
      %v1268 = vadd.f32 %v338, %v1202
      %v1269 = vadd.f32 %v339, %v1205
      %v1270 = vadd.f32 %v340, %v1210
      %v1271 = vadd.f32 %v341, %v1213
      %v1272 = vadd.f32 %v342, %v1218
      %v1273 = vadd.f32 %v343, %v1221
      %v1274 = vadd.f32 %v344, %v1226
      %v1275 = vadd.f32 %v345, %v1229
      %v1276 = vadd.f32 %v346, %v1234
      %v1277 = vadd.f32 %v347, %v1237
      %v1278 = vadd.f32 %v348, %v1242
      %v1279 = vadd.f32 %v349, %v1245
      %1280 = vst [vmem:[%s203] sm:$0xff] %v1248
      %1281 = vst [vmem:[%s203 + $0x8] sm:$0xff] %v1249
      %1282 = vst [vmem:[%s203 + $0x10] sm:$0xff] %v1250
      %1283 = vst [vmem:[%s203 + $0x18] sm:$0xff] %v1251
      %1284 = vst [vmem:[%s203 + $0x20] sm:$0xff] %v1252
      %1285 = vst [vmem:[%s203 + $0x28] sm:$0xff] %v1253
      %1286 = vst [vmem:[%s203 + $0x30] sm:$0xff] %v1254
      %1287 = vst [vmem:[%s203 + $0x38] sm:$0xff] %v1255
      %1288 = vst [vmem:[%s203 + $0x40] sm:$0xff] %v1256
      %1289 = vst [vmem:[%s203 + $0x48] sm:$0xff] %v1257
      %1290 = vst [vmem:[%s203 + $0x50] sm:$0xff] %v1258
      %1291 = vst [vmem:[%s203 + $0x58] sm:$0xff] %v1259
      %1292 = vst [vmem:[%s203 + $0x60] sm:$0xff] %v1260
      %1293 = vst [vmem:[%s203 + $0x68] sm:$0xff] %v1261
      %1294 = vst [vmem:[%s203 + $0x70] sm:$0xff] %v1262
      %1295 = vst [vmem:[%s203 + $0x78] sm:$0xff] %v1263
      %1296 = vst [vmem:[%s203 + $0x80] sm:$0xff] %v1264
      %1297 = vst [vmem:[%s203 + $0x88] sm:$0xff] %v1265
      %1298 = vst [vmem:[%s203 + $0x90] sm:$0xff] %v1266
      %1299 = vst [vmem:[%s203 + $0x98] sm:$0xff] %v1267
      %1300 = vst [vmem:[%s203 + $0xa0] sm:$0xff] %v1268
      %1301 = vst [vmem:[%s203 + $0xa8] sm:$0xff] %v1269
      %1302 = vst [vmem:[%s203 + $0xb0] sm:$0xff] %v1270
      %1303 = vst [vmem:[%s203 + $0xb8] sm:$0xff] %v1271
      %1304 = vst [vmem:[%s203 + $0xc0] sm:$0xff] %v1272
      %1305 = vst [vmem:[%s203 + $0xc8] sm:$0xff] %v1273
      %1306 = vst [vmem:[%s203 + $0xd0] sm:$0xff] %v1274
      %1307 = vst [vmem:[%s203 + $0xd8] sm:$0xff] %v1275
      %1308 = vst [vmem:[%s203 + $0xe0] sm:$0xff] %v1276
      %1309 = vst [vmem:[%s203 + $0xe8] sm:$0xff] %v1277
      %1310 = vst [vmem:[%s203 + $0xf0] sm:$0xff] %v1278
      %1311 = vst [vmem:[%s203 + $0xf8] sm:$0xff] %v1279
      %s1312 = smul.u32 32, %s18
      %p1313 = scmp.lt.s32.totalorder %s1312, 63
      %s1314 = scalar_select %p1313, %s1312, 63
      %s1315 = smul.addr %s1314, 8
      %s1316 = scalar_lea.vmem %s3, %s1315
      // Predicated region
      $region37: #{gcn_encoder_forward.11} parent=31 // pred_check
        %p1317 = pneg %p114
      $region38: #{gcn_encoder_forward.11} parent=31 // pred_check_branch
        %1319 = sbr.rel (%p1317) target = $region40
      $region39: #{gcn_encoder_forward.11} parent=31 // pred_region
        %s1320 = smul.u32 32, %s18
      $region40: #{gcn_encoder_forward.11} parent=31 // pred_fallthru
        _
    $region32: #{gcn_encoder_forward.11} parent=5 // pred_fallthru
      _
    %p1321 = scmp.le.s32.totalorder 2, %s9
    // Predicated region
    $region41: #{gcn_encoder_forward.11} parent=5 // pred_check
      %p1322 = pneg %p1321
    $region42: #{gcn_encoder_forward.11} parent=5 // pred_check_branch
      %1324 = sbr.rel (%p1322) target = $region44
    $region43: #{gcn_encoder_forward.11} parent=5 // pred_region
      %s1325 = ssub.s32 %s9, 2
      // Predicated region
      $region45: #{gcn_encoder_forward.11} parent=43 // pred_check
        %p1326 = pneg %p120
      $region46: #{gcn_encoder_forward.11} parent=43 // pred_check_branch
        %1328 = sbr.rel (%p1326) target = $region48
      $region47: #{gcn_encoder_forward.11} parent=43 // pred_region
        %s1329 = smul.u32 32, %s20
        %p1330 = scmp.lt.s32.totalorder %s1329, 63
        %s1331 = scalar_select %p1330, %s1329, 63
        %s1332 = smul.addr %s1331, 8
        %s1333 = scalar_lea.vmem %s3, %s1332
      $region48: #{gcn_encoder_forward.11} parent=43 // pred_fallthru
        _
    $region44: #{gcn_encoder_forward.11} parent=5 // pred_fallthru
      _
  $region6: #{gcn_encoder_forward.11} parent=0 // loop_footer
    %s13 = sadd.s32 1, %s9
  $region7: #{gcn_encoder_forward.11} parent=0 // loop_footer_branch
    %8 = sbr.rel target = $region3
  $region8: #{gcn_encoder_forward.11} parent=0 // loop_exit
    _

</llo_original>
